<compile_context>
chip_gen: v6e
topology: v6e:2x2x1
jax: 0.10.0
libtpu: 0.0.40
codegen_flags: <defaults>
</compile_context>

<pallas_src>
import functools

import numpy as np

import jax
import jax.numpy as jnp
from jax import lax
from jax.experimental import pallas as pl
from jax.experimental.pallas import tpu as pltpu

EPS = 1e-5


def _make_conv_kernel(H, W, KH, KW, padl, apply_bn_relu):
    """Conv (+ optional folded BN1+ReLU prologue) + per-image BN partial stats.

    Layout: channels on sublanes, flattened spatial (H*W) on lanes. The conv is
    KH*KW accumulated MXU matmuls (Cout, C) @ (C, H*W) over lane-shifted windows
    of a zero-guarded flat buffer; a tiny per-column mask input zeroes the
    row-wrap positions so the result matches 2-D zero padding exactly.
    """
    ph, pw = KH // 2, KW // 2
    M = H * W

    def conv_body(x, mask_ref, w_ref, b_ref, out_ref, stats_ref, xpad_ref):
        C = x.shape[0]
        # Zero the lane-aligned guard strips every step (scratch is reused
        # across grid steps / cores), then drop the activation in the middle.
        # All three stores are 128-lane aligned (unmasked).
        xpad_ref[:, 0:padl] = jnp.zeros((C, padl), jnp.float32)
        xpad_ref[:, padl + M:] = jnp.zeros((C, padl), jnp.float32)
        xpad_ref[:, padl:padl + M] = x

        acc = None
        for i in range(KH):
            for j in range(KW):
                di, dj = i - ph, j - pw
                start = padl + di * W + dj
                patch = xpad_ref[:, start:start + M]          # (C, M) shifted window
                if dj != 0:                                   # zero row-wrap columns
                    patch = patch * mask_ref[j:j + 1, :]
                term = jnp.dot(w_ref[i * KW + j], patch,
                               preferred_element_type=jnp.float32)
                acc = term if acc is None else acc + term
        y = acc + b_ref[...]                                  # (Cout, M), lane-dense

        out_ref[0] = y
        # per-image BN partials: [channel sum | channel sum of squares]
        stats_ref[0] = jnp.concatenate(
            [jnp.sum(y, axis=1, keepdims=True),
             jnp.sum(y * y, axis=1, keepdims=True)], axis=1)  # (Cout, 2)

    if apply_bn_relu:
        def kernel(x_ref, scale_ref, shift_ref, mask_ref, w_ref, b_ref,
                   out_ref, stats_ref, xpad_ref):
            # folded BN1 + ReLU prologue (one FMA + max), then conv #2
            act = jnp.maximum(x_ref[0] * scale_ref[...] + shift_ref[...], 0.0)
            conv_body(act, mask_ref, w_ref, b_ref, out_ref, stats_ref, xpad_ref)
        return kernel

    def kernel(x_ref, mask_ref, w_ref, b_ref, out_ref, stats_ref, xpad_ref):
        conv_body(x_ref[0], mask_ref, w_ref, b_ref, out_ref, stats_ref, xpad_ref)
    return kernel


def _bn_relu_kernel(x_ref, scale_ref, shift_ref, o_ref):
    # x_ref/o_ref: (1, C, H*W) lane-dense; scale/shift: (C, 1). In-place (aliased).
    o_ref[0] = jnp.maximum(x_ref[0] * scale_ref[...] + shift_ref[...], 0.0)


def _fold_bn(stats, gamma, beta, count):
    """Fold per-image (sum, sumsq) partials into per-channel BN scale/shift."""
    total = jnp.sum(stats, axis=0)                            # (C, 2)
    mean = total[:, 0] / count
    var = jnp.maximum(total[:, 1] / count - mean * mean, 0.0)  # biased batch var
    scale = gamma * lax.rsqrt(var + EPS)
    shift = beta - mean * scale
    return (scale.reshape(-1, 1).astype(jnp.float32),
            shift.reshape(-1, 1).astype(jnp.float32))


@functools.partial(jax.jit, static_argnames=("kernel_size",))
def double_conv(x_nchw, params, kernel_size):
    """x_nchw: (N, Cin, H, W) float32. Returns (N, Cout, H, W)."""
    KH, KW = kernel_size
    ph, pw = KH // 2, KW // 2
    N, Cin, H, W = x_nchw.shape
    M = H * W
    count = N * M
    # lane-aligned zero guard on each side of the flat spatial axis
    padl = max(128, ((ph * W + pw + 127) // 128) * 128)

    Cout = params["w1"].shape[0]
    # PyTorch (Cout, Cin, KH, KW) -> (KH*KW, Cout, Cin) tap matrices
    w1 = jnp.transpose(params["w1"].astype(jnp.float32), (2, 3, 0, 1)).reshape(
        KH * KW, Cout, Cin)
    w2 = jnp.transpose(params["w2"].astype(jnp.float32), (2, 3, 0, 1)).reshape(
        KH * KW, Cout, Cout)
    b1 = params["b1"].reshape(-1, 1).astype(jnp.float32)
    b2 = params["b2"].reshape(-1, 1).astype(jnp.float32)

    # NCHW -> (N, Cin, H*W): contiguous reshape, no transpose / pad / HBM copy.
    x_flat = x_nchw.astype(jnp.float32).reshape(N, Cin, M)

    # per-column wrap mask, row j <-> horizontal tap offset dj = j - pw
    col = np.arange(M) % W
    wrap_mask = jnp.asarray(np.stack(
        [((col + (j - pw) >= 0) & (col + (j - pw) < W)).astype(np.float32)
         for j in range(KW)], axis=0))                        # (KW, M)

    parallel = pltpu.CompilerParams(dimension_semantics=("parallel",))

    full = lambda *shape: pl.BlockSpec(shape, lambda n: (0,) * len(shape))
    per_img = lambda *shape: pl.BlockSpec((1,) + shape, lambda n: (n,) + (0,) * len(shape))

    # ---- Pass 1: conv1 (+bias); lane-dense raw1 + per-image BN1 partials ----
    raw1, stats1 = pl.pallas_call(
        _make_conv_kernel(H, W, KH, KW, padl, apply_bn_relu=False),
        grid=(N,),
        in_specs=[
            per_img(Cin, M),                     # x
            full(KW, M),                         # wrap mask
            full(KH * KW, Cout, Cin),            # w1 taps
            full(Cout, 1),                       # b1
        ],
        out_specs=[
            per_img(Cout, M),                    # raw conv1 output
            per_img(Cout, 2),                    # per-image (sum, sumsq)
        ],
        out_shape=[
            jax.ShapeDtypeStruct((N, Cout, M), jnp.float32),
            jax.ShapeDtypeStruct((N, Cout, 2), jnp.float32),
        ],
        scratch_shapes=[pltpu.VMEM((Cin, M + 2 * padl), jnp.float32)],
        compiler_params=parallel,
    )(x_flat, wrap_mask, w1, b1)

    scale1, shift1 = _fold_bn(stats1, params["g1"].astype(jnp.float32),
                              params["beta1"].astype(jnp.float32), count)

    # ---- Pass 2: BN1+ReLU folded into conv2 (+bias); raw2 + BN2 partials ----
    raw2, stats2 = pl.pallas_call(
        _make_conv_kernel(H, W, KH, KW, padl, apply_bn_relu=True),
        grid=(N,),
        in_specs=[
            per_img(Cout, M),                    # raw1
            full(Cout, 1),                       # scale1
            full(Cout, 1),                       # shift1
            full(KW, M),                         # wrap mask
            full(KH * KW, Cout, Cout),           # w2 taps
            full(Cout, 1),                       # b2
        ],
        out_specs=[
            per_img(Cout, M),
            per_img(Cout, 2),
        ],
        out_shape=[
            jax.ShapeDtypeStruct((N, Cout, M), jnp.float32),
            jax.ShapeDtypeStruct((N, Cout, 2), jnp.float32),
        ],
        scratch_shapes=[pltpu.VMEM((Cout, M + 2 * padl), jnp.float32)],
        compiler_params=parallel,
    )(raw1, scale1, shift1, wrap_mask, w2, b2)

    scale2, shift2 = _fold_bn(stats2, params["g2"].astype(jnp.float32),
                              params["beta2"].astype(jnp.float32), count)

    # ---- Pass 3: BN2 + ReLU, lane-dense, in place (raw2 aliased to output) ----
    out_flat = pl.pallas_call(
        _bn_relu_kernel,
        grid=(N,),
        in_specs=[
            per_img(Cout, M),
            full(Cout, 1),
            full(Cout, 1),
        ],
        out_specs=per_img(Cout, M),
        out_shape=jax.ShapeDtypeStruct((N, Cout, M), jnp.float32),
        input_output_aliases={0: 0},
        compiler_params=parallel,
    )(raw2, scale2, shift2)

    # (N, Cout, H*W) -> (N, Cout, H, W): free contiguous reshape.
    return out_flat.reshape(N, Cout, H, W)


def _reference(x_nchw, params, kernel_size):
    """Pure-JAX reference reproducing the PyTorch forward (training-mode BN)."""
    KH, KW = kernel_size
    ph, pw = KH // 2, KW // 2

    def conv(x, w, b):
        y = lax.conv_general_dilated(
            x, w, window_strides=(1, 1), padding=[(ph, ph), (pw, pw)],
            dimension_numbers=("NCHW", "OIHW", "NCHW"))
        return y + b[None, :, None, None]

    def bn_relu(x, g, bt):
        mean = jnp.mean(x, axis=(0, 2, 3), keepdims=True)
        var = jnp.mean((x - mean) ** 2, axis=(0, 2, 3), keepdims=True)
        y = g[None, :, None, None] * (x - mean) / jnp.sqrt(var + EPS) \
            + bt[None, :, None, None]
        return jnp.maximum(y, 0.0)

    h = bn_relu(conv(x_nchw, params["w1"], params["b1"]),
                params["g1"], params["beta1"])
    return bn_relu(conv(h, params["w2"], params["b2"]),
                   params["g2"], params["beta2"])


if __name__ == "__main__":
    key = jax.random.PRNGKey(0)
    N, Cin, Cout, H, W = 2, 4, 8, 16, 16
    kernel_size = (3, 3)

    ks = jax.random.split(key, 9)
    x = jax.random.normal(ks[0], (N, Cin, H, W), dtype=jnp.float32)
    params = {
        "w1": 0.1 * jax.random.normal(ks[1], (Cout, Cin) + kernel_size, jnp.float32),
        "b1": 0.1 * jax.random.normal(ks[2], (Cout,), jnp.float32),
        "g1": 1.0 + 0.1 * jax.random.normal(ks[3], (Cout,), jnp.float32),
        "beta1": 0.1 * jax.random.normal(ks[4], (Cout,), jnp.float32),
        "w2": 0.1 * jax.random.normal(ks[5], (Cout, Cout) + kernel_size, jnp.float32),
        "b2": 0.1 * jax.random.normal(ks[6], (Cout,), jnp.float32),
        "g2": 1.0 + 0.1 * jax.random.normal(ks[7], (Cout,), jnp.float32),
        "beta2": 0.1 * jax.random.normal(ks[8], (Cout,), jnp.float32),
    }

    out = jax.block_until_ready(double_conv(x, params, kernel_size))
    ref = jax.block_until_ready(_reference(x, params, kernel_size))

    assert out.shape == (N, Cout, H, W)
    err = jnp.max(jnp.abs(out - ref))
    assert jnp.allclose(out, ref, atol=1e-4, rtol=1e-4), f"max abs err {err}"

    print("KERNEL_OK")
</pallas_src>

<mosaic_0001>
module attributes {stable_mosaic.version = 11 : i64} {
  func.func @kernel(%arg0: i32, %arg1: memref<1x4x256xf32, #tpu.memory_space<vmem>>, %arg2: memref<3x256xf32, #tpu.memory_space<vmem>>, %arg3: memref<9x8x4xf32, #tpu.memory_space<vmem>>, %arg4: memref<8x1xf32, #tpu.memory_space<vmem>>, %arg5: memref<1x8x256xf32, #tpu.memory_space<vmem>>, %arg6: memref<1x8x2xf32, #tpu.memory_space<vmem>>, %arg7: memref<4x512xf32, #tpu.memory_space<vmem>>) attributes {dimension_semantics = [#tpu.dimension_semantics<parallel>], iteration_bounds = array<i64: 2>, scalar_prefetch = 0 : i64, scratch_operands = 1 : i64, tpu.core_type = #tpu.core_type<tc>, window_params = [{transform_indices = @transform_0, window_bounds = array<i64: 1, 4, 256>}, {pipeline_mode = #tpu.pipeline_mode<synchronous>, transform_indices = @transform_1, window_bounds = array<i64: 3, 256>}, {pipeline_mode = #tpu.pipeline_mode<synchronous>, transform_indices = @transform_2, window_bounds = array<i64: 9, 8, 4>}, {pipeline_mode = #tpu.pipeline_mode<synchronous>, transform_indices = @transform_3, window_bounds = array<i64: 8, 1>}, {transform_indices = @transform_4, window_bounds = array<i64: 1, 8, 256>}, {transform_indices = @transform_5, window_bounds = array<i64: 1, 8, 2>}]} {
    %c0 = arith.constant 0 : index
    %c0_0 = arith.constant 0 : index
    %c0_1 = arith.constant 0 : index
    %0 = vector.load %arg1[%c0, %c0_0, %c0_1] : memref<1x4x256xf32, #tpu.memory_space<vmem>>, vector<1x4x256xf32>
    %1 = vector.shape_cast %0 : vector<1x4x256xf32> to vector<4x256xf32>
    %cst = arith.constant 0.000000e+00 : f32
    %2 = vector.broadcast %cst : f32 to vector<4x128xf32>
    %c0_2 = arith.constant 0 : index
    %c0_3 = arith.constant 0 : index
    %3 = vector.load %arg7[%c0_2, %c0_3] : memref<4x512xf32, #tpu.memory_space<vmem>>, vector<4x128xf32>
    tpu.vector_store %arg7[%c0_2, %c0_3], %2 {strides = array<i32>} : memref<4x512xf32, #tpu.memory_space<vmem>>, vector<4x128xf32>,
    %cst_4 = arith.constant 0.000000e+00 : f32
    %4 = vector.broadcast %cst_4 : f32 to vector<4x128xf32>
    %c0_5 = arith.constant 0 : index
    %c384 = arith.constant 384 : index
    %5 = vector.load %arg7[%c0_5, %c384] : memref<4x512xf32, #tpu.memory_space<vmem>>, vector<4x128xf32>
    tpu.vector_store %arg7[%c0_5, %c384], %4 {strides = array<i32>} : memref<4x512xf32, #tpu.memory_space<vmem>>, vector<4x128xf32>,
    %c0_6 = arith.constant 0 : index
    %c128 = arith.constant 128 : index
    %6 = vector.load %arg7[%c0_6, %c128] : memref<4x512xf32, #tpu.memory_space<vmem>>, vector<4x256xf32>
    tpu.vector_store %arg7[%c0_6, %c128], %1 {strides = array<i32>} : memref<4x512xf32, #tpu.memory_space<vmem>>, vector<4x256xf32>,
    %c0_7 = arith.constant 0 : index
    %c111 = arith.constant 111 : index
    %7 = vector.load %arg7[%c0_7, %c111] : memref<4x512xf32, #tpu.memory_space<vmem>>, vector<4x256xf32>
    %c0_8 = arith.constant 0 : index
    %c0_9 = arith.constant 0 : index
    %8 = vector.load %arg2[%c0_8, %c0_9] : memref<3x256xf32, #tpu.memory_space<vmem>>, vector<1x256xf32>
    %9 = vector.broadcast %8 : vector<1x256xf32> to vector<4x256xf32>
    %10 = arith.mulf %7, %9 : vector<4x256xf32>
    %c0_10 = arith.constant 0 : index
    %c0_11 = arith.constant 0 : index
    %c0_12 = arith.constant 0 : index
    %11 = vector.load %arg3[%c0_10, %c0_11, %c0_12] : memref<9x8x4xf32, #tpu.memory_space<vmem>>, vector<1x8x4xf32>
    %12 = vector.shape_cast %11 : vector<1x8x4xf32> to vector<8x4xf32>
    %cst_13 = arith.constant dense<0.000000e+00> : vector<8x256xf32>
    %13 = tpu.matmul %12, %10, %cst_13 {dimension_numbers = #tpu.dot_dimension_numbers<[1], [0], [0], [1], [0, 0, 1, 1], [], []>} : vector<8x4xf32>, vector<4x256xf32>, vector<8x256xf32> -> vector<8x256xf32>
    %c0_14 = arith.constant 0 : index
    %c112 = arith.constant 112 : index
    %14 = vector.load %arg7[%c0_14, %c112] : memref<4x512xf32, #tpu.memory_space<vmem>>, vector<4x256xf32>
    %c1 = arith.constant 1 : index
    %c0_15 = arith.constant 0 : index
    %c0_16 = arith.constant 0 : index
    %15 = vector.load %arg3[%c1, %c0_15, %c0_16] : memref<9x8x4xf32, #tpu.memory_space<vmem>>, vector<1x8x4xf32>
    %16 = vector.shape_cast %15 : vector<1x8x4xf32> to vector<8x4xf32>
    %cst_17 = arith.constant dense<0.000000e+00> : vector<8x256xf32>
    %17 = tpu.matmul %16, %14, %cst_17 {dimension_numbers = #tpu.dot_dimension_numbers<[1], [0], [0], [1], [0, 0, 1, 1], [], []>} : vector<8x4xf32>, vector<4x256xf32>, vector<8x256xf32> -> vector<8x256xf32>
    %18 = arith.addf %13, %17 : vector<8x256xf32>
    %c0_18 = arith.constant 0 : index
    %c113 = arith.constant 113 : index
    %19 = vector.load %arg7[%c0_18, %c113] : memref<4x512xf32, #tpu.memory_space<vmem>>, vector<4x256xf32>
    %c2 = arith.constant 2 : index
    %c0_19 = arith.constant 0 : index
    %20 = vector.load %arg2[%c2, %c0_19] : memref<3x256xf32, #tpu.memory_space<vmem>>, vector<1x256xf32>
    %21 = vector.broadcast %20 : vector<1x256xf32> to vector<4x256xf32>
    %22 = arith.mulf %19, %21 : vector<4x256xf32>
    %c2_20 = arith.constant 2 : index
    %c0_21 = arith.constant 0 : index
    %c0_22 = arith.constant 0 : index
    %23 = vector.load %arg3[%c2_20, %c0_21, %c0_22] : memref<9x8x4xf32, #tpu.memory_space<vmem>>, vector<1x8x4xf32>
    %24 = vector.shape_cast %23 : vector<1x8x4xf32> to vector<8x4xf32>
    %cst_23 = arith.constant dense<0.000000e+00> : vector<8x256xf32>
    %25 = tpu.matmul %24, %22, %cst_23 {dimension_numbers = #tpu.dot_dimension_numbers<[1], [0], [0], [1], [0, 0, 1, 1], [], []>} : vector<8x4xf32>, vector<4x256xf32>, vector<8x256xf32> -> vector<8x256xf32>
    %26 = arith.addf %18, %25 : vector<8x256xf32>
    %c0_24 = arith.constant 0 : index
    %c127 = arith.constant 127 : index
    %27 = vector.load %arg7[%c0_24, %c127] : memref<4x512xf32, #tpu.memory_space<vmem>>, vector<4x256xf32>
    %c0_25 = arith.constant 0 : index
    %c0_26 = arith.constant 0 : index
    %28 = vector.load %arg2[%c0_25, %c0_26] : memref<3x256xf32, #tpu.memory_space<vmem>>, vector<1x256xf32>
    %29 = vector.broadcast %28 : vector<1x256xf32> to vector<4x256xf32>
    %30 = arith.mulf %27, %29 : vector<4x256xf32>
    %c3 = arith.constant 3 : index
    %c0_27 = arith.constant 0 : index
    %c0_28 = arith.constant 0 : index
    %31 = vector.load %arg3[%c3, %c0_27, %c0_28] : memref<9x8x4xf32, #tpu.memory_space<vmem>>, vector<1x8x4xf32>
    %32 = vector.shape_cast %31 : vector<1x8x4xf32> to vector<8x4xf32>
    %cst_29 = arith.constant dense<0.000000e+00> : vector<8x256xf32>
    %33 = tpu.matmul %32, %30, %cst_29 {dimension_numbers = #tpu.dot_dimension_numbers<[1], [0], [0], [1], [0, 0, 1, 1], [], []>} : vector<8x4xf32>, vector<4x256xf32>, vector<8x256xf32> -> vector<8x256xf32>
    %34 = arith.addf %26, %33 : vector<8x256xf32>
    %c0_30 = arith.constant 0 : index
    %c128_31 = arith.constant 128 : index
    %35 = vector.load %arg7[%c0_30, %c128_31] : memref<4x512xf32, #tpu.memory_space<vmem>>, vector<4x256xf32>
    %c4 = arith.constant 4 : index
    %c0_32 = arith.constant 0 : index
    %c0_33 = arith.constant 0 : index
    %36 = vector.load %arg3[%c4, %c0_32, %c0_33] : memref<9x8x4xf32, #tpu.memory_space<vmem>>, vector<1x8x4xf32>
    %37 = vector.shape_cast %36 : vector<1x8x4xf32> to vector<8x4xf32>
    %cst_34 = arith.constant dense<0.000000e+00> : vector<8x256xf32>
    %38 = tpu.matmul %37, %35, %cst_34 {dimension_numbers = #tpu.dot_dimension_numbers<[1], [0], [0], [1], [0, 0, 1, 1], [], []>} : vector<8x4xf32>, vector<4x256xf32>, vector<8x256xf32> -> vector<8x256xf32>
    %39 = arith.addf %34, %38 : vector<8x256xf32>
    %c0_35 = arith.constant 0 : index
    %c129 = arith.constant 129 : index
    %40 = vector.load %arg7[%c0_35, %c129] : memref<4x512xf32, #tpu.memory_space<vmem>>, vector<4x256xf32>
    %c2_36 = arith.constant 2 : index
    %c0_37 = arith.constant 0 : index
    %41 = vector.load %arg2[%c2_36, %c0_37] : memref<3x256xf32, #tpu.memory_space<vmem>>, vector<1x256xf32>
    %42 = vector.broadcast %41 : vector<1x256xf32> to vector<4x256xf32>
    %43 = arith.mulf %40, %42 : vector<4x256xf32>
    %c5 = arith.constant 5 : index
    %c0_38 = arith.constant 0 : index
    %c0_39 = arith.constant 0 : index
    %44 = vector.load %arg3[%c5, %c0_38, %c0_39] : memref<9x8x4xf32, #tpu.memory_space<vmem>>, vector<1x8x4xf32>
    %45 = vector.shape_cast %44 : vector<1x8x4xf32> to vector<8x4xf32>
    %cst_40 = arith.constant dense<0.000000e+00> : vector<8x256xf32>
    %46 = tpu.matmul %45, %43, %cst_40 {dimension_numbers = #tpu.dot_dimension_numbers<[1], [0], [0], [1], [0, 0, 1, 1], [], []>} : vector<8x4xf32>, vector<4x256xf32>, vector<8x256xf32> -> vector<8x256xf32>
    %47 = arith.addf %39, %46 : vector<8x256xf32>
    %c0_41 = arith.constant 0 : index
    %c143 = arith.constant 143 : index
    %48 = vector.load %arg7[%c0_41, %c143] : memref<4x512xf32, #tpu.memory_space<vmem>>, vector<4x256xf32>
    %c0_42 = arith.constant 0 : index
    %c0_43 = arith.constant 0 : index
    %49 = vector.load %arg2[%c0_42, %c0_43] : memref<3x256xf32, #tpu.memory_space<vmem>>, vector<1x256xf32>
    %50 = vector.broadcast %49 : vector<1x256xf32> to vector<4x256xf32>
    %51 = arith.mulf %48, %50 : vector<4x256xf32>
    %c6 = arith.constant 6 : index
    %c0_44 = arith.constant 0 : index
    %c0_45 = arith.constant 0 : index
    %52 = vector.load %arg3[%c6, %c0_44, %c0_45] : memref<9x8x4xf32, #tpu.memory_space<vmem>>, vector<1x8x4xf32>
    %53 = vector.shape_cast %52 : vector<1x8x4xf32> to vector<8x4xf32>
    %cst_46 = arith.constant dense<0.000000e+00> : vector<8x256xf32>
    %54 = tpu.matmul %53, %51, %cst_46 {dimension_numbers = #tpu.dot_dimension_numbers<[1], [0], [0], [1], [0, 0, 1, 1], [], []>} : vector<8x4xf32>, vector<4x256xf32>, vector<8x256xf32> -> vector<8x256xf32>
    %55 = arith.addf %47, %54 : vector<8x256xf32>
    %c0_47 = arith.constant 0 : index
    %c144 = arith.constant 144 : index
    %56 = vector.load %arg7[%c0_47, %c144] : memref<4x512xf32, #tpu.memory_space<vmem>>, vector<4x256xf32>
    %c7 = arith.constant 7 : index
    %c0_48 = arith.constant 0 : index
    %c0_49 = arith.constant 0 : index
    %57 = vector.load %arg3[%c7, %c0_48, %c0_49] : memref<9x8x4xf32, #tpu.memory_space<vmem>>, vector<1x8x4xf32>
    %58 = vector.shape_cast %57 : vector<1x8x4xf32> to vector<8x4xf32>
    %cst_50 = arith.constant dense<0.000000e+00> : vector<8x256xf32>
    %59 = tpu.matmul %58, %56, %cst_50 {dimension_numbers = #tpu.dot_dimension_numbers<[1], [0], [0], [1], [0, 0, 1, 1], [], []>} : vector<8x4xf32>, vector<4x256xf32>, vector<8x256xf32> -> vector<8x256xf32>
    %60 = arith.addf %55, %59 : vector<8x256xf32>
    %c0_51 = arith.constant 0 : index
    %c145 = arith.constant 145 : index
    %61 = vector.load %arg7[%c0_51, %c145] : memref<4x512xf32, #tpu.memory_space<vmem>>, vector<4x256xf32>
    %c2_52 = arith.constant 2 : index
    %c0_53 = arith.constant 0 : index
    %62 = vector.load %arg2[%c2_52, %c0_53] : memref<3x256xf32, #tpu.memory_space<vmem>>, vector<1x256xf32>
    %63 = vector.broadcast %62 : vector<1x256xf32> to vector<4x256xf32>
    %64 = arith.mulf %61, %63 : vector<4x256xf32>
    %c8 = arith.constant 8 : index
    %c0_54 = arith.constant 0 : index
    %c0_55 = arith.constant 0 : index
    %65 = vector.load %arg3[%c8, %c0_54, %c0_55] : memref<9x8x4xf32, #tpu.memory_space<vmem>>, vector<1x8x4xf32>
    %66 = vector.shape_cast %65 : vector<1x8x4xf32> to vector<8x4xf32>
    %cst_56 = arith.constant dense<0.000000e+00> : vector<8x256xf32>
    %67 = tpu.matmul %66, %64, %cst_56 {dimension_numbers = #tpu.dot_dimension_numbers<[1], [0], [0], [1], [0, 0, 1, 1], [], []>} : vector<8x4xf32>, vector<4x256xf32>, vector<8x256xf32> -> vector<8x256xf32>
    %68 = arith.addf %60, %67 : vector<8x256xf32>
    %c0_57 = arith.constant 0 : index
    %c0_58 = arith.constant 0 : index
    %69 = vector.load %arg4[%c0_57, %c0_58] : memref<8x1xf32, #tpu.memory_space<vmem>>, vector<8x1xf32>
    %70 = vector.broadcast %69 : vector<8x1xf32> to vector<8x256xf32>
    %71 = arith.addf %68, %70 : vector<8x256xf32>
    %c0_59 = arith.constant 0 : index
    %c0_60 = arith.constant 0 : index
    %c0_61 = arith.constant 0 : index
    %72 = vector.load %arg5[%c0_59, %c0_60, %c0_61] : memref<1x8x256xf32, #tpu.memory_space<vmem>>, vector<1x8x256xf32>
    %73 = vector.shape_cast %72 : vector<1x8x256xf32> to vector<8x256xf32>
    %74 = vector.shape_cast %71 : vector<8x256xf32> to vector<1x8x256xf32>
    tpu.vector_store %arg5[%c0_59, %c0_60, %c0_61], %74 {strides = array<i32>} : memref<1x8x256xf32, #tpu.memory_space<vmem>>, vector<1x8x256xf32>,
    %cst_62 = arith.constant dense<0.000000e+00> : vector<8xf32>
    %75 = vector.multi_reduction <add>, %71, %cst_62 [1] : vector<8x256xf32> to vector<8xf32>
    %76 = vector.shape_cast %75 : vector<8xf32> to vector<8x1xf32>
    %77 = arith.mulf %71, %71 : vector<8x256xf32>
    %cst_63 = arith.constant dense<0.000000e+00> : vector<8xf32>
    %78 = vector.multi_reduction <add>, %77, %cst_63 [1] : vector<8x256xf32> to vector<8xf32>
    %79 = vector.shape_cast %78 : vector<8xf32> to vector<8x1xf32>
    %80 = tpu.concatenate %76, %79 in 1 : vector<8x1xf32>, vector<8x1xf32> -> vector<8x2xf32>
    %c0_64 = arith.constant 0 : index
    %c0_65 = arith.constant 0 : index
    %c0_66 = arith.constant 0 : index
    %81 = vector.load %arg6[%c0_64, %c0_65, %c0_66] : memref<1x8x2xf32, #tpu.memory_space<vmem>>, vector<1x8x2xf32>
    %82 = vector.shape_cast %81 : vector<1x8x2xf32> to vector<8x2xf32>
    %83 = vector.shape_cast %80 : vector<8x2xf32> to vector<1x8x2xf32>
    tpu.vector_store %arg6[%c0_64, %c0_65, %c0_66], %83 {strides = array<i32>} : memref<1x8x2xf32, #tpu.memory_space<vmem>>, vector<1x8x2xf32>,
    return
  }
  func.func @transform_0(%arg0: i32) -> (i32, i32, i32) {
    %c0_i32 = arith.constant 0 : i32
    %c0_i32_0 = arith.constant 0 : i32
    %c0_i32_1 = arith.constant 0 : i32
    return %arg0, %c0_i32, %c0_i32_0 : i32, i32, i32
  }
  func.func @transform_1(%arg0: i32) -> (i32, i32) {
    %c0_i32 = arith.constant 0 : i32
    %c0_i32_0 = arith.constant 0 : i32
    %c0_i32_1 = arith.constant 0 : i32
    return %c0_i32, %c0_i32_0 : i32, i32
  }
  func.func @transform_2(%arg0: i32) -> (i32, i32, i32) {
    %c0_i32 = arith.constant 0 : i32
    %c0_i32_0 = arith.constant 0 : i32
    %c0_i32_1 = arith.constant 0 : i32
    %c0_i32_2 = arith.constant 0 : i32
    return %c0_i32, %c0_i32_0, %c0_i32_1 : i32, i32, i32
  }
  func.func @transform_3(%arg0: i32) -> (i32, i32) {
    %c0_i32 = arith.constant 0 : i32
    %c0_i32_0 = arith.constant 0 : i32
    %c0_i32_1 = arith.constant 0 : i32
    return %c0_i32, %c0_i32_0 : i32, i32
  }
  func.func @transform_4(%arg0: i32) -> (i32, i32, i32) {
    %c0_i32 = arith.constant 0 : i32
    %c0_i32_0 = arith.constant 0 : i32
    %c0_i32_1 = arith.constant 0 : i32
    return %arg0, %c0_i32, %c0_i32_0 : i32, i32, i32
  }
  func.func @transform_5(%arg0: i32) -> (i32, i32, i32) {
    %c0_i32 = arith.constant 0 : i32
    %c0_i32_0 = arith.constant 0 : i32
    %c0_i32_1 = arith.constant 0 : i32
    return %arg0, %c0_i32, %c0_i32_0 : i32, i32, i32
  }
}

module attributes {stable_mosaic.version = 11 : i64} {
  func.func @_bn_relu_kernel(%arg0: i32, %arg1: memref<1x8x256xf32, #tpu.memory_space<vmem>>, %arg2: memref<8x1xf32, #tpu.memory_space<vmem>>, %arg3: memref<8x1xf32, #tpu.memory_space<vmem>>, %arg4: memref<1x8x256xf32, #tpu.memory_space<vmem>>) attributes {dimension_semantics = [#tpu.dimension_semantics<parallel>], iteration_bounds = array<i64: 2>, scalar_prefetch = 0 : i64, scratch_operands = 0 : i64, tpu.core_type = #tpu.core_type<tc>, window_params = [{transform_indices = @transform_0, window_bounds = array<i64: 1, 8, 256>}, {pipeline_mode = #tpu.pipeline_mode<synchronous>, transform_indices = @transform_1, window_bounds = array<i64: 8, 1>}, {pipeline_mode = #tpu.pipeline_mode<synchronous>, transform_indices = @transform_2, window_bounds = array<i64: 8, 1>}, {transform_indices = @transform_3, window_bounds = array<i64: 1, 8, 256>}]} {
    %c0 = arith.constant 0 : index
    %c0_0 = arith.constant 0 : index
    %c0_1 = arith.constant 0 : index
    %0 = vector.load %arg1[%c0, %c0_0, %c0_1] : memref<1x8x256xf32, #tpu.memory_space<vmem>>, vector<1x8x256xf32>
    %1 = vector.shape_cast %0 : vector<1x8x256xf32> to vector<8x256xf32>
    %c0_2 = arith.constant 0 : index
    %c0_3 = arith.constant 0 : index
    %2 = vector.load %arg2[%c0_2, %c0_3] : memref<8x1xf32, #tpu.memory_space<vmem>>, vector<8x1xf32>
    %3 = vector.broadcast %2 : vector<8x1xf32> to vector<8x256xf32>
    %4 = arith.mulf %1, %3 : vector<8x256xf32>
    %c0_4 = arith.constant 0 : index
    %c0_5 = arith.constant 0 : index
    %5 = vector.load %arg3[%c0_4, %c0_5] : memref<8x1xf32, #tpu.memory_space<vmem>>, vector<8x1xf32>
    %6 = vector.broadcast %5 : vector<8x1xf32> to vector<8x256xf32>
    %7 = arith.addf %4, %6 : vector<8x256xf32>
    %cst = arith.constant 0.000000e+00 : f32
    %8 = vector.broadcast %cst : f32 to vector<8x256xf32>
    %9 = arith.maximumf %7, %8 : vector<8x256xf32>
    %c0_6 = arith.constant 0 : index
    %c0_7 = arith.constant 0 : index
    %c0_8 = arith.constant 0 : index
    %10 = vector.load %arg4[%c0_6, %c0_7, %c0_8] : memref<1x8x256xf32, #tpu.memory_space<vmem>>, vector<1x8x256xf32>
    %11 = vector.shape_cast %10 : vector<1x8x256xf32> to vector<8x256xf32>
    %12 = vector.shape_cast %9 : vector<8x256xf32> to vector<1x8x256xf32>
    tpu.vector_store %arg4[%c0_6, %c0_7, %c0_8], %12 {strides = array<i32>} : memref<1x8x256xf32, #tpu.memory_space<vmem>>, vector<1x8x256xf32>,
    return
  }
  func.func @transform_0(%arg0: i32) -> (i32, i32, i32) {
    %c0_i32 = arith.constant 0 : i32
    %c0_i32_0 = arith.constant 0 : i32
    %c0_i32_1 = arith.constant 0 : i32
    return %arg0, %c0_i32, %c0_i32_0 : i32, i32, i32
  }
  func.func @transform_1(%arg0: i32) -> (i32, i32) {
    %c0_i32 = arith.constant 0 : i32
    %c0_i32_0 = arith.constant 0 : i32
    %c0_i32_1 = arith.constant 0 : i32
    return %c0_i32, %c0_i32_0 : i32, i32
  }
  func.func @transform_2(%arg0: i32) -> (i32, i32) {
    %c0_i32 = arith.constant 0 : i32
    %c0_i32_0 = arith.constant 0 : i32
    %c0_i32_1 = arith.constant 0 : i32
    return %c0_i32, %c0_i32_0 : i32, i32
  }
  func.func @transform_3(%arg0: i32) -> (i32, i32, i32) {
    %c0_i32 = arith.constant 0 : i32
    %c0_i32_0 = arith.constant 0 : i32
    %c0_i32_1 = arith.constant 0 : i32
    return %arg0, %c0_i32, %c0_i32_0 : i32, i32, i32
  }
}

module attributes {stable_mosaic.version = 11 : i64} {
  func.func @kernel(%arg0: i32, %arg1: memref<1x8x256xf32, #tpu.memory_space<vmem>>, %arg2: memref<8x1xf32, #tpu.memory_space<vmem>>, %arg3: memref<8x1xf32, #tpu.memory_space<vmem>>, %arg4: memref<3x256xf32, #tpu.memory_space<vmem>>, %arg5: memref<9x8x8xf32, #tpu.memory_space<vmem>>, %arg6: memref<8x1xf32, #tpu.memory_space<vmem>>, %arg7: memref<1x8x256xf32, #tpu.memory_space<vmem>>, %arg8: memref<1x8x2xf32, #tpu.memory_space<vmem>>, %arg9: memref<8x512xf32, #tpu.memory_space<vmem>>) attributes {dimension_semantics = [#tpu.dimension_semantics<parallel>], iteration_bounds = array<i64: 2>, scalar_prefetch = 0 : i64, scratch_operands = 1 : i64, tpu.core_type = #tpu.core_type<tc>, window_params = [{transform_indices = @transform_0, window_bounds = array<i64: 1, 8, 256>}, {pipeline_mode = #tpu.pipeline_mode<synchronous>, transform_indices = @transform_1, window_bounds = array<i64: 8, 1>}, {pipeline_mode = #tpu.pipeline_mode<synchronous>, transform_indices = @transform_2, window_bounds = array<i64: 8, 1>}, {pipeline_mode = #tpu.pipeline_mode<synchronous>, transform_indices = @transform_3, window_bounds = array<i64: 3, 256>}, {pipeline_mode = #tpu.pipeline_mode<synchronous>, transform_indices = @transform_4, window_bounds = array<i64: 9, 8, 8>}, {pipeline_mode = #tpu.pipeline_mode<synchronous>, transform_indices = @transform_5, window_bounds = array<i64: 8, 1>}, {transform_indices = @transform_6, window_bounds = array<i64: 1, 8, 256>}, {transform_indices = @transform_7, window_bounds = array<i64: 1, 8, 2>}]} {
    %c0 = arith.constant 0 : index
    %c0_0 = arith.constant 0 : index
    %c0_1 = arith.constant 0 : index
    %0 = vector.load %arg1[%c0, %c0_0, %c0_1] : memref<1x8x256xf32, #tpu.memory_space<vmem>>, vector<1x8x256xf32>
    %1 = vector.shape_cast %0 : vector<1x8x256xf32> to vector<8x256xf32>
    %c0_2 = arith.constant 0 : index
    %c0_3 = arith.constant 0 : index
    %2 = vector.load %arg2[%c0_2, %c0_3] : memref<8x1xf32, #tpu.memory_space<vmem>>, vector<8x1xf32>
    %3 = vector.broadcast %2 : vector<8x1xf32> to vector<8x256xf32>
    %4 = arith.mulf %1, %3 : vector<8x256xf32>
    %c0_4 = arith.constant 0 : index
    %c0_5 = arith.constant 0 : index
    %5 = vector.load %arg3[%c0_4, %c0_5] : memref<8x1xf32, #tpu.memory_space<vmem>>, vector<8x1xf32>
    %6 = vector.broadcast %5 : vector<8x1xf32> to vector<8x256xf32>
    %7 = arith.addf %4, %6 : vector<8x256xf32>
    %cst = arith.constant 0.000000e+00 : f32
    %8 = vector.broadcast %cst : f32 to vector<8x256xf32>
    %9 = arith.maximumf %7, %8 : vector<8x256xf32>
    %cst_6 = arith.constant 0.000000e+00 : f32
    %10 = vector.broadcast %cst_6 : f32 to vector<8x128xf32>
    %c0_7 = arith.constant 0 : index
    %c0_8 = arith.constant 0 : index
    %11 = vector.load %arg9[%c0_7, %c0_8] : memref<8x512xf32, #tpu.memory_space<vmem>>, vector<8x128xf32>
    tpu.vector_store %arg9[%c0_7, %c0_8], %10 {strides = array<i32>} : memref<8x512xf32, #tpu.memory_space<vmem>>, vector<8x128xf32>,
    %cst_9 = arith.constant 0.000000e+00 : f32
    %12 = vector.broadcast %cst_9 : f32 to vector<8x128xf32>
    %c0_10 = arith.constant 0 : index
    %c384 = arith.constant 384 : index
    %13 = vector.load %arg9[%c0_10, %c384] : memref<8x512xf32, #tpu.memory_space<vmem>>, vector<8x128xf32>
    tpu.vector_store %arg9[%c0_10, %c384], %12 {strides = array<i32>} : memref<8x512xf32, #tpu.memory_space<vmem>>, vector<8x128xf32>,
    %c0_11 = arith.constant 0 : index
    %c128 = arith.constant 128 : index
    %14 = vector.load %arg9[%c0_11, %c128] : memref<8x512xf32, #tpu.memory_space<vmem>>, vector<8x256xf32>
    tpu.vector_store %arg9[%c0_11, %c128], %9 {strides = array<i32>} : memref<8x512xf32, #tpu.memory_space<vmem>>, vector<8x256xf32>,
    %c0_12 = arith.constant 0 : index
    %c111 = arith.constant 111 : index
    %15 = vector.load %arg9[%c0_12, %c111] : memref<8x512xf32, #tpu.memory_space<vmem>>, vector<8x256xf32>
    %c0_13 = arith.constant 0 : index
    %c0_14 = arith.constant 0 : index
    %16 = vector.load %arg4[%c0_13, %c0_14] : memref<3x256xf32, #tpu.memory_space<vmem>>, vector<1x256xf32>
    %17 = vector.broadcast %16 : vector<1x256xf32> to vector<8x256xf32>
    %18 = arith.mulf %15, %17 : vector<8x256xf32>
    %c0_15 = arith.constant 0 : index
    %c0_16 = arith.constant 0 : index
    %c0_17 = arith.constant 0 : index
    %19 = vector.load %arg5[%c0_15, %c0_16, %c0_17] : memref<9x8x8xf32, #tpu.memory_space<vmem>>, vector<1x8x8xf32>
    %20 = vector.shape_cast %19 : vector<1x8x8xf32> to vector<8x8xf32>
    %cst_18 = arith.constant dense<0.000000e+00> : vector<8x256xf32>
    %21 = tpu.matmul %20, %18, %cst_18 {dimension_numbers = #tpu.dot_dimension_numbers<[1], [0], [0], [1], [0, 0, 1, 1], [], []>} : vector<8x8xf32>, vector<8x256xf32>, vector<8x256xf32> -> vector<8x256xf32>
    %c0_19 = arith.constant 0 : index
    %c112 = arith.constant 112 : index
    %22 = vector.load %arg9[%c0_19, %c112] : memref<8x512xf32, #tpu.memory_space<vmem>>, vector<8x256xf32>
    %c1 = arith.constant 1 : index
    %c0_20 = arith.constant 0 : index
    %c0_21 = arith.constant 0 : index
    %23 = vector.load %arg5[%c1, %c0_20, %c0_21] : memref<9x8x8xf32, #tpu.memory_space<vmem>>, vector<1x8x8xf32>
    %24 = vector.shape_cast %23 : vector<1x8x8xf32> to vector<8x8xf32>
    %cst_22 = arith.constant dense<0.000000e+00> : vector<8x256xf32>
    %25 = tpu.matmul %24, %22, %cst_22 {dimension_numbers = #tpu.dot_dimension_numbers<[1], [0], [0], [1], [0, 0, 1, 1], [], []>} : vector<8x8xf32>, vector<8x256xf32>, vector<8x256xf32> -> vector<8x256xf32>
    %26 = arith.addf %21, %25 : vector<8x256xf32>
    %c0_23 = arith.constant 0 : index
    %c113 = arith.constant 113 : index
    %27 = vector.load %arg9[%c0_23, %c113] : memref<8x512xf32, #tpu.memory_space<vmem>>, vector<8x256xf32>
    %c2 = arith.constant 2 : index
    %c0_24 = arith.constant 0 : index
    %28 = vector.load %arg4[%c2, %c0_24] : memref<3x256xf32, #tpu.memory_space<vmem>>, vector<1x256xf32>
    %29 = vector.broadcast %28 : vector<1x256xf32> to vector<8x256xf32>
    %30 = arith.mulf %27, %29 : vector<8x256xf32>
    %c2_25 = arith.constant 2 : index
    %c0_26 = arith.constant 0 : index
    %c0_27 = arith.constant 0 : index
    %31 = vector.load %arg5[%c2_25, %c0_26, %c0_27] : memref<9x8x8xf32, #tpu.memory_space<vmem>>, vector<1x8x8xf32>
    %32 = vector.shape_cast %31 : vector<1x8x8xf32> to vector<8x8xf32>
    %cst_28 = arith.constant dense<0.000000e+00> : vector<8x256xf32>
    %33 = tpu.matmul %32, %30, %cst_28 {dimension_numbers = #tpu.dot_dimension_numbers<[1], [0], [0], [1], [0, 0, 1, 1], [], []>} : vector<8x8xf32>, vector<8x256xf32>, vector<8x256xf32> -> vector<8x256xf32>
    %34 = arith.addf %26, %33 : vector<8x256xf32>
    %c0_29 = arith.constant 0 : index
    %c127 = arith.constant 127 : index
    %35 = vector.load %arg9[%c0_29, %c127] : memref<8x512xf32, #tpu.memory_space<vmem>>, vector<8x256xf32>
    %c0_30 = arith.constant 0 : index
    %c0_31 = arith.constant 0 : index
    %36 = vector.load %arg4[%c0_30, %c0_31] : memref<3x256xf32, #tpu.memory_space<vmem>>, vector<1x256xf32>
    %37 = vector.broadcast %36 : vector<1x256xf32> to vector<8x256xf32>
    %38 = arith.mulf %35, %37 : vector<8x256xf32>
    %c3 = arith.constant 3 : index
    %c0_32 = arith.constant 0 : index
    %c0_33 = arith.constant 0 : index
    %39 = vector.load %arg5[%c3, %c0_32, %c0_33] : memref<9x8x8xf32, #tpu.memory_space<vmem>>, vector<1x8x8xf32>
    %40 = vector.shape_cast %39 : vector<1x8x8xf32> to vector<8x8xf32>
    %cst_34 = arith.constant dense<0.000000e+00> : vector<8x256xf32>
    %41 = tpu.matmul %40, %38, %cst_34 {dimension_numbers = #tpu.dot_dimension_numbers<[1], [0], [0], [1], [0, 0, 1, 1], [], []>} : vector<8x8xf32>, vector<8x256xf32>, vector<8x256xf32> -> vector<8x256xf32>
    %42 = arith.addf %34, %41 : vector<8x256xf32>
    %c0_35 = arith.constant 0 : index
    %c128_36 = arith.constant 128 : index
    %43 = vector.load %arg9[%c0_35, %c128_36] : memref<8x512xf32, #tpu.memory_space<vmem>>, vector<8x256xf32>
    %c4 = arith.constant 4 : index
    %c0_37 = arith.constant 0 : index
    %c0_38 = arith.constant 0 : index
    %44 = vector.load %arg5[%c4, %c0_37, %c0_38] : memref<9x8x8xf32, #tpu.memory_space<vmem>>, vector<1x8x8xf32>
    %45 = vector.shape_cast %44 : vector<1x8x8xf32> to vector<8x8xf32>
    %cst_39 = arith.constant dense<0.000000e+00> : vector<8x256xf32>
    %46 = tpu.matmul %45, %43, %cst_39 {dimension_numbers = #tpu.dot_dimension_numbers<[1], [0], [0], [1], [0, 0, 1, 1], [], []>} : vector<8x8xf32>, vector<8x256xf32>, vector<8x256xf32> -> vector<8x256xf32>
    %47 = arith.addf %42, %46 : vector<8x256xf32>
    %c0_40 = arith.constant 0 : index
    %c129 = arith.constant 129 : index
    %48 = vector.load %arg9[%c0_40, %c129] : memref<8x512xf32, #tpu.memory_space<vmem>>, vector<8x256xf32>
    %c2_41 = arith.constant 2 : index
    %c0_42 = arith.constant 0 : index
    %49 = vector.load %arg4[%c2_41, %c0_42] : memref<3x256xf32, #tpu.memory_space<vmem>>, vector<1x256xf32>
    %50 = vector.broadcast %49 : vector<1x256xf32> to vector<8x256xf32>
    %51 = arith.mulf %48, %50 : vector<8x256xf32>
    %c5 = arith.constant 5 : index
    %c0_43 = arith.constant 0 : index
    %c0_44 = arith.constant 0 : index
    %52 = vector.load %arg5[%c5, %c0_43, %c0_44] : memref<9x8x8xf32, #tpu.memory_space<vmem>>, vector<1x8x8xf32>
    %53 = vector.shape_cast %52 : vector<1x8x8xf32> to vector<8x8xf32>
    %cst_45 = arith.constant dense<0.000000e+00> : vector<8x256xf32>
    %54 = tpu.matmul %53, %51, %cst_45 {dimension_numbers = #tpu.dot_dimension_numbers<[1], [0], [0], [1], [0, 0, 1, 1], [], []>} : vector<8x8xf32>, vector<8x256xf32>, vector<8x256xf32> -> vector<8x256xf32>
    %55 = arith.addf %47, %54 : vector<8x256xf32>
    %c0_46 = arith.constant 0 : index
    %c143 = arith.constant 143 : index
    %56 = vector.load %arg9[%c0_46, %c143] : memref<8x512xf32, #tpu.memory_space<vmem>>, vector<8x256xf32>
    %c0_47 = arith.constant 0 : index
    %c0_48 = arith.constant 0 : index
    %57 = vector.load %arg4[%c0_47, %c0_48] : memref<3x256xf32, #tpu.memory_space<vmem>>, vector<1x256xf32>
    %58 = vector.broadcast %57 : vector<1x256xf32> to vector<8x256xf32>
    %59 = arith.mulf %56, %58 : vector<8x256xf32>
    %c6 = arith.constant 6 : index
    %c0_49 = arith.constant 0 : index
    %c0_50 = arith.constant 0 : index
    %60 = vector.load %arg5[%c6, %c0_49, %c0_50] : memref<9x8x8xf32, #tpu.memory_space<vmem>>, vector<1x8x8xf32>
    %61 = vector.shape_cast %60 : vector<1x8x8xf32> to vector<8x8xf32>
    %cst_51 = arith.constant dense<0.000000e+00> : vector<8x256xf32>
    %62 = tpu.matmul %61, %59, %cst_51 {dimension_numbers = #tpu.dot_dimension_numbers<[1], [0], [0], [1], [0, 0, 1, 1], [], []>} : vector<8x8xf32>, vector<8x256xf32>, vector<8x256xf32> -> vector<8x256xf32>
    %63 = arith.addf %55, %62 : vector<8x256xf32>
    %c0_52 = arith.constant 0 : index
    %c144 = arith.constant 144 : index
    %64 = vector.load %arg9[%c0_52, %c144] : memref<8x512xf32, #tpu.memory_space<vmem>>, vector<8x256xf32>
    %c7 = arith.constant 7 : index
    %c0_53 = arith.constant 0 : index
    %c0_54 = arith.constant 0 : index
    %65 = vector.load %arg5[%c7, %c0_53, %c0_54] : memref<9x8x8xf32, #tpu.memory_space<vmem>>, vector<1x8x8xf32>
    %66 = vector.shape_cast %65 : vector<1x8x8xf32> to vector<8x8xf32>
    %cst_55 = arith.constant dense<0.000000e+00> : vector<8x256xf32>
    %67 = tpu.matmul %66, %64, %cst_55 {dimension_numbers = #tpu.dot_dimension_numbers<[1], [0], [0], [1], [0, 0, 1, 1], [], []>} : vector<8x8xf32>, vector<8x256xf32>, vector<8x256xf32> -> vector<8x256xf32>
    %68 = arith.addf %63, %67 : vector<8x256xf32>
    %c0_56 = arith.constant 0 : index
    %c145 = arith.constant 145 : index
    %69 = vector.load %arg9[%c0_56, %c145] : memref<8x512xf32, #tpu.memory_space<vmem>>, vector<8x256xf32>
    %c2_57 = arith.constant 2 : index
    %c0_58 = arith.constant 0 : index
    %70 = vector.load %arg4[%c2_57, %c0_58] : memref<3x256xf32, #tpu.memory_space<vmem>>, vector<1x256xf32>
    %71 = vector.broadcast %70 : vector<1x256xf32> to vector<8x256xf32>
    %72 = arith.mulf %69, %71 : vector<8x256xf32>
    %c8 = arith.constant 8 : index
    %c0_59 = arith.constant 0 : index
    %c0_60 = arith.constant 0 : index
    %73 = vector.load %arg5[%c8, %c0_59, %c0_60] : memref<9x8x8xf32, #tpu.memory_space<vmem>>, vector<1x8x8xf32>
    %74 = vector.shape_cast %73 : vector<1x8x8xf32> to vector<8x8xf32>
    %cst_61 = arith.constant dense<0.000000e+00> : vector<8x256xf32>
    %75 = tpu.matmul %74, %72, %cst_61 {dimension_numbers = #tpu.dot_dimension_numbers<[1], [0], [0], [1], [0, 0, 1, 1], [], []>} : vector<8x8xf32>, vector<8x256xf32>, vector<8x256xf32> -> vector<8x256xf32>
    %76 = arith.addf %68, %75 : vector<8x256xf32>
    %c0_62 = arith.constant 0 : index
    %c0_63 = arith.constant 0 : index
    %77 = vector.load %arg6[%c0_62, %c0_63] : memref<8x1xf32, #tpu.memory_space<vmem>>, vector<8x1xf32>
    %78 = vector.broadcast %77 : vector<8x1xf32> to vector<8x256xf32>
    %79 = arith.addf %76, %78 : vector<8x256xf32>
    %c0_64 = arith.constant 0 : index
    %c0_65 = arith.constant 0 : index
    %c0_66 = arith.constant 0 : index
    %80 = vector.load %arg7[%c0_64, %c0_65, %c0_66] : memref<1x8x256xf32, #tpu.memory_space<vmem>>, vector<1x8x256xf32>
    %81 = vector.shape_cast %80 : vector<1x8x256xf32> to vector<8x256xf32>
    %82 = vector.shape_cast %79 : vector<8x256xf32> to vector<1x8x256xf32>
    tpu.vector_store %arg7[%c0_64, %c0_65, %c0_66], %82 {strides = array<i32>} : memref<1x8x256xf32, #tpu.memory_space<vmem>>, vector<1x8x256xf32>,
    %cst_67 = arith.constant dense<0.000000e+00> : vector<8xf32>
    %83 = vector.multi_reduction <add>, %79, %cst_67 [1] : vector<8x256xf32> to vector<8xf32>
    %84 = vector.shape_cast %83 : vector<8xf32> to vector<8x1xf32>
    %85 = arith.mulf %79, %79 : vector<8x256xf32>
    %cst_68 = arith.constant dense<0.000000e+00> : vector<8xf32>
    %86 = vector.multi_reduction <add>, %85, %cst_68 [1] : vector<8x256xf32> to vector<8xf32>
    %87 = vector.shape_cast %86 : vector<8xf32> to vector<8x1xf32>
    %88 = tpu.concatenate %84, %87 in 1 : vector<8x1xf32>, vector<8x1xf32> -> vector<8x2xf32>
    %c0_69 = arith.constant 0 : index
    %c0_70 = arith.constant 0 : index
    %c0_71 = arith.constant 0 : index
    %89 = vector.load %arg8[%c0_69, %c0_70, %c0_71] : memref<1x8x2xf32, #tpu.memory_space<vmem>>, vector<1x8x2xf32>
    %90 = vector.shape_cast %89 : vector<1x8x2xf32> to vector<8x2xf32>
    %91 = vector.shape_cast %88 : vector<8x2xf32> to vector<1x8x2xf32>
    tpu.vector_store %arg8[%c0_69, %c0_70, %c0_71], %91 {strides = array<i32>} : memref<1x8x2xf32, #tpu.memory_space<vmem>>, vector<1x8x2xf32>,
    return
  }
  func.func @transform_0(%arg0: i32) -> (i32, i32, i32) {
    %c0_i32 = arith.constant 0 : i32
    %c0_i32_0 = arith.constant 0 : i32
    %c0_i32_1 = arith.constant 0 : i32
    return %arg0, %c0_i32, %c0_i32_0 : i32, i32, i32
  }
  func.func @transform_1(%arg0: i32) -> (i32, i32) {
    %c0_i32 = arith.constant 0 : i32
    %c0_i32_0 = arith.constant 0 : i32
    %c0_i32_1 = arith.constant 0 : i32
    return %c0_i32, %c0_i32_0 : i32, i32
  }
  func.func @transform_2(%arg0: i32) -> (i32, i32) {
    %c0_i32 = arith.constant 0 : i32
    %c0_i32_0 = arith.constant 0 : i32
    %c0_i32_1 = arith.constant 0 : i32
    return %c0_i32, %c0_i32_0 : i32, i32
  }
  func.func @transform_3(%arg0: i32) -> (i32, i32) {
    %c0_i32 = arith.constant 0 : i32
    %c0_i32_0 = arith.constant 0 : i32
    %c0_i32_1 = arith.constant 0 : i32
    return %c0_i32, %c0_i32_0 : i32, i32
  }
  func.func @transform_4(%arg0: i32) -> (i32, i32, i32) {
    %c0_i32 = arith.constant 0 : i32
    %c0_i32_0 = arith.constant 0 : i32
    %c0_i32_1 = arith.constant 0 : i32
    %c0_i32_2 = arith.constant 0 : i32
    return %c0_i32, %c0_i32_0, %c0_i32_1 : i32, i32, i32
  }
  func.func @transform_5(%arg0: i32) -> (i32, i32) {
    %c0_i32 = arith.constant 0 : i32
    %c0_i32_0 = arith.constant 0 : i32
    %c0_i32_1 = arith.constant 0 : i32
    return %c0_i32, %c0_i32_0 : i32, i32
  }
  func.func @transform_6(%arg0: i32) -> (i32, i32, i32) {
    %c0_i32 = arith.constant 0 : i32
    %c0_i32_0 = arith.constant 0 : i32
    %c0_i32_1 = arith.constant 0 : i32
    return %arg0, %c0_i32, %c0_i32_0 : i32, i32, i32
  }
  func.func @transform_7(%arg0: i32) -> (i32, i32, i32) {
    %c0_i32 = arith.constant 0 : i32
    %c0_i32_0 = arith.constant 0 : i32
    %c0_i32_1 = arith.constant 0 : i32
    return %arg0, %c0_i32, %c0_i32_0 : i32, i32, i32
  }
}

</mosaic_0001>

<llo_original>
// kernel: double_conv.5
$region0: #{double_conv.5}
  #allocation0 [shape = 'u32[]', space=smem, size = 0x4, offset = 0x4, fixed_abs, tag = 'smem constant byte address 0x4 - core index']
  #allocation1 [shape = 'u32[144,128]{1,0:T(1,128)}', space=vmem, size = 0x12000, scoped, tag = 'internal scratch']
  %s0 = inlined_call_operand.vmem [shape: f32[2,8,256], index: 0, kind: input, shape index: {}, may-alias: {0,3}]
  %s1 = inlined_call_operand.vmem [shape: f32[8,1], index: 1, kind: input, shape index: {}]
  %s2 = inlined_call_operand.vmem [shape: f32[8,1], index: 2, kind: input, shape index: {}]
  %s3 = inlined_call_operand.vmem [shape: f32[2,8,256], index: 3, kind: output, shape index: {}, may-alias: {0,3}]
  %s4 = sld [smem:[#allocation0]]
  $region45: #{double_conv.5} parent=0
    _
  %s6 = ssub.s32 1, %s4
  %s7 = scalar_select 0, %s6, %s4
  loop: start=0, step=1, limit=4
  $region2: #{double_conv.5} parent=0 // loop_pre_header
    _
  $region3: #{double_conv.5} parent=0 // loop_header
    %s9 = sphi 0, %s13
    %p10 = scmp.ge.s32.totalorder %s9, 4
    %s19 = sphi 0, %s21
    %s22 = sphi 0, %s19
    %s23 = sphi 0, %s22
    %s39 = sphi 0, %s23
    %s43 = sphi 0, %s43
    %s45 = sphi 0, %s43
    %s46 = sphi 0, %s45
    %s60 = sphi 0, %s46
    %s64 = sphi 0, %s64
    %s66 = sphi 0, %s64
    %s67 = sphi 0, %s66
    %s81 = sphi 0, %s67
    %s87 = sphi 0, %s89
    %s90 = sphi 0, %s87
    %s91 = sphi 0, %s90
    %s107 = sphi 0, %s91
  $region4: #{double_conv.5} parent=0 // loop_header_branch
    %12 = sbr.rel (%p10) target = $region8
  $region5: #{double_conv.5} parent=0 // loop_body
    %s14 = ssub.s32 %s9, 1
    %s15 = ssub.s32 %s9, 2
    %s16 = sadd.s32 %s9, 1
    %s17 = ssub.s32 %s9, %s16
    %p18 = scmp.eq.s32.totalorder %s17, 0
    %s20 = sadd.s32 %s19, 1
    %s21 = scalar_select %p18, %s19, %s20
    %p24 = pneg %p18
    %p25 = scmp.eq.s32.totalorder %s9, 1
    %p26 = por %p24, %p25
    %p27 = scmp.ne.s32.totalorder %s19, %s22
    %p28 = scmp.eq.s32.totalorder %s9, 0
    %p29 = por %p27, %p28
    %p30 = scmp.ne.s32.totalorder %s19, %s22
    %p31 = scmp.eq.s32.totalorder %s14, 1
    %p32 = por %p30, %p31
    %p33 = scmp.ne.s32.totalorder %s22, %s23
    %p34 = scmp.eq.s32.totalorder %s14, 0
    %p35 = por %p33, %p34
    %p36 = scmp.ne.s32.totalorder %s22, %s23
    %p37 = scmp.eq.s32.totalorder %s15, 1
    %p38 = por %p36, %p37
    %p40 = scmp.ne.s32.totalorder %s23, %s39
    %p41 = scmp.eq.s32.totalorder %s15, 0
    %p42 = por %p40, %p41
    %s44 = sadd.s32 %s43, 1
    %p47 = scmp.eq.s32.totalorder %s9, 1
    %p48 = scmp.ne.s32.totalorder %s43, %s45
    %p49 = scmp.eq.s32.totalorder %s9, 0
    %p50 = por %p48, %p49
    %p51 = scmp.ne.s32.totalorder %s43, %s45
    %p52 = scmp.eq.s32.totalorder %s14, 1
    %p53 = por %p51, %p52
    %p54 = scmp.ne.s32.totalorder %s45, %s46
    %p55 = scmp.eq.s32.totalorder %s14, 0
    %p56 = por %p54, %p55
    %p57 = scmp.ne.s32.totalorder %s45, %s46
    %p58 = scmp.eq.s32.totalorder %s15, 1
    %p59 = por %p57, %p58
    %p61 = scmp.ne.s32.totalorder %s46, %s60
    %p62 = scmp.eq.s32.totalorder %s15, 0
    %p63 = por %p61, %p62
    %s65 = sadd.s32 %s64, 1
    %p68 = scmp.eq.s32.totalorder %s9, 1
    %p69 = scmp.ne.s32.totalorder %s64, %s66
    %p70 = scmp.eq.s32.totalorder %s9, 0
    %p71 = por %p69, %p70
    %p72 = scmp.ne.s32.totalorder %s64, %s66
    %p73 = scmp.eq.s32.totalorder %s14, 1
    %p74 = por %p72, %p73
    %p75 = scmp.ne.s32.totalorder %s66, %s67
    %p76 = scmp.eq.s32.totalorder %s14, 0
    %p77 = por %p75, %p76
    %p78 = scmp.ne.s32.totalorder %s66, %s67
    %p79 = scmp.eq.s32.totalorder %s15, 1
    %p80 = por %p78, %p79
    %p82 = scmp.ne.s32.totalorder %s67, %s81
    %p83 = scmp.eq.s32.totalorder %s15, 0
    %p84 = por %p82, %p83
    %s85 = ssub.s32 %s9, %s16
    %p86 = scmp.eq.s32.totalorder %s85, 0
    %s88 = sadd.s32 %s87, 1
    %s89 = scalar_select %p86, %s87, %s88
    %p92 = pneg %p86
    %p93 = scmp.eq.s32.totalorder %s9, 1
    %p94 = por %p92, %p93
    %p95 = scmp.ne.s32.totalorder %s87, %s90
    %p96 = scmp.eq.s32.totalorder %s9, 0
    %p97 = por %p95, %p96
    %p98 = scmp.ne.s32.totalorder %s87, %s90
    %p99 = scmp.eq.s32.totalorder %s14, 1
    %p100 = por %p98, %p99
    %p101 = scmp.ne.s32.totalorder %s90, %s91
    %p102 = scmp.eq.s32.totalorder %s14, 0
    %p103 = por %p101, %p102
    %p104 = scmp.ne.s32.totalorder %s90, %s91
    %p105 = scmp.eq.s32.totalorder %s15, 1
    %p106 = por %p104, %p105
    %p108 = scmp.ne.s32.totalorder %s91, %s107
    %p109 = scmp.eq.s32.totalorder %s15, 0
    %p110 = por %p108, %p109
    %p111 = scmp.le.s32.totalorder 1, %s9
    %p112 = scmp.lt.s32.totalorder %s9, 3
    %p113 = pnand %p111, %p112
    %p114 = pneg %p113
    // Predicated region
    $region9: #{double_conv.5} parent=5 // pred_check
      _
    $region10: #{double_conv.5} parent=5 // pred_check_branch
      %116 = sbr.rel (%p113) target = $region12
    $region11: #{double_conv.5} parent=5 // pred_region
      %s117 = ssub.s32 %s9, 1
      // Predicated region
      $region13: #{double_conv.5} parent=11 // pred_check
        %p118 = pneg %p56
      $region14: #{double_conv.5} parent=11 // pred_check_branch
        %120 = sbr.rel (%p118) target = $region16
      $region15: #{double_conv.5} parent=11 // pred_region
        _
      $region16: #{double_conv.5} parent=11 // pred_fallthru
        _
      // Predicated region
      $region17: #{double_conv.5} parent=11 // pred_check
        %p121 = pneg %p77
      $region18: #{double_conv.5} parent=11 // pred_check_branch
        %123 = sbr.rel (%p121) target = $region20
      $region19: #{double_conv.5} parent=11 // pred_region
        _
      $region20: #{double_conv.5} parent=11 // pred_fallthru
        _
    $region12: #{double_conv.5} parent=5 // pred_fallthru
      _
    %p124 = scmp.lt.s32.totalorder %s9, 2
    // Predicated region
    $region21: #{double_conv.5} parent=5 // pred_check
      %p125 = pneg %p124
    $region22: #{double_conv.5} parent=5 // pred_check_branch
      %127 = sbr.rel (%p125) target = $region24
    $region23: #{double_conv.5} parent=5 // pred_region
      // Predicated region
      $region25: #{double_conv.5} parent=23 // pred_check
        %p128 = pneg %p29
      $region26: #{double_conv.5} parent=23 // pred_check_branch
        %130 = sbr.rel (%p128) target = $region28
      $region27: #{double_conv.5} parent=23 // pred_region
        %p131 = scmp.lt.s32.totalorder %s9, 1
        %s132 = scalar_select %p131, %s9, 1
        %s133 = smul.addr %s132, 2
        %s134 = smul.addr %s133, 8
        %s135 = scalar_lea.vmem %s0, %s134
      $region28: #{double_conv.5} parent=23 // pred_fallthru
        _
    $region24: #{double_conv.5} parent=5 // pred_fallthru
      _
    %p136 = scmp.le.s32.totalorder 1, %s9
    %p137 = scmp.lt.s32.totalorder %s9, 3
    %p138 = pnand %p136, %p137
    %p139 = pneg %p138
    // Predicated region
    $region29: #{double_conv.5} parent=5 // pred_check
      _
    $region30: #{double_conv.5} parent=5 // pred_check_branch
      %141 = sbr.rel (%p138) target = $region32
    $region31: #{double_conv.5} parent=5 // pred_region
      %s142 = ssub.s32 %s9, 1
      %p143 = scmp.lt.s32.totalorder %s14, 1
      %s144 = scalar_select %p143, %s14, 1
      %s145 = smul.addr %s144, 2
      %s146 = smul.addr %s145, 8
      %s147 = scalar_lea.vmem %s0, %s146
      %p148 = pneg %p35
      %p149 = pneg %p32
      %p150 = pneg %p56
      %p151 = pneg %p53
      %p152 = pneg %p77
      %p153 = pneg %p74
      %p154 = pneg %p103
      %p155 = pneg %p100
      %p156 = scmp.lt.s32.totalorder %s14, 1
      %s157 = scalar_select %p156, %s14, 1
      %s158 = smul.addr %s157, 2
      %s159 = smul.addr %s158, 8
      %s160 = scalar_lea.vmem %s3, %s159
      %p161 = scmp.lt.s32.totalorder %s14, 1
      %s162 = scalar_select %p161, %s14, 1
      %s163 = smul.addr %s162, 2
      %s164 = smul.addr %s163, 8
      %s165 = scalar_lea.vmem %s0, %s164
      %p166 = scmp.lt.s32.totalorder %s14, 1
      %s167 = scalar_select %p166, %s14, 1
      %s168 = smul.addr %s167, 2
      %s169 = smul.addr %s168, 8
      %s170 = scalar_lea.vmem %s3, %s169
      %v171 = vld [vmem:[%s165] sm:$0xff]
      %v172 = vld [vmem:[%s165 + $0x8] sm:$0xff]
      %v173 = vld [vmem:[%s1] sm:$0xff]
      %175 = vset.pattern.permute.xlu0 0
      %176 = vperm.xlu0 %175, %v173
      %v177 = vpop.permute.xlu0 %176
      %v179 = vmul.f32 %v171, %v177
      %v180 = vmul.f32 %v172, %v177
      %v181 = vld [vmem:[%s2] sm:$0xff]
      %183 = vset.pattern.permute.xlu0 0
      %184 = vperm.xlu0 %183, %v181
      %v185 = vpop.permute.xlu0 %184
      %v187 = vadd.f32 %v179, %v185
      %v188 = vadd.f32 %v180, %v185
      %v189 = vmax.f32 %v187, 0.0
      %v190 = vmax.f32 %v188, 0.0
      %191 = vst [vmem:[%s170] sm:$0xff] %v189
      %192 = vst [vmem:[%s170 + $0x8] sm:$0xff] %v190
      %p193 = scmp.lt.s32.totalorder %s14, 1
      %s194 = scalar_select %p193, %s14, 1
      %s195 = smul.addr %s194, 2
      %s196 = smul.addr %s195, 8
      %s197 = scalar_lea.vmem %s3, %s196
      // Predicated region
      $region33: #{double_conv.5} parent=31 // pred_check
        %p198 = pneg %p100
      $region34: #{double_conv.5} parent=31 // pred_check_branch
        %200 = sbr.rel (%p198) target = $region36
      $region35: #{double_conv.5} parent=31 // pred_region
        _
      $region36: #{double_conv.5} parent=31 // pred_fallthru
        _
    $region32: #{double_conv.5} parent=5 // pred_fallthru
      _
    %p201 = scmp.le.s32.totalorder 2, %s9
    // Predicated region
    $region37: #{double_conv.5} parent=5 // pred_check
      %p202 = pneg %p201
    $region38: #{double_conv.5} parent=5 // pred_check_branch
      %204 = sbr.rel (%p202) target = $region40
    $region39: #{double_conv.5} parent=5 // pred_region
      %s205 = ssub.s32 %s9, 2
      // Predicated region
      $region41: #{double_conv.5} parent=39 // pred_check
        %p206 = pneg %p106
      $region42: #{double_conv.5} parent=39 // pred_check_branch
        %208 = sbr.rel (%p206) target = $region44
      $region43: #{double_conv.5} parent=39 // pred_region
        %p209 = scmp.lt.s32.totalorder %s15, 1
        %s210 = scalar_select %p209, %s15, 1
        %s211 = smul.addr %s210, 2
        %s212 = smul.addr %s211, 8
        %s213 = scalar_lea.vmem %s3, %s212
      $region44: #{double_conv.5} parent=39 // pred_fallthru
        _
    $region40: #{double_conv.5} parent=5 // pred_fallthru
      _
  $region6: #{double_conv.5} parent=0 // loop_footer
    %s13 = sadd.s32 1, %s9
  $region7: #{double_conv.5} parent=0 // loop_footer_branch
    %8 = sbr.rel target = $region3
  $region8: #{double_conv.5} parent=0 // loop_exit
    _

// kernel: double_conv.3
$region0: #{double_conv.3}
  #allocation0 [shape = 'u32[]', space=smem, size = 0x4, offset = 0x4, fixed_abs, tag = 'smem constant byte address 0x4 - core index']
  #allocation1 [shape = 'u32[144,128]{1,0:T(1,128)}', space=vmem, size = 0x12000, scoped, tag = 'internal scratch']
  #allocation2 [shape = 'f32[4,512]{1,0:T(4,128)}', space=vmem, size = 0x2000, scoped, tag = 'scratch operand']
  %s0 = inlined_call_operand.vmem [shape: f32[2,4,256], index: 0, kind: input, shape index: {}]
  %s1 = inlined_call_operand.vmem [shape: f32[3,256], index: 1, kind: input, shape index: {}]
  %s2 = inlined_call_operand.vmem [shape: f32[9,8,4], index: 2, kind: input, shape index: {}]
  %s3 = inlined_call_operand.vmem [shape: f32[8,1], index: 3, kind: input, shape index: {}]
  %s4 = inlined_call_operand.vmem [shape: f32[2,8,256], index: 4, kind: output, shape index: {0}]
  %s5 = inlined_call_operand.vmem [shape: f32[2,8,2], index: 5, kind: output, shape index: {1}]
  %6 = xla_tuple %s4, %s5
  %s7 = sld [smem:[#allocation0]]
  $region57: #{double_conv.3} parent=0
    _
  %s9 = ssub.s32 1, %s7
  %s10 = scalar_select 0, %s9, %s7
  loop: start=0, step=1, limit=4
  $region2: #{double_conv.3} parent=0 // loop_pre_header
    _
  $region3: #{double_conv.3} parent=0 // loop_header
    %s12 = sphi 0, %s16
    %p13 = scmp.ge.s32.totalorder %s12, 4
    %s22 = sphi 0, %s24
    %s25 = sphi 0, %s22
    %s26 = sphi 0, %s25
    %s42 = sphi 0, %s26
    %s46 = sphi 0, %s46
    %s48 = sphi 0, %s46
    %s49 = sphi 0, %s48
    %s63 = sphi 0, %s49
    %s67 = sphi 0, %s67
    %s69 = sphi 0, %s67
    %s70 = sphi 0, %s69
    %s84 = sphi 0, %s70
    %s88 = sphi 0, %s88
    %s90 = sphi 0, %s88
    %s91 = sphi 0, %s90
    %s105 = sphi 0, %s91
    %s111 = sphi 0, %s113
    %s114 = sphi 0, %s111
    %s115 = sphi 0, %s114
    %s131 = sphi 0, %s115
    %s137 = sphi 0, %s139
    %s140 = sphi 0, %s137
    %s141 = sphi 0, %s140
    %s157 = sphi 0, %s141
  $region4: #{double_conv.3} parent=0 // loop_header_branch
    %15 = sbr.rel (%p13) target = $region8
  $region5: #{double_conv.3} parent=0 // loop_body
    %s17 = ssub.s32 %s12, 1
    %s18 = ssub.s32 %s12, 2
    %s19 = sadd.s32 %s12, 1
    %s20 = ssub.s32 %s12, %s19
    %p21 = scmp.eq.s32.totalorder %s20, 0
    %s23 = sadd.s32 %s22, 1
    %s24 = scalar_select %p21, %s22, %s23
    %p27 = pneg %p21
    %p28 = scmp.eq.s32.totalorder %s12, 1
    %p29 = por %p27, %p28
    %p30 = scmp.ne.s32.totalorder %s22, %s25
    %p31 = scmp.eq.s32.totalorder %s12, 0
    %p32 = por %p30, %p31
    %p33 = scmp.ne.s32.totalorder %s22, %s25
    %p34 = scmp.eq.s32.totalorder %s17, 1
    %p35 = por %p33, %p34
    %p36 = scmp.ne.s32.totalorder %s25, %s26
    %p37 = scmp.eq.s32.totalorder %s17, 0
    %p38 = por %p36, %p37
    %p39 = scmp.ne.s32.totalorder %s25, %s26
    %p40 = scmp.eq.s32.totalorder %s18, 1
    %p41 = por %p39, %p40
    %p43 = scmp.ne.s32.totalorder %s26, %s42
    %p44 = scmp.eq.s32.totalorder %s18, 0
    %p45 = por %p43, %p44
    %s47 = sadd.s32 %s46, 1
    %p50 = scmp.eq.s32.totalorder %s12, 1
    %p51 = scmp.ne.s32.totalorder %s46, %s48
    %p52 = scmp.eq.s32.totalorder %s12, 0
    %p53 = por %p51, %p52
    %p54 = scmp.ne.s32.totalorder %s46, %s48
    %p55 = scmp.eq.s32.totalorder %s17, 1
    %p56 = por %p54, %p55
    %p57 = scmp.ne.s32.totalorder %s48, %s49
    %p58 = scmp.eq.s32.totalorder %s17, 0
    %p59 = por %p57, %p58
    %p60 = scmp.ne.s32.totalorder %s48, %s49
    %p61 = scmp.eq.s32.totalorder %s18, 1
    %p62 = por %p60, %p61
    %p64 = scmp.ne.s32.totalorder %s49, %s63
    %p65 = scmp.eq.s32.totalorder %s18, 0
    %p66 = por %p64, %p65
    %s68 = sadd.s32 %s67, 1
    %p71 = scmp.eq.s32.totalorder %s12, 1
    %p72 = scmp.ne.s32.totalorder %s67, %s69
    %p73 = scmp.eq.s32.totalorder %s12, 0
    %p74 = por %p72, %p73
    %p75 = scmp.ne.s32.totalorder %s67, %s69
    %p76 = scmp.eq.s32.totalorder %s17, 1
    %p77 = por %p75, %p76
    %p78 = scmp.ne.s32.totalorder %s69, %s70
    %p79 = scmp.eq.s32.totalorder %s17, 0
    %p80 = por %p78, %p79
    %p81 = scmp.ne.s32.totalorder %s69, %s70
    %p82 = scmp.eq.s32.totalorder %s18, 1
    %p83 = por %p81, %p82
    %p85 = scmp.ne.s32.totalorder %s70, %s84
    %p86 = scmp.eq.s32.totalorder %s18, 0
    %p87 = por %p85, %p86
    %s89 = sadd.s32 %s88, 1
    %p92 = scmp.eq.s32.totalorder %s12, 1
    %p93 = scmp.ne.s32.totalorder %s88, %s90
    %p94 = scmp.eq.s32.totalorder %s12, 0
    %p95 = por %p93, %p94
    %p96 = scmp.ne.s32.totalorder %s88, %s90
    %p97 = scmp.eq.s32.totalorder %s17, 1
    %p98 = por %p96, %p97
    %p99 = scmp.ne.s32.totalorder %s90, %s91
    %p100 = scmp.eq.s32.totalorder %s17, 0
    %p101 = por %p99, %p100
    %p102 = scmp.ne.s32.totalorder %s90, %s91
    %p103 = scmp.eq.s32.totalorder %s18, 1
    %p104 = por %p102, %p103
    %p106 = scmp.ne.s32.totalorder %s91, %s105
    %p107 = scmp.eq.s32.totalorder %s18, 0
    %p108 = por %p106, %p107
    %s109 = ssub.s32 %s12, %s19
    %p110 = scmp.eq.s32.totalorder %s109, 0
    %s112 = sadd.s32 %s111, 1
    %s113 = scalar_select %p110, %s111, %s112
    %p116 = pneg %p110
    %p117 = scmp.eq.s32.totalorder %s12, 1
    %p118 = por %p116, %p117
    %p119 = scmp.ne.s32.totalorder %s111, %s114
    %p120 = scmp.eq.s32.totalorder %s12, 0
    %p121 = por %p119, %p120
    %p122 = scmp.ne.s32.totalorder %s111, %s114
    %p123 = scmp.eq.s32.totalorder %s17, 1
    %p124 = por %p122, %p123
    %p125 = scmp.ne.s32.totalorder %s114, %s115
    %p126 = scmp.eq.s32.totalorder %s17, 0
    %p127 = por %p125, %p126
    %p128 = scmp.ne.s32.totalorder %s114, %s115
    %p129 = scmp.eq.s32.totalorder %s18, 1
    %p130 = por %p128, %p129
    %p132 = scmp.ne.s32.totalorder %s115, %s131
    %p133 = scmp.eq.s32.totalorder %s18, 0
    %p134 = por %p132, %p133
    %s135 = ssub.s32 %s12, %s19
    %p136 = scmp.eq.s32.totalorder %s135, 0
    %s138 = sadd.s32 %s137, 1
    %s139 = scalar_select %p136, %s137, %s138
    %p142 = pneg %p136
    %p143 = scmp.eq.s32.totalorder %s12, 1
    %p144 = por %p142, %p143
    %p145 = scmp.ne.s32.totalorder %s137, %s140
    %p146 = scmp.eq.s32.totalorder %s12, 0
    %p147 = por %p145, %p146
    %p148 = scmp.ne.s32.totalorder %s137, %s140
    %p149 = scmp.eq.s32.totalorder %s17, 1
    %p150 = por %p148, %p149
    %p151 = scmp.ne.s32.totalorder %s140, %s141
    %p152 = scmp.eq.s32.totalorder %s17, 0
    %p153 = por %p151, %p152
    %p154 = scmp.ne.s32.totalorder %s140, %s141
    %p155 = scmp.eq.s32.totalorder %s18, 1
    %p156 = por %p154, %p155
    %p158 = scmp.ne.s32.totalorder %s141, %s157
    %p159 = scmp.eq.s32.totalorder %s18, 0
    %p160 = por %p158, %p159
    %p161 = scmp.le.s32.totalorder 1, %s12
    %p162 = scmp.lt.s32.totalorder %s12, 3
    %p163 = pnand %p161, %p162
    %p164 = pneg %p163
    // Predicated region
    $region9: #{double_conv.3} parent=5 // pred_check
      _
    $region10: #{double_conv.3} parent=5 // pred_check_branch
      %166 = sbr.rel (%p163) target = $region12
    $region11: #{double_conv.3} parent=5 // pred_region
      %s167 = ssub.s32 %s12, 1
      // Predicated region
      $region13: #{double_conv.3} parent=11 // pred_check
        %p168 = pneg %p59
      $region14: #{double_conv.3} parent=11 // pred_check_branch
        %170 = sbr.rel (%p168) target = $region16
      $region15: #{double_conv.3} parent=11 // pred_region
        _
      $region16: #{double_conv.3} parent=11 // pred_fallthru
        _
      // Predicated region
      $region17: #{double_conv.3} parent=11 // pred_check
        %p171 = pneg %p80
      $region18: #{double_conv.3} parent=11 // pred_check_branch
        %173 = sbr.rel (%p171) target = $region20
      $region19: #{double_conv.3} parent=11 // pred_region
        _
      $region20: #{double_conv.3} parent=11 // pred_fallthru
        _
      // Predicated region
      $region21: #{double_conv.3} parent=11 // pred_check
        %p174 = pneg %p101
      $region22: #{double_conv.3} parent=11 // pred_check_branch
        %176 = sbr.rel (%p174) target = $region24
      $region23: #{double_conv.3} parent=11 // pred_region
        _
      $region24: #{double_conv.3} parent=11 // pred_fallthru
        _
    $region12: #{double_conv.3} parent=5 // pred_fallthru
      _
    %p177 = scmp.lt.s32.totalorder %s12, 2
    // Predicated region
    $region25: #{double_conv.3} parent=5 // pred_check
      %p178 = pneg %p177
    $region26: #{double_conv.3} parent=5 // pred_check_branch
      %180 = sbr.rel (%p178) target = $region28
    $region27: #{double_conv.3} parent=5 // pred_region
      // Predicated region
      $region29: #{double_conv.3} parent=27 // pred_check
        %p181 = pneg %p32
      $region30: #{double_conv.3} parent=27 // pred_check_branch
        %183 = sbr.rel (%p181) target = $region32
      $region31: #{double_conv.3} parent=27 // pred_region
        %p184 = scmp.lt.s32.totalorder %s12, 1
        %s185 = scalar_select %p184, %s12, 1
        %s186 = smul.addr %s185, 2
        %s187 = smul.addr %s186, 4
        %s188 = scalar_lea.vmem %s0, %s187
      $region32: #{double_conv.3} parent=27 // pred_fallthru
        _
    $region28: #{double_conv.3} parent=5 // pred_fallthru
      _
    %p189 = scmp.le.s32.totalorder 1, %s12
    %p190 = scmp.lt.s32.totalorder %s12, 3
    %p191 = pnand %p189, %p190
    %p192 = pneg %p191
    // Predicated region
    $region33: #{double_conv.3} parent=5 // pred_check
      _
    $region34: #{double_conv.3} parent=5 // pred_check_branch
      %194 = sbr.rel (%p191) target = $region36
    $region35: #{double_conv.3} parent=5 // pred_region
      %s195 = ssub.s32 %s12, 1
      %p196 = scmp.lt.s32.totalorder %s17, 1
      %s197 = scalar_select %p196, %s17, 1
      %s198 = smul.addr %s197, 2
      %s199 = smul.addr %s198, 4
      %s200 = scalar_lea.vmem %s0, %s199
      %p201 = pneg %p38
      %p202 = pneg %p35
      %p203 = pneg %p59
      %p204 = pneg %p56
      %p205 = pneg %p80
      %p206 = pneg %p77
      %p207 = pneg %p101
      %p208 = pneg %p98
      %p209 = pneg %p127
      %p210 = pneg %p124
      %p211 = scmp.lt.s32.totalorder %s17, 1
      %s212 = scalar_select %p211, %s17, 1
      %s213 = smul.addr %s212, 2
      %s214 = smul.addr %s213, 8
      %s215 = scalar_lea.vmem %s4, %s214
      %p216 = pneg %p153
      %p217 = pneg %p150
      %p218 = scmp.lt.s32.totalorder %s17, 1
      %s219 = scalar_select %p218, %s17, 1
      %s220 = smul.addr %s219, 8
      %s221 = scalar_lea.vmem %s5, %s220
      %p222 = scmp.lt.s32.totalorder %s17, 1
      %s223 = scalar_select %p222, %s17, 1
      %s224 = smul.addr %s223, 2
      %s225 = smul.addr %s224, 4
      %s226 = scalar_lea.vmem %s0, %s225
      %p227 = scmp.lt.s32.totalorder %s17, 1
      %s228 = scalar_select %p227, %s17, 1
      %s229 = smul.addr %s228, 2
      %s230 = smul.addr %s229, 8
      %s231 = scalar_lea.vmem %s4, %s230
      %p232 = scmp.lt.s32.totalorder %s17, 1
      %s233 = scalar_select %p232, %s17, 1
      %s234 = smul.addr %s233, 8
      %s235 = scalar_lea.vmem %s5, %s234
      %v236 = vld [vmem:[%s226] sm:$0xff]
      %237 = vst [vmem:[#allocation2] sm:$0xf] 0.0
      %238 = vst [vmem:[#allocation2 + $0xc] sm:$0xf] 0.0
      %239 = vst [vmem:[#allocation2 + $0x4] sm:$0xff] %v236
      %v240 = vld [vmem:[#allocation2] sm:$0xff]
      %v241 = vld [vmem:[#allocation2 + $0x8] sm:$0xf]
      %v242 = vld [vmem:[%s1] ss:$4 sm:$0x3]
      %v244 = vlaneseq
      %v245 = vshrl.u32 %v244, 7
      %v246 = vsub.s32 0, %v245
      %v247 = vrot.slane %v242, %v246
      %v248 = vlaneseq
      %v249 = vshrl.u32 %v248, 7
      %v250 = vsub.s32 1, %v249
      %v251 = vrot.slane %v242, %v250
      %v252 = vcombine.low %v247, %v251
      %253 = vrot.lane.b32.xlu0 %v252, 111
      %v254 = vpop.permute.xlu0 %253
      %v255 = vrot.slane %v254, 4
      %vm256 = vcmask 908288
      %v257 = vsel %vm256, %v255, %v254
      %v260 = vmul.f32 %v240, %v257
      %v261 = vmul.f32 %v241, %v255
      %v262 = vld [vmem:[%s2] sm:$0xff]
      %s263 = scalar_lea.vmem %s2, 8
      %v264 = vld [vmem:[%s263] sm:$0xff]
      %v267 = vcombine.high %v240, %v240
      %268 = vrot.lane.b32.xlu0 %v240, 16
      %v269 = vpop.permute.xlu0 %268
      %270 = vrot.lane.b32.xlu0 %v267, 16
      %v271 = vpop.permute.xlu0 %270
      %272 = vrot.lane.b32.xlu0 %v241, 16
      %v273 = vpop.permute.xlu0 %272
      %vm274 = vcmask 130048
      %v275 = vsel %vm274, %v269, %v271
      %v276 = vsel %vm274, %v271, %v273
      %vm277 = vcmask 31744
      %v279 = vsel %vm277, %v264, 0
      %vm281 = vcmask 1043456
      %v282 = vsel %vm281, %v275, 0
      %v284 = vsel %vm281, %v276, 0
      %286 = vmatprep.subr.mxu0 0.0
      %287 = vmatpush1.msra.mxu0 0.0
      %288 = vmatprep.subr.mxu0 0.0
      %289 = vmatpush1.msra.mxu0 0.0
      %290 = vmatprep.subr.mxu0 0.0
      %291 = vmatpush1.msra.mxu0 0.0
      %292 = vmatprep.subr.mxu0 0.0
      %293 = vmatpush1.msra.mxu0 0.0
      %294 = vmatprep.subr.mxu0 0.0
      %295 = vmatpush1.msra.mxu0 0.0
      %296 = vmatprep.subr.mxu0 0.0
      %297 = vmatpush1.msra.mxu0 0.0
      %298 = vmatprep.subr.mxu0 0.0
      %299 = vmatpush1.msra.mxu0 0.0
      %300 = vmatprep.subr.mxu0 0.0
      %301 = vmatpush1.msra.mxu0 0.0
      %302 = vmatprep.subr.mxu0 0.0
      %303 = vmatpush1.msra.mxu0 0.0
      %304 = vmatprep.subr.mxu0 0.0
      %305 = vmatpush1.msra.mxu0 0.0
      %306 = vmatprep.subr.mxu0 0.0
      %307 = vmatpush1.msra.mxu0 0.0
      %308 = vmatprep.subr.mxu0 0.0
      %309 = vmatpush1.msra.mxu0 0.0
      %310 = vmatprep.subr.mxu0 0.0
      %311 = vmatpush1.msra.mxu0 0.0
      %312 = vmatprep.subr.mxu0 0.0
      %313 = vmatpush1.msra.mxu0 0.0
      %314 = vmatprep.subr.mxu0 0.0
      %315 = vmatpush1.msra.mxu0 0.0
      %316 = vmatprep.subr.mxu0 %v284
      %317 = vmatpush1.msra.mxu0 %v282
      %318 = vmatprep.subr.mxu0 0.0
      %319 = vmatpush2.msra.mxu0 0.0
      %320 = vmatprep.subr.mxu0 0.0
      %321 = vmatpush2.msra.mxu0 0.0
      %322 = vmatprep.subr.mxu0 0.0
      %323 = vmatpush2.msra.mxu0 0.0
      %324 = vmatprep.subr.mxu0 0.0
      %325 = vmatpush2.msra.mxu0 0.0
      %326 = vmatprep.subr.mxu0 0.0
      %327 = vmatpush2.msra.mxu0 0.0
      %328 = vmatprep.subr.mxu0 0.0
      %329 = vmatpush2.msra.mxu0 0.0
      %330 = vmatprep.subr.mxu0 0.0
      %331 = vmatpush2.msra.mxu0 0.0
      %332 = vmatprep.subr.mxu0 0.0
      %333 = vmatpush2.msra.mxu0 0.0
      %334 = vmatprep.subr.mxu0 0.0
      %335 = vmatpush2.msra.mxu0 0.0
      %336 = vmatprep.subr.mxu0 0.0
      %337 = vmatpush2.msra.mxu0 0.0
      %338 = vmatprep.subr.mxu0 0.0
      %339 = vmatpush2.msra.mxu0 0.0
      %340 = vmatprep.subr.mxu0 0.0
      %341 = vmatpush2.msra.mxu0 0.0
      %342 = vmatprep.subr.mxu0 0.0
      %343 = vmatpush2.msra.mxu0 0.0
      %344 = vmatprep.subr.mxu0 0.0
      %345 = vmatpush2.msra.mxu0 0.0
      %346 = vmatprep.subr.mxu0 0.0
      %347 = vmatpush2.msra.mxu0 0.0
      %348 = vmatprep.subr.mxu0 0.0
      %349 = vmatpush2.msra.mxu0 0.0
      %350 = vmatprep.mubr.f32.mxu0 0.0
      %351 = vmatmul.mubr.f32.gmra.mxu0 %v279
      %v352 = vpop.f32.mrf.mxu0
      %v353 = vadd.f32 0.0, %v352
      %v354 = vpop.f32.mrf.mxu0
      %v355 = vadd.f32 0.0, %v354
      %356 = vdwg.mxu0
      %v359 = vcombine.high %v260, %v260
      %360 = vrot.lane.b32.xlu0 %v260, 17
      %v361 = vpop.permute.xlu0 %360
      %362 = vrot.lane.b32.xlu0 %v359, 17
      %v363 = vpop.permute.xlu0 %362
      %364 = vrot.lane.b32.xlu0 %v261, 17
      %v365 = vpop.permute.xlu0 %364
      %vm366 = vcmask 138240
      %v367 = vsel %vm366, %v361, %v363
      %v368 = vsel %vm366, %v363, %v365
      %v370 = vsel %vm277, %v262, 0
      %v372 = vsel %vm281, %v367, 0
      %v374 = vsel %vm281, %v368, 0
      %376 = vmatprep.subr.mxu0 0.0
      %377 = vmatpush1.msra.mxu0 0.0
      %378 = vmatprep.subr.mxu0 0.0
      %379 = vmatpush1.msra.mxu0 0.0
      %380 = vmatprep.subr.mxu0 0.0
      %381 = vmatpush1.msra.mxu0 0.0
      %382 = vmatprep.subr.mxu0 0.0
      %383 = vmatpush1.msra.mxu0 0.0
      %384 = vmatprep.subr.mxu0 0.0
      %385 = vmatpush1.msra.mxu0 0.0
      %386 = vmatprep.subr.mxu0 0.0
      %387 = vmatpush1.msra.mxu0 0.0
      %388 = vmatprep.subr.mxu0 0.0
      %389 = vmatpush1.msra.mxu0 0.0
      %390 = vmatprep.subr.mxu0 0.0
      %391 = vmatpush1.msra.mxu0 0.0
      %392 = vmatprep.subr.mxu0 0.0
      %393 = vmatpush1.msra.mxu0 0.0
      %394 = vmatprep.subr.mxu0 0.0
      %395 = vmatpush1.msra.mxu0 0.0
      %396 = vmatprep.subr.mxu0 0.0
      %397 = vmatpush1.msra.mxu0 0.0
      %398 = vmatprep.subr.mxu0 0.0
      %399 = vmatpush1.msra.mxu0 0.0
      %400 = vmatprep.subr.mxu0 0.0
      %401 = vmatpush1.msra.mxu0 0.0
      %402 = vmatprep.subr.mxu0 0.0
      %403 = vmatpush1.msra.mxu0 0.0
      %404 = vmatprep.subr.mxu0 0.0
      %405 = vmatpush1.msra.mxu0 0.0
      %406 = vmatprep.subr.mxu0 %v374
      %407 = vmatpush1.msra.mxu0 %v372
      %408 = vmatprep.subr.mxu0 0.0
      %409 = vmatpush2.msra.mxu0 0.0
      %410 = vmatprep.subr.mxu0 0.0
      %411 = vmatpush2.msra.mxu0 0.0
      %412 = vmatprep.subr.mxu0 0.0
      %413 = vmatpush2.msra.mxu0 0.0
      %414 = vmatprep.subr.mxu0 0.0
      %415 = vmatpush2.msra.mxu0 0.0
      %416 = vmatprep.subr.mxu0 0.0
      %417 = vmatpush2.msra.mxu0 0.0
      %418 = vmatprep.subr.mxu0 0.0
      %419 = vmatpush2.msra.mxu0 0.0
      %420 = vmatprep.subr.mxu0 0.0
      %421 = vmatpush2.msra.mxu0 0.0
      %422 = vmatprep.subr.mxu0 0.0
      %423 = vmatpush2.msra.mxu0 0.0
      %424 = vmatprep.subr.mxu0 0.0
      %425 = vmatpush2.msra.mxu0 0.0
      %426 = vmatprep.subr.mxu0 0.0
      %427 = vmatpush2.msra.mxu0 0.0
      %428 = vmatprep.subr.mxu0 0.0
      %429 = vmatpush2.msra.mxu0 0.0
      %430 = vmatprep.subr.mxu0 0.0
      %431 = vmatpush2.msra.mxu0 0.0
      %432 = vmatprep.subr.mxu0 0.0
      %433 = vmatpush2.msra.mxu0 0.0
      %434 = vmatprep.subr.mxu0 0.0
      %435 = vmatpush2.msra.mxu0 0.0
      %436 = vmatprep.subr.mxu0 0.0
      %437 = vmatpush2.msra.mxu0 0.0
      %438 = vmatprep.subr.mxu0 0.0
      %439 = vmatpush2.msra.mxu0 0.0
      %440 = vmatprep.mubr.f32.mxu0 0.0
      %441 = vmatmul.mubr.f32.gmra.mxu0 %v370
      %v442 = vpop.f32.mrf.mxu0
      %v443 = vadd.f32 %v353, %v442
      %v444 = vpop.f32.mrf.mxu0
      %v445 = vadd.f32 %v355, %v444
      %446 = vdwg.mxu0
      %v447 = vld [vmem:[#allocation2] sm:$0xff]
      %v448 = vld [vmem:[#allocation2 + $0x8] sm:$0xf]
      %s449 = scalar_lea.vmem %s1, 2
      %v450 = vld [vmem:[%s449] ss:$4 sm:$0x3]
      %v452 = vlaneseq
      %v453 = vshrl.u32 %v452, 7
      %v454 = vsub.s32 0, %v453
      %v455 = vrot.slane %v450, %v454
      %v456 = vlaneseq
      %v457 = vshrl.u32 %v456, 7
      %v458 = vsub.s32 1, %v457
      %v459 = vrot.slane %v450, %v458
      %v460 = vcombine.low %v455, %v459
      %461 = vrot.lane.b32.xlu0 %v460, 113
      %v462 = vpop.permute.xlu0 %461
      %v463 = vrot.slane %v462, 4
      %vm464 = vcmask 924672
      %v465 = vsel %vm464, %v463, %v462
      %v468 = vmul.f32 %v447, %v465
      %v469 = vmul.f32 %v448, %v463
      %s470 = scalar_lea.vmem %s2, 16
      %v471 = vld [vmem:[%s470] sm:$0xff]
      %v474 = vcombine.high %v468, %v468
      %475 = vrot.lane.b32.xlu0 %v468, 15
      %v476 = vpop.permute.xlu0 %475
      %477 = vrot.lane.b32.xlu0 %v474, 15
      %v478 = vpop.permute.xlu0 %477
      %479 = vrot.lane.b32.xlu0 %v469, 15
      %v480 = vpop.permute.xlu0 %479
      %vm481 = vcmask 121856
      %v482 = vsel %vm481, %v476, %v478
      %v483 = vsel %vm481, %v478, %v480
      %v485 = vsel %vm277, %v471, 0
      %v487 = vsel %vm281, %v482, 0
      %v489 = vsel %vm281, %v483, 0
      %491 = vmatprep.subr.mxu0 0.0
      %492 = vmatpush1.msra.mxu0 0.0
      %493 = vmatprep.subr.mxu0 0.0
      %494 = vmatpush1.msra.mxu0 0.0
      %495 = vmatprep.subr.mxu0 0.0
      %496 = vmatpush1.msra.mxu0 0.0
      %497 = vmatprep.subr.mxu0 0.0
      %498 = vmatpush1.msra.mxu0 0.0
      %499 = vmatprep.subr.mxu0 0.0
      %500 = vmatpush1.msra.mxu0 0.0
      %501 = vmatprep.subr.mxu0 0.0
      %502 = vmatpush1.msra.mxu0 0.0
      %503 = vmatprep.subr.mxu0 0.0
      %504 = vmatpush1.msra.mxu0 0.0
      %505 = vmatprep.subr.mxu0 0.0
      %506 = vmatpush1.msra.mxu0 0.0
      %507 = vmatprep.subr.mxu0 0.0
      %508 = vmatpush1.msra.mxu0 0.0
      %509 = vmatprep.subr.mxu0 0.0
      %510 = vmatpush1.msra.mxu0 0.0
      %511 = vmatprep.subr.mxu0 0.0
      %512 = vmatpush1.msra.mxu0 0.0
      %513 = vmatprep.subr.mxu0 0.0
      %514 = vmatpush1.msra.mxu0 0.0
      %515 = vmatprep.subr.mxu0 0.0
      %516 = vmatpush1.msra.mxu0 0.0
      %517 = vmatprep.subr.mxu0 0.0
      %518 = vmatpush1.msra.mxu0 0.0
      %519 = vmatprep.subr.mxu0 0.0
      %520 = vmatpush1.msra.mxu0 0.0
      %521 = vmatprep.subr.mxu0 %v489
      %522 = vmatpush1.msra.mxu0 %v487
      %523 = vmatprep.subr.mxu0 0.0
      %524 = vmatpush2.msra.mxu0 0.0
      %525 = vmatprep.subr.mxu0 0.0
      %526 = vmatpush2.msra.mxu0 0.0
      %527 = vmatprep.subr.mxu0 0.0
      %528 = vmatpush2.msra.mxu0 0.0
      %529 = vmatprep.subr.mxu0 0.0
      %530 = vmatpush2.msra.mxu0 0.0
      %531 = vmatprep.subr.mxu0 0.0
      %532 = vmatpush2.msra.mxu0 0.0
      %533 = vmatprep.subr.mxu0 0.0
      %534 = vmatpush2.msra.mxu0 0.0
      %535 = vmatprep.subr.mxu0 0.0
      %536 = vmatpush2.msra.mxu0 0.0
      %537 = vmatprep.subr.mxu0 0.0
      %538 = vmatpush2.msra.mxu0 0.0
      %539 = vmatprep.subr.mxu0 0.0
      %540 = vmatpush2.msra.mxu0 0.0
      %541 = vmatprep.subr.mxu0 0.0
      %542 = vmatpush2.msra.mxu0 0.0
      %543 = vmatprep.subr.mxu0 0.0
      %544 = vmatpush2.msra.mxu0 0.0
      %545 = vmatprep.subr.mxu0 0.0
      %546 = vmatpush2.msra.mxu0 0.0
      %547 = vmatprep.subr.mxu0 0.0
      %548 = vmatpush2.msra.mxu0 0.0
      %549 = vmatprep.subr.mxu0 0.0
      %550 = vmatpush2.msra.mxu0 0.0
      %551 = vmatprep.subr.mxu0 0.0
      %552 = vmatpush2.msra.mxu0 0.0
      %553 = vmatprep.subr.mxu0 0.0
      %554 = vmatpush2.msra.mxu0 0.0
      %555 = vmatprep.mubr.f32.mxu0 0.0
      %556 = vmatmul.mubr.f32.gmra.mxu0 %v485
      %v557 = vpop.f32.mrf.mxu0
      %v558 = vadd.f32 0.0, %v557
      %v559 = vpop.f32.mrf.mxu0
      %v560 = vadd.f32 0.0, %v559
      %561 = vdwg.mxu0
      %v562 = vadd.f32 %v443, %v558
      %v563 = vadd.f32 %v445, %v560
      %v564 = vld [vmem:[#allocation2] sm:$0xff]
      %v565 = vld [vmem:[#allocation2 + $0x8] sm:$0xf]
      %566 = vrot.lane.b32.xlu0 %v252, 127
      %v567 = vpop.permute.xlu0 %566
      %v568 = vrot.slane %v567, 4
      %vm569 = vcmask 1039360
      %v570 = vsel %vm569, %v568, %v567
      %v573 = vmul.f32 %v564, %v570
      %v574 = vmul.f32 %v565, %v568
      %s575 = scalar_lea.vmem %s2, 24
      %v576 = vld [vmem:[%s575] sm:$0xff]
      %v579 = vcombine.high %v573, %v573
      %580 = vrot.lane.b32.xlu0 %v573, 1
      %v581 = vpop.permute.xlu0 %580
      %582 = vrot.lane.b32.xlu0 %v579, 1
      %v583 = vpop.permute.xlu0 %582
      %584 = vrot.lane.b32.xlu0 %v574, 1
      %v585 = vpop.permute.xlu0 %584
      %vm586 = vcmask 7168
      %v587 = vsel %vm586, %v581, %v583
      %v588 = vsel %vm586, %v583, %v585
      %v590 = vsel %vm277, %v576, 0
      %v592 = vsel %vm281, %v587, 0
      %v594 = vsel %vm281, %v588, 0
      %596 = vmatprep.subr.mxu0 0.0
      %597 = vmatpush1.msra.mxu0 0.0
      %598 = vmatprep.subr.mxu0 0.0
      %599 = vmatpush1.msra.mxu0 0.0
      %600 = vmatprep.subr.mxu0 0.0
      %601 = vmatpush1.msra.mxu0 0.0
      %602 = vmatprep.subr.mxu0 0.0
      %603 = vmatpush1.msra.mxu0 0.0
      %604 = vmatprep.subr.mxu0 0.0
      %605 = vmatpush1.msra.mxu0 0.0
      %606 = vmatprep.subr.mxu0 0.0
      %607 = vmatpush1.msra.mxu0 0.0
      %608 = vmatprep.subr.mxu0 0.0
      %609 = vmatpush1.msra.mxu0 0.0
      %610 = vmatprep.subr.mxu0 0.0
      %611 = vmatpush1.msra.mxu0 0.0
      %612 = vmatprep.subr.mxu0 0.0
      %613 = vmatpush1.msra.mxu0 0.0
      %614 = vmatprep.subr.mxu0 0.0
      %615 = vmatpush1.msra.mxu0 0.0
      %616 = vmatprep.subr.mxu0 0.0
      %617 = vmatpush1.msra.mxu0 0.0
      %618 = vmatprep.subr.mxu0 0.0
      %619 = vmatpush1.msra.mxu0 0.0
      %620 = vmatprep.subr.mxu0 0.0
      %621 = vmatpush1.msra.mxu0 0.0
      %622 = vmatprep.subr.mxu0 0.0
      %623 = vmatpush1.msra.mxu0 0.0
      %624 = vmatprep.subr.mxu0 0.0
      %625 = vmatpush1.msra.mxu0 0.0
      %626 = vmatprep.subr.mxu0 %v594
      %627 = vmatpush1.msra.mxu0 %v592
      %628 = vmatprep.subr.mxu0 0.0
      %629 = vmatpush2.msra.mxu0 0.0
      %630 = vmatprep.subr.mxu0 0.0
      %631 = vmatpush2.msra.mxu0 0.0
      %632 = vmatprep.subr.mxu0 0.0
      %633 = vmatpush2.msra.mxu0 0.0
      %634 = vmatprep.subr.mxu0 0.0
      %635 = vmatpush2.msra.mxu0 0.0
      %636 = vmatprep.subr.mxu0 0.0
      %637 = vmatpush2.msra.mxu0 0.0
      %638 = vmatprep.subr.mxu0 0.0
      %639 = vmatpush2.msra.mxu0 0.0
      %640 = vmatprep.subr.mxu0 0.0
      %641 = vmatpush2.msra.mxu0 0.0
      %642 = vmatprep.subr.mxu0 0.0
      %643 = vmatpush2.msra.mxu0 0.0
      %644 = vmatprep.subr.mxu0 0.0
      %645 = vmatpush2.msra.mxu0 0.0
      %646 = vmatprep.subr.mxu0 0.0
      %647 = vmatpush2.msra.mxu0 0.0
      %648 = vmatprep.subr.mxu0 0.0
      %649 = vmatpush2.msra.mxu0 0.0
      %650 = vmatprep.subr.mxu0 0.0
      %651 = vmatpush2.msra.mxu0 0.0
      %652 = vmatprep.subr.mxu0 0.0
      %653 = vmatpush2.msra.mxu0 0.0
      %654 = vmatprep.subr.mxu0 0.0
      %655 = vmatpush2.msra.mxu0 0.0
      %656 = vmatprep.subr.mxu0 0.0
      %657 = vmatpush2.msra.mxu0 0.0
      %658 = vmatprep.subr.mxu0 0.0
      %659 = vmatpush2.msra.mxu0 0.0
      %660 = vmatprep.mubr.f32.mxu0 0.0
      %661 = vmatmul.mubr.f32.gmra.mxu0 %v590
      %v662 = vpop.f32.mrf.mxu0
      %v663 = vadd.f32 0.0, %v662
      %v664 = vpop.f32.mrf.mxu0
      %v665 = vadd.f32 0.0, %v664
      %666 = vdwg.mxu0
      %v667 = vadd.f32 %v562, %v663
      %v668 = vadd.f32 %v563, %v665
      %v669 = vld [vmem:[#allocation2 + $0x4] sm:$0xff]
      %s670 = scalar_lea.vmem %s2, 32
      %v671 = vld [vmem:[%s670] sm:$0xff]
      %v673 = vcombine.high %v669, %v669
      %v675 = vsel %vm277, %v671, 0
      %v677 = vsel %vm281, %v669, 0
      %v679 = vsel %vm281, %v673, 0
      %681 = vmatprep.subr.mxu0 0.0
      %682 = vmatpush1.msra.mxu0 0.0
      %683 = vmatprep.subr.mxu0 0.0
      %684 = vmatpush1.msra.mxu0 0.0
      %685 = vmatprep.subr.mxu0 0.0
      %686 = vmatpush1.msra.mxu0 0.0
      %687 = vmatprep.subr.mxu0 0.0
      %688 = vmatpush1.msra.mxu0 0.0
      %689 = vmatprep.subr.mxu0 0.0
      %690 = vmatpush1.msra.mxu0 0.0
      %691 = vmatprep.subr.mxu0 0.0
      %692 = vmatpush1.msra.mxu0 0.0
      %693 = vmatprep.subr.mxu0 0.0
      %694 = vmatpush1.msra.mxu0 0.0
      %695 = vmatprep.subr.mxu0 0.0
      %696 = vmatpush1.msra.mxu0 0.0
      %697 = vmatprep.subr.mxu0 0.0
      %698 = vmatpush1.msra.mxu0 0.0
      %699 = vmatprep.subr.mxu0 0.0
      %700 = vmatpush1.msra.mxu0 0.0
      %701 = vmatprep.subr.mxu0 0.0
      %702 = vmatpush1.msra.mxu0 0.0
      %703 = vmatprep.subr.mxu0 0.0
      %704 = vmatpush1.msra.mxu0 0.0
      %705 = vmatprep.subr.mxu0 0.0
      %706 = vmatpush1.msra.mxu0 0.0
      %707 = vmatprep.subr.mxu0 0.0
      %708 = vmatpush1.msra.mxu0 0.0
      %709 = vmatprep.subr.mxu0 0.0
      %710 = vmatpush1.msra.mxu0 0.0
      %711 = vmatprep.subr.mxu0 %v679
      %712 = vmatpush1.msra.mxu0 %v677
      %713 = vmatprep.subr.mxu0 0.0
      %714 = vmatpush2.msra.mxu0 0.0
      %715 = vmatprep.subr.mxu0 0.0
      %716 = vmatpush2.msra.mxu0 0.0
      %717 = vmatprep.subr.mxu0 0.0
      %718 = vmatpush2.msra.mxu0 0.0
      %719 = vmatprep.subr.mxu0 0.0
      %720 = vmatpush2.msra.mxu0 0.0
      %721 = vmatprep.subr.mxu0 0.0
      %722 = vmatpush2.msra.mxu0 0.0
      %723 = vmatprep.subr.mxu0 0.0
      %724 = vmatpush2.msra.mxu0 0.0
      %725 = vmatprep.subr.mxu0 0.0
      %726 = vmatpush2.msra.mxu0 0.0
      %727 = vmatprep.subr.mxu0 0.0
      %728 = vmatpush2.msra.mxu0 0.0
      %729 = vmatprep.subr.mxu0 0.0
      %730 = vmatpush2.msra.mxu0 0.0
      %731 = vmatprep.subr.mxu0 0.0
      %732 = vmatpush2.msra.mxu0 0.0
      %733 = vmatprep.subr.mxu0 0.0
      %734 = vmatpush2.msra.mxu0 0.0
      %735 = vmatprep.subr.mxu0 0.0
      %736 = vmatpush2.msra.mxu0 0.0
      %737 = vmatprep.subr.mxu0 0.0
      %738 = vmatpush2.msra.mxu0 0.0
      %739 = vmatprep.subr.mxu0 0.0
      %740 = vmatpush2.msra.mxu0 0.0
      %741 = vmatprep.subr.mxu0 0.0
      %742 = vmatpush2.msra.mxu0 0.0
      %743 = vmatprep.subr.mxu0 0.0
      %744 = vmatpush2.msra.mxu0 0.0
      %745 = vmatprep.mubr.f32.mxu0 0.0
      %746 = vmatmul.mubr.f32.gmra.mxu0 %v675
      %v747 = vpop.f32.mrf.mxu0
      %v748 = vadd.f32 0.0, %v747
      %v749 = vpop.f32.mrf.mxu0
      %v750 = vadd.f32 0.0, %v749
      %751 = vdwg.mxu0
      %v752 = vadd.f32 %v667, %v748
      %v753 = vadd.f32 %v668, %v750
      %v754 = vld [vmem:[#allocation2 + $0x4] sm:$0xff]
      %v755 = vld [vmem:[#allocation2 + $0xc] sm:$0xf]
      %756 = vrot.lane.b32.xlu0 %v460, 1
      %v757 = vpop.permute.xlu0 %756
      %v758 = vrot.slane %v757, 4
      %v759 = vsel %vm586, %v758, %v757
      %v762 = vmul.f32 %v754, %v759
      %v763 = vmul.f32 %v755, %v758
      %s764 = scalar_lea.vmem %s2, 40
      %v765 = vld [vmem:[%s764] sm:$0xff]
      %v768 = vcombine.high %v762, %v762
      %769 = vrot.lane.b32.xlu0 %v762, 127
      %v770 = vpop.permute.xlu0 %769
      %771 = vrot.lane.b32.xlu0 %v768, 127
      %v772 = vpop.permute.xlu0 %771
      %773 = vrot.lane.b32.xlu0 %v763, 127
      %v774 = vpop.permute.xlu0 %773
      %v775 = vsel %vm569, %v770, %v772
      %v776 = vsel %vm569, %v772, %v774
      %v778 = vsel %vm277, %v765, 0
      %v780 = vsel %vm281, %v775, 0
      %v782 = vsel %vm281, %v776, 0
      %784 = vmatprep.subr.mxu0 0.0
      %785 = vmatpush1.msra.mxu0 0.0
      %786 = vmatprep.subr.mxu0 0.0
      %787 = vmatpush1.msra.mxu0 0.0
      %788 = vmatprep.subr.mxu0 0.0
      %789 = vmatpush1.msra.mxu0 0.0
      %790 = vmatprep.subr.mxu0 0.0
      %791 = vmatpush1.msra.mxu0 0.0
      %792 = vmatprep.subr.mxu0 0.0
      %793 = vmatpush1.msra.mxu0 0.0
      %794 = vmatprep.subr.mxu0 0.0
      %795 = vmatpush1.msra.mxu0 0.0
      %796 = vmatprep.subr.mxu0 0.0
      %797 = vmatpush1.msra.mxu0 0.0
      %798 = vmatprep.subr.mxu0 0.0
      %799 = vmatpush1.msra.mxu0 0.0
      %800 = vmatprep.subr.mxu0 0.0
      %801 = vmatpush1.msra.mxu0 0.0
      %802 = vmatprep.subr.mxu0 0.0
      %803 = vmatpush1.msra.mxu0 0.0
      %804 = vmatprep.subr.mxu0 0.0
      %805 = vmatpush1.msra.mxu0 0.0
      %806 = vmatprep.subr.mxu0 0.0
      %807 = vmatpush1.msra.mxu0 0.0
      %808 = vmatprep.subr.mxu0 0.0
      %809 = vmatpush1.msra.mxu0 0.0
      %810 = vmatprep.subr.mxu0 0.0
      %811 = vmatpush1.msra.mxu0 0.0
      %812 = vmatprep.subr.mxu0 0.0
      %813 = vmatpush1.msra.mxu0 0.0
      %814 = vmatprep.subr.mxu0 %v782
      %815 = vmatpush1.msra.mxu0 %v780
      %816 = vmatprep.subr.mxu0 0.0
      %817 = vmatpush2.msra.mxu0 0.0
      %818 = vmatprep.subr.mxu0 0.0
      %819 = vmatpush2.msra.mxu0 0.0
      %820 = vmatprep.subr.mxu0 0.0
      %821 = vmatpush2.msra.mxu0 0.0
      %822 = vmatprep.subr.mxu0 0.0
      %823 = vmatpush2.msra.mxu0 0.0
      %824 = vmatprep.subr.mxu0 0.0
      %825 = vmatpush2.msra.mxu0 0.0
      %826 = vmatprep.subr.mxu0 0.0
      %827 = vmatpush2.msra.mxu0 0.0
      %828 = vmatprep.subr.mxu0 0.0
      %829 = vmatpush2.msra.mxu0 0.0
      %830 = vmatprep.subr.mxu0 0.0
      %831 = vmatpush2.msra.mxu0 0.0
      %832 = vmatprep.subr.mxu0 0.0
      %833 = vmatpush2.msra.mxu0 0.0
      %834 = vmatprep.subr.mxu0 0.0
      %835 = vmatpush2.msra.mxu0 0.0
      %836 = vmatprep.subr.mxu0 0.0
      %837 = vmatpush2.msra.mxu0 0.0
      %838 = vmatprep.subr.mxu0 0.0
      %839 = vmatpush2.msra.mxu0 0.0
      %840 = vmatprep.subr.mxu0 0.0
      %841 = vmatpush2.msra.mxu0 0.0
      %842 = vmatprep.subr.mxu0 0.0
      %843 = vmatpush2.msra.mxu0 0.0
      %844 = vmatprep.subr.mxu0 0.0
      %845 = vmatpush2.msra.mxu0 0.0
      %846 = vmatprep.subr.mxu0 0.0
      %847 = vmatpush2.msra.mxu0 0.0
      %848 = vmatprep.mubr.f32.mxu0 0.0
      %849 = vmatmul.mubr.f32.gmra.mxu0 %v778
      %v850 = vpop.f32.mrf.mxu0
      %v851 = vadd.f32 0.0, %v850
      %v852 = vpop.f32.mrf.mxu0
      %v853 = vadd.f32 0.0, %v852
      %854 = vdwg.mxu0
      %v855 = vadd.f32 %v752, %v851
      %v856 = vadd.f32 %v753, %v853
      %v857 = vld [vmem:[#allocation2 + $0x4] sm:$0xff]
      %v858 = vld [vmem:[#allocation2 + $0xc] sm:$0xf]
      %859 = vrot.lane.b32.xlu0 %v252, 15
      %v860 = vpop.permute.xlu0 %859
      %v861 = vrot.slane %v860, 4
      %v862 = vsel %vm481, %v861, %v860
      %v865 = vmul.f32 %v857, %v862
      %v866 = vmul.f32 %v858, %v861
      %s867 = scalar_lea.vmem %s2, 48
      %v868 = vld [vmem:[%s867] sm:$0xff]
      %v871 = vcombine.high %v865, %v865
      %872 = vrot.lane.b32.xlu0 %v865, 113
      %v873 = vpop.permute.xlu0 %872
      %874 = vrot.lane.b32.xlu0 %v871, 113
      %v875 = vpop.permute.xlu0 %874
      %876 = vrot.lane.b32.xlu0 %v866, 113
      %v877 = vpop.permute.xlu0 %876
      %v878 = vsel %vm464, %v873, %v875
      %v879 = vsel %vm464, %v875, %v877
      %v881 = vsel %vm277, %v868, 0
      %v883 = vsel %vm281, %v878, 0
      %v885 = vsel %vm281, %v879, 0
      %887 = vmatprep.subr.mxu0 0.0
      %888 = vmatpush1.msra.mxu0 0.0
      %889 = vmatprep.subr.mxu0 0.0
      %890 = vmatpush1.msra.mxu0 0.0
      %891 = vmatprep.subr.mxu0 0.0
      %892 = vmatpush1.msra.mxu0 0.0
      %893 = vmatprep.subr.mxu0 0.0
      %894 = vmatpush1.msra.mxu0 0.0
      %895 = vmatprep.subr.mxu0 0.0
      %896 = vmatpush1.msra.mxu0 0.0
      %897 = vmatprep.subr.mxu0 0.0
      %898 = vmatpush1.msra.mxu0 0.0
      %899 = vmatprep.subr.mxu0 0.0
      %900 = vmatpush1.msra.mxu0 0.0
      %901 = vmatprep.subr.mxu0 0.0
      %902 = vmatpush1.msra.mxu0 0.0
      %903 = vmatprep.subr.mxu0 0.0
      %904 = vmatpush1.msra.mxu0 0.0
      %905 = vmatprep.subr.mxu0 0.0
      %906 = vmatpush1.msra.mxu0 0.0
      %907 = vmatprep.subr.mxu0 0.0
      %908 = vmatpush1.msra.mxu0 0.0
      %909 = vmatprep.subr.mxu0 0.0
      %910 = vmatpush1.msra.mxu0 0.0
      %911 = vmatprep.subr.mxu0 0.0
      %912 = vmatpush1.msra.mxu0 0.0
      %913 = vmatprep.subr.mxu0 0.0
      %914 = vmatpush1.msra.mxu0 0.0
      %915 = vmatprep.subr.mxu0 0.0
      %916 = vmatpush1.msra.mxu0 0.0
      %917 = vmatprep.subr.mxu0 %v885
      %918 = vmatpush1.msra.mxu0 %v883
      %919 = vmatprep.subr.mxu0 0.0
      %920 = vmatpush2.msra.mxu0 0.0
      %921 = vmatprep.subr.mxu0 0.0
      %922 = vmatpush2.msra.mxu0 0.0
      %923 = vmatprep.subr.mxu0 0.0
      %924 = vmatpush2.msra.mxu0 0.0
      %925 = vmatprep.subr.mxu0 0.0
      %926 = vmatpush2.msra.mxu0 0.0
      %927 = vmatprep.subr.mxu0 0.0
      %928 = vmatpush2.msra.mxu0 0.0
      %929 = vmatprep.subr.mxu0 0.0
      %930 = vmatpush2.msra.mxu0 0.0
      %931 = vmatprep.subr.mxu0 0.0
      %932 = vmatpush2.msra.mxu0 0.0
      %933 = vmatprep.subr.mxu0 0.0
      %934 = vmatpush2.msra.mxu0 0.0
      %935 = vmatprep.subr.mxu0 0.0
      %936 = vmatpush2.msra.mxu0 0.0
      %937 = vmatprep.subr.mxu0 0.0
      %938 = vmatpush2.msra.mxu0 0.0
      %939 = vmatprep.subr.mxu0 0.0
      %940 = vmatpush2.msra.mxu0 0.0
      %941 = vmatprep.subr.mxu0 0.0
      %942 = vmatpush2.msra.mxu0 0.0
      %943 = vmatprep.subr.mxu0 0.0
      %944 = vmatpush2.msra.mxu0 0.0
      %945 = vmatprep.subr.mxu0 0.0
      %946 = vmatpush2.msra.mxu0 0.0
      %947 = vmatprep.subr.mxu0 0.0
      %948 = vmatpush2.msra.mxu0 0.0
      %949 = vmatprep.subr.mxu0 0.0
      %950 = vmatpush2.msra.mxu0 0.0
      %951 = vmatprep.mubr.f32.mxu0 0.0
      %952 = vmatmul.mubr.f32.gmra.mxu0 %v881
      %v953 = vpop.f32.mrf.mxu0
      %v954 = vadd.f32 0.0, %v953
      %v955 = vpop.f32.mrf.mxu0
      %v956 = vadd.f32 0.0, %v955
      %957 = vdwg.mxu0
      %v958 = vadd.f32 %v855, %v954
      %v959 = vadd.f32 %v856, %v956
      %v960 = vld [vmem:[#allocation2 + $0x4] sm:$0xff]
      %v961 = vld [vmem:[#allocation2 + $0xc] sm:$0xf]
      %s962 = scalar_lea.vmem %s2, 56
      %v963 = vld [vmem:[%s962] sm:$0xff]
      %v966 = vcombine.high %v960, %v960
      %967 = vrot.lane.b32.xlu0 %v960, 112
      %v968 = vpop.permute.xlu0 %967
      %969 = vrot.lane.b32.xlu0 %v966, 112
      %v970 = vpop.permute.xlu0 %969
      %971 = vrot.lane.b32.xlu0 %v961, 112
      %v972 = vpop.permute.xlu0 %971
      %vm973 = vcmask 916480
      %v974 = vsel %vm973, %v968, %v970
      %v975 = vsel %vm973, %v970, %v972
      %v977 = vsel %vm277, %v963, 0
      %v979 = vsel %vm281, %v974, 0
      %v981 = vsel %vm281, %v975, 0
      %983 = vmatprep.subr.mxu0 0.0
      %984 = vmatpush1.msra.mxu0 0.0
      %985 = vmatprep.subr.mxu0 0.0
      %986 = vmatpush1.msra.mxu0 0.0
      %987 = vmatprep.subr.mxu0 0.0
      %988 = vmatpush1.msra.mxu0 0.0
      %989 = vmatprep.subr.mxu0 0.0
      %990 = vmatpush1.msra.mxu0 0.0
      %991 = vmatprep.subr.mxu0 0.0
      %992 = vmatpush1.msra.mxu0 0.0
      %993 = vmatprep.subr.mxu0 0.0
      %994 = vmatpush1.msra.mxu0 0.0
      %995 = vmatprep.subr.mxu0 0.0
      %996 = vmatpush1.msra.mxu0 0.0
      %997 = vmatprep.subr.mxu0 0.0
      %998 = vmatpush1.msra.mxu0 0.0
      %999 = vmatprep.subr.mxu0 0.0
      %1000 = vmatpush1.msra.mxu0 0.0
      %1001 = vmatprep.subr.mxu0 0.0
      %1002 = vmatpush1.msra.mxu0 0.0
      %1003 = vmatprep.subr.mxu0 0.0
      %1004 = vmatpush1.msra.mxu0 0.0
      %1005 = vmatprep.subr.mxu0 0.0
      %1006 = vmatpush1.msra.mxu0 0.0
      %1007 = vmatprep.subr.mxu0 0.0
      %1008 = vmatpush1.msra.mxu0 0.0
      %1009 = vmatprep.subr.mxu0 0.0
      %1010 = vmatpush1.msra.mxu0 0.0
      %1011 = vmatprep.subr.mxu0 0.0
      %1012 = vmatpush1.msra.mxu0 0.0
      %1013 = vmatprep.subr.mxu0 %v981
      %1014 = vmatpush1.msra.mxu0 %v979
      %1015 = vmatprep.subr.mxu0 0.0
      %1016 = vmatpush2.msra.mxu0 0.0
      %1017 = vmatprep.subr.mxu0 0.0
      %1018 = vmatpush2.msra.mxu0 0.0
      %1019 = vmatprep.subr.mxu0 0.0
      %1020 = vmatpush2.msra.mxu0 0.0
      %1021 = vmatprep.subr.mxu0 0.0
      %1022 = vmatpush2.msra.mxu0 0.0
      %1023 = vmatprep.subr.mxu0 0.0
      %1024 = vmatpush2.msra.mxu0 0.0
      %1025 = vmatprep.subr.mxu0 0.0
      %1026 = vmatpush2.msra.mxu0 0.0
      %1027 = vmatprep.subr.mxu0 0.0
      %1028 = vmatpush2.msra.mxu0 0.0
      %1029 = vmatprep.subr.mxu0 0.0
      %1030 = vmatpush2.msra.mxu0 0.0
      %1031 = vmatprep.subr.mxu0 0.0
      %1032 = vmatpush2.msra.mxu0 0.0
      %1033 = vmatprep.subr.mxu0 0.0
      %1034 = vmatpush2.msra.mxu0 0.0
      %1035 = vmatprep.subr.mxu0 0.0
      %1036 = vmatpush2.msra.mxu0 0.0
      %1037 = vmatprep.subr.mxu0 0.0
      %1038 = vmatpush2.msra.mxu0 0.0
      %1039 = vmatprep.subr.mxu0 0.0
      %1040 = vmatpush2.msra.mxu0 0.0
      %1041 = vmatprep.subr.mxu0 0.0
      %1042 = vmatpush2.msra.mxu0 0.0
      %1043 = vmatprep.subr.mxu0 0.0
      %1044 = vmatpush2.msra.mxu0 0.0
      %1045 = vmatprep.subr.mxu0 0.0
      %1046 = vmatpush2.msra.mxu0 0.0
      %1047 = vmatprep.mubr.f32.mxu0 0.0
      %1048 = vmatmul.mubr.f32.gmra.mxu0 %v977
      %v1049 = vpop.f32.mrf.mxu0
      %v1050 = vadd.f32 0.0, %v1049
      %v1051 = vpop.f32.mrf.mxu0
      %v1052 = vadd.f32 0.0, %v1051
      %1053 = vdwg.mxu0
      %v1054 = vadd.f32 %v958, %v1050
      %v1055 = vadd.f32 %v959, %v1052
      %v1056 = vld [vmem:[#allocation2 + $0x4] sm:$0xff]
      %v1057 = vld [vmem:[#allocation2 + $0xc] sm:$0xf]
      %1058 = vrot.lane.b32.xlu0 %v460, 17
      %v1059 = vpop.permute.xlu0 %1058
      %v1060 = vrot.slane %v1059, 4
      %v1061 = vsel %vm366, %v1060, %v1059
      %v1064 = vmul.f32 %v1056, %v1061
      %v1065 = vmul.f32 %v1057, %v1060
      %s1066 = scalar_lea.vmem %s2, 64
      %v1067 = vld [vmem:[%s1066] sm:$0xff]
      %v1070 = vcombine.high %v1064, %v1064
      %1071 = vrot.lane.b32.xlu0 %v1064, 111
      %v1072 = vpop.permute.xlu0 %1071
      %1073 = vrot.lane.b32.xlu0 %v1070, 111
      %v1074 = vpop.permute.xlu0 %1073
      %1075 = vrot.lane.b32.xlu0 %v1065, 111
      %v1076 = vpop.permute.xlu0 %1075
      %v1077 = vsel %vm256, %v1072, %v1074
      %v1078 = vsel %vm256, %v1074, %v1076
      %v1080 = vsel %vm277, %v1067, 0
      %v1082 = vsel %vm281, %v1077, 0
      %v1084 = vsel %vm281, %v1078, 0
      %1086 = vmatprep.subr.mxu0 0.0
      %1087 = vmatpush1.msra.mxu0 0.0
      %1088 = vmatprep.subr.mxu0 0.0
      %1089 = vmatpush1.msra.mxu0 0.0
      %1090 = vmatprep.subr.mxu0 0.0
      %1091 = vmatpush1.msra.mxu0 0.0
      %1092 = vmatprep.subr.mxu0 0.0
      %1093 = vmatpush1.msra.mxu0 0.0
      %1094 = vmatprep.subr.mxu0 0.0
      %1095 = vmatpush1.msra.mxu0 0.0
      %1096 = vmatprep.subr.mxu0 0.0
      %1097 = vmatpush1.msra.mxu0 0.0
      %1098 = vmatprep.subr.mxu0 0.0
      %1099 = vmatpush1.msra.mxu0 0.0
      %1100 = vmatprep.subr.mxu0 0.0
      %1101 = vmatpush1.msra.mxu0 0.0
      %1102 = vmatprep.subr.mxu0 0.0
      %1103 = vmatpush1.msra.mxu0 0.0
      %1104 = vmatprep.subr.mxu0 0.0
      %1105 = vmatpush1.msra.mxu0 0.0
      %1106 = vmatprep.subr.mxu0 0.0
      %1107 = vmatpush1.msra.mxu0 0.0
      %1108 = vmatprep.subr.mxu0 0.0
      %1109 = vmatpush1.msra.mxu0 0.0
      %1110 = vmatprep.subr.mxu0 0.0
      %1111 = vmatpush1.msra.mxu0 0.0
      %1112 = vmatprep.subr.mxu0 0.0
      %1113 = vmatpush1.msra.mxu0 0.0
      %1114 = vmatprep.subr.mxu0 0.0
      %1115 = vmatpush1.msra.mxu0 0.0
      %1116 = vmatprep.subr.mxu0 %v1084
      %1117 = vmatpush1.msra.mxu0 %v1082
      %1118 = vmatprep.subr.mxu0 0.0
      %1119 = vmatpush2.msra.mxu0 0.0
      %1120 = vmatprep.subr.mxu0 0.0
      %1121 = vmatpush2.msra.mxu0 0.0
      %1122 = vmatprep.subr.mxu0 0.0
      %1123 = vmatpush2.msra.mxu0 0.0
      %1124 = vmatprep.subr.mxu0 0.0
      %1125 = vmatpush2.msra.mxu0 0.0
      %1126 = vmatprep.subr.mxu0 0.0
      %1127 = vmatpush2.msra.mxu0 0.0
      %1128 = vmatprep.subr.mxu0 0.0
      %1129 = vmatpush2.msra.mxu0 0.0
      %1130 = vmatprep.subr.mxu0 0.0
      %1131 = vmatpush2.msra.mxu0 0.0
      %1132 = vmatprep.subr.mxu0 0.0
      %1133 = vmatpush2.msra.mxu0 0.0
      %1134 = vmatprep.subr.mxu0 0.0
      %1135 = vmatpush2.msra.mxu0 0.0
      %1136 = vmatprep.subr.mxu0 0.0
      %1137 = vmatpush2.msra.mxu0 0.0
      %1138 = vmatprep.subr.mxu0 0.0
      %1139 = vmatpush2.msra.mxu0 0.0
      %1140 = vmatprep.subr.mxu0 0.0
      %1141 = vmatpush2.msra.mxu0 0.0
      %1142 = vmatprep.subr.mxu0 0.0
      %1143 = vmatpush2.msra.mxu0 0.0
      %1144 = vmatprep.subr.mxu0 0.0
      %1145 = vmatpush2.msra.mxu0 0.0
      %1146 = vmatprep.subr.mxu0 0.0
      %1147 = vmatpush2.msra.mxu0 0.0
      %1148 = vmatprep.subr.mxu0 0.0
      %1149 = vmatpush2.msra.mxu0 0.0
      %1150 = vmatprep.mubr.f32.mxu0 0.0
      %1151 = vmatmul.mubr.f32.gmra.mxu0 %v1080
      %v1152 = vpop.f32.mrf.mxu0
      %v1153 = vadd.f32 0.0, %v1152
      %v1154 = vpop.f32.mrf.mxu0
      %v1155 = vadd.f32 0.0, %v1154
      %1156 = vdwg.mxu0
      %v1157 = vadd.f32 %v1054, %v1153
      %v1158 = vadd.f32 %v1055, %v1155
      %v1159 = vld [vmem:[%s3] sm:$0xff]
      %1161 = vset.pattern.permute.xlu0 0
      %1162 = vperm.xlu0 %1161, %v1159
      %v1163 = vpop.permute.xlu0 %1162
      %v1165 = vadd.f32 %v1157, %v1163
      %v1166 = vadd.f32 %v1158, %v1163
      %1167 = vst [vmem:[%s231] sm:$0xff] %v1165
      %1168 = vst [vmem:[%s231 + $0x8] sm:$0xff] %v1166
      %v1169 = vadd.f32 %v1165, %v1166
      %1170 = vadd.xlane.f32.xlu0 %v1169
      %v1171 = vpop.xlane.xlu0 %1170
      %v1172 = vmul.f32 %v1165, %v1165
      %v1173 = vmul.f32 %v1166, %v1166
      %v1174 = vadd.f32 %v1172, %v1173
      %1175 = vadd.xlane.f32.xlu0 %v1174
      %v1176 = vpop.xlane.xlu0 %1175
      %v1177 = vsel %vm586, %v1171, %v1176
      %vm1178 = vcmask 15360
      %1179 = vst.msk [vmem:[%s235] sm:$0xff] %vm1178, %v1177
      %p1180 = scmp.lt.s32.totalorder %s17, 1
      %s1181 = scalar_select %p1180, %s17, 1
      %s1182 = smul.addr %s1181, 2
      %s1183 = smul.addr %s1182, 8
      %s1184 = scalar_lea.vmem %s4, %s1183
      %p1185 = scmp.lt.s32.totalorder %s17, 1
      %s1186 = scalar_select %p1185, %s17, 1
      %s1187 = smul.addr %s1186, 8
      %s1188 = scalar_lea.vmem %s5, %s1187
      // Predicated region
      $region37: #{double_conv.3} parent=35 // pred_check
        %p1189 = pneg %p124
      $region38: #{double_conv.3} parent=35 // pred_check_branch
        %1191 = sbr.rel (%p1189) target = $region40
      $region39: #{double_conv.3} parent=35 // pred_region
        _
      $region40: #{double_conv.3} parent=35 // pred_fallthru
        _
      // Predicated region
      $region41: #{double_conv.3} parent=35 // pred_check
        %p1192 = pneg %p150
      $region42: #{double_conv.3} parent=35 // pred_check_branch
        %1194 = sbr.rel (%p1192) target = $region44
      $region43: #{double_conv.3} parent=35 // pred_region
        _
      $region44: #{double_conv.3} parent=35 // pred_fallthru
        _
    $region36: #{double_conv.3} parent=5 // pred_fallthru
      _
    %p1195 = scmp.le.s32.totalorder 2, %s12
    // Predicated region
    $region45: #{double_conv.3} parent=5 // pred_check
      %p1196 = pneg %p1195
    $region46: #{double_conv.3} parent=5 // pred_check_branch
      %1198 = sbr.rel (%p1196) target = $region48
    $region47: #{double_conv.3} parent=5 // pred_region
      %s1199 = ssub.s32 %s12, 2
      // Predicated region
      $region49: #{double_conv.3} parent=47 // pred_check
        %p1200 = pneg %p130
      $region50: #{double_conv.3} parent=47 // pred_check_branch
        %1202 = sbr.rel (%p1200) target = $region52
      $region51: #{double_conv.3} parent=47 // pred_region
        %p1203 = scmp.lt.s32.totalorder %s18, 1
        %s1204 = scalar_select %p1203, %s18, 1
        %s1205 = smul.addr %s1204, 2
        %s1206 = smul.addr %s1205, 8
        %s1207 = scalar_lea.vmem %s4, %s1206
      $region52: #{double_conv.3} parent=47 // pred_fallthru
        _
      // Predicated region
      $region53: #{double_conv.3} parent=47 // pred_check
        %p1208 = pneg %p156
      $region54: #{double_conv.3} parent=47 // pred_check_branch
        %1210 = sbr.rel (%p1208) target = $region56
      $region55: #{double_conv.3} parent=47 // pred_region
        %p1211 = scmp.lt.s32.totalorder %s18, 1
        %s1212 = scalar_select %p1211, %s18, 1
        %s1213 = smul.addr %s1212, 8
        %s1214 = scalar_lea.vmem %s5, %s1213
      $region56: #{double_conv.3} parent=47 // pred_fallthru
        _
    $region48: #{double_conv.3} parent=5 // pred_fallthru
      _
  $region6: #{double_conv.3} parent=0 // loop_footer
    %s16 = sadd.s32 1, %s12
  $region7: #{double_conv.3} parent=0 // loop_footer_branch
    %11 = sbr.rel target = $region3
  $region8: #{double_conv.3} parent=0 // loop_exit
    _

// kernel: double_conv.4
$region0: #{double_conv.4}
  #allocation0 [shape = 'u32[]', space=smem, size = 0x4, offset = 0x4, fixed_abs, tag = 'smem constant byte address 0x4 - core index']
  #allocation1 [shape = 'u32[144,128]{1,0:T(1,128)}', space=vmem, size = 0x12000, scoped, tag = 'internal scratch']
  #allocation2 [shape = 'f32[8,512]{1,0:T(8,128)}', space=vmem, size = 0x4000, scoped, tag = 'scratch operand']
  %s0 = inlined_call_operand.vmem [shape: f32[2,8,256], index: 0, kind: input, shape index: {}]
  %s1 = inlined_call_operand.vmem [shape: f32[8,1], index: 1, kind: input, shape index: {}]
  %s2 = inlined_call_operand.vmem [shape: f32[8,1], index: 2, kind: input, shape index: {}]
  %s3 = inlined_call_operand.vmem [shape: f32[3,256], index: 3, kind: input, shape index: {}]
  %s4 = inlined_call_operand.vmem [shape: f32[9,8,8], index: 4, kind: input, shape index: {}]
  %s5 = inlined_call_operand.vmem [shape: f32[8,1], index: 5, kind: input, shape index: {}]
  %s6 = inlined_call_operand.vmem [shape: f32[2,8,256], index: 6, kind: output, shape index: {0}]
  %s7 = inlined_call_operand.vmem [shape: f32[2,8,2], index: 7, kind: output, shape index: {1}]
  %8 = xla_tuple %s6, %s7
  %s9 = sld [smem:[#allocation0]]
  $region65: #{double_conv.4} parent=0
    _
  %s11 = ssub.s32 1, %s9
  %s12 = scalar_select 0, %s11, %s9
  loop: start=0, step=1, limit=4
  $region2: #{double_conv.4} parent=0 // loop_pre_header
    _
  $region3: #{double_conv.4} parent=0 // loop_header
    %s14 = sphi 0, %s18
    %p15 = scmp.ge.s32.totalorder %s14, 4
    %s24 = sphi 0, %s26
    %s27 = sphi 0, %s24
    %s28 = sphi 0, %s27
    %s44 = sphi 0, %s28
    %s48 = sphi 0, %s48
    %s50 = sphi 0, %s48
    %s51 = sphi 0, %s50
    %s65 = sphi 0, %s51
    %s69 = sphi 0, %s69
    %s71 = sphi 0, %s69
    %s72 = sphi 0, %s71
    %s86 = sphi 0, %s72
    %s90 = sphi 0, %s90
    %s92 = sphi 0, %s90
    %s93 = sphi 0, %s92
    %s107 = sphi 0, %s93
    %s111 = sphi 0, %s111
    %s113 = sphi 0, %s111
    %s114 = sphi 0, %s113
    %s128 = sphi 0, %s114
    %s132 = sphi 0, %s132
    %s134 = sphi 0, %s132
    %s135 = sphi 0, %s134
    %s149 = sphi 0, %s135
    %s155 = sphi 0, %s157
    %s158 = sphi 0, %s155
    %s159 = sphi 0, %s158
    %s175 = sphi 0, %s159
    %s181 = sphi 0, %s183
    %s184 = sphi 0, %s181
    %s185 = sphi 0, %s184
    %s201 = sphi 0, %s185
  $region4: #{double_conv.4} parent=0 // loop_header_branch
    %17 = sbr.rel (%p15) target = $region8
  $region5: #{double_conv.4} parent=0 // loop_body
    %s19 = ssub.s32 %s14, 1
    %s20 = ssub.s32 %s14, 2
    %s21 = sadd.s32 %s14, 1
    %s22 = ssub.s32 %s14, %s21
    %p23 = scmp.eq.s32.totalorder %s22, 0
    %s25 = sadd.s32 %s24, 1
    %s26 = scalar_select %p23, %s24, %s25
    %p29 = pneg %p23
    %p30 = scmp.eq.s32.totalorder %s14, 1
    %p31 = por %p29, %p30
    %p32 = scmp.ne.s32.totalorder %s24, %s27
    %p33 = scmp.eq.s32.totalorder %s14, 0
    %p34 = por %p32, %p33
    %p35 = scmp.ne.s32.totalorder %s24, %s27
    %p36 = scmp.eq.s32.totalorder %s19, 1
    %p37 = por %p35, %p36
    %p38 = scmp.ne.s32.totalorder %s27, %s28
    %p39 = scmp.eq.s32.totalorder %s19, 0
    %p40 = por %p38, %p39
    %p41 = scmp.ne.s32.totalorder %s27, %s28
    %p42 = scmp.eq.s32.totalorder %s20, 1
    %p43 = por %p41, %p42
    %p45 = scmp.ne.s32.totalorder %s28, %s44
    %p46 = scmp.eq.s32.totalorder %s20, 0
    %p47 = por %p45, %p46
    %s49 = sadd.s32 %s48, 1
    %p52 = scmp.eq.s32.totalorder %s14, 1
    %p53 = scmp.ne.s32.totalorder %s48, %s50
    %p54 = scmp.eq.s32.totalorder %s14, 0
    %p55 = por %p53, %p54
    %p56 = scmp.ne.s32.totalorder %s48, %s50
    %p57 = scmp.eq.s32.totalorder %s19, 1
    %p58 = por %p56, %p57
    %p59 = scmp.ne.s32.totalorder %s50, %s51
    %p60 = scmp.eq.s32.totalorder %s19, 0
    %p61 = por %p59, %p60
    %p62 = scmp.ne.s32.totalorder %s50, %s51
    %p63 = scmp.eq.s32.totalorder %s20, 1
    %p64 = por %p62, %p63
    %p66 = scmp.ne.s32.totalorder %s51, %s65
    %p67 = scmp.eq.s32.totalorder %s20, 0
    %p68 = por %p66, %p67
    %s70 = sadd.s32 %s69, 1
    %p73 = scmp.eq.s32.totalorder %s14, 1
    %p74 = scmp.ne.s32.totalorder %s69, %s71
    %p75 = scmp.eq.s32.totalorder %s14, 0
    %p76 = por %p74, %p75
    %p77 = scmp.ne.s32.totalorder %s69, %s71
    %p78 = scmp.eq.s32.totalorder %s19, 1
    %p79 = por %p77, %p78
    %p80 = scmp.ne.s32.totalorder %s71, %s72
    %p81 = scmp.eq.s32.totalorder %s19, 0
    %p82 = por %p80, %p81
    %p83 = scmp.ne.s32.totalorder %s71, %s72
    %p84 = scmp.eq.s32.totalorder %s20, 1
    %p85 = por %p83, %p84
    %p87 = scmp.ne.s32.totalorder %s72, %s86
    %p88 = scmp.eq.s32.totalorder %s20, 0
    %p89 = por %p87, %p88
    %s91 = sadd.s32 %s90, 1
    %p94 = scmp.eq.s32.totalorder %s14, 1
    %p95 = scmp.ne.s32.totalorder %s90, %s92
    %p96 = scmp.eq.s32.totalorder %s14, 0
    %p97 = por %p95, %p96
    %p98 = scmp.ne.s32.totalorder %s90, %s92
    %p99 = scmp.eq.s32.totalorder %s19, 1
    %p100 = por %p98, %p99
    %p101 = scmp.ne.s32.totalorder %s92, %s93
    %p102 = scmp.eq.s32.totalorder %s19, 0
    %p103 = por %p101, %p102
    %p104 = scmp.ne.s32.totalorder %s92, %s93
    %p105 = scmp.eq.s32.totalorder %s20, 1
    %p106 = por %p104, %p105
    %p108 = scmp.ne.s32.totalorder %s93, %s107
    %p109 = scmp.eq.s32.totalorder %s20, 0
    %p110 = por %p108, %p109
    %s112 = sadd.s32 %s111, 1
    %p115 = scmp.eq.s32.totalorder %s14, 1
    %p116 = scmp.ne.s32.totalorder %s111, %s113
    %p117 = scmp.eq.s32.totalorder %s14, 0
    %p118 = por %p116, %p117
    %p119 = scmp.ne.s32.totalorder %s111, %s113
    %p120 = scmp.eq.s32.totalorder %s19, 1
    %p121 = por %p119, %p120
    %p122 = scmp.ne.s32.totalorder %s113, %s114
    %p123 = scmp.eq.s32.totalorder %s19, 0
    %p124 = por %p122, %p123
    %p125 = scmp.ne.s32.totalorder %s113, %s114
    %p126 = scmp.eq.s32.totalorder %s20, 1
    %p127 = por %p125, %p126
    %p129 = scmp.ne.s32.totalorder %s114, %s128
    %p130 = scmp.eq.s32.totalorder %s20, 0
    %p131 = por %p129, %p130
    %s133 = sadd.s32 %s132, 1
    %p136 = scmp.eq.s32.totalorder %s14, 1
    %p137 = scmp.ne.s32.totalorder %s132, %s134
    %p138 = scmp.eq.s32.totalorder %s14, 0
    %p139 = por %p137, %p138
    %p140 = scmp.ne.s32.totalorder %s132, %s134
    %p141 = scmp.eq.s32.totalorder %s19, 1
    %p142 = por %p140, %p141
    %p143 = scmp.ne.s32.totalorder %s134, %s135
    %p144 = scmp.eq.s32.totalorder %s19, 0
    %p145 = por %p143, %p144
    %p146 = scmp.ne.s32.totalorder %s134, %s135
    %p147 = scmp.eq.s32.totalorder %s20, 1
    %p148 = por %p146, %p147
    %p150 = scmp.ne.s32.totalorder %s135, %s149
    %p151 = scmp.eq.s32.totalorder %s20, 0
    %p152 = por %p150, %p151
    %s153 = ssub.s32 %s14, %s21
    %p154 = scmp.eq.s32.totalorder %s153, 0
    %s156 = sadd.s32 %s155, 1
    %s157 = scalar_select %p154, %s155, %s156
    %p160 = pneg %p154
    %p161 = scmp.eq.s32.totalorder %s14, 1
    %p162 = por %p160, %p161
    %p163 = scmp.ne.s32.totalorder %s155, %s158
    %p164 = scmp.eq.s32.totalorder %s14, 0
    %p165 = por %p163, %p164
    %p166 = scmp.ne.s32.totalorder %s155, %s158
    %p167 = scmp.eq.s32.totalorder %s19, 1
    %p168 = por %p166, %p167
    %p169 = scmp.ne.s32.totalorder %s158, %s159
    %p170 = scmp.eq.s32.totalorder %s19, 0
    %p171 = por %p169, %p170
    %p172 = scmp.ne.s32.totalorder %s158, %s159
    %p173 = scmp.eq.s32.totalorder %s20, 1
    %p174 = por %p172, %p173
    %p176 = scmp.ne.s32.totalorder %s159, %s175
    %p177 = scmp.eq.s32.totalorder %s20, 0
    %p178 = por %p176, %p177
    %s179 = ssub.s32 %s14, %s21
    %p180 = scmp.eq.s32.totalorder %s179, 0
    %s182 = sadd.s32 %s181, 1
    %s183 = scalar_select %p180, %s181, %s182
    %p186 = pneg %p180
    %p187 = scmp.eq.s32.totalorder %s14, 1
    %p188 = por %p186, %p187
    %p189 = scmp.ne.s32.totalorder %s181, %s184
    %p190 = scmp.eq.s32.totalorder %s14, 0
    %p191 = por %p189, %p190
    %p192 = scmp.ne.s32.totalorder %s181, %s184
    %p193 = scmp.eq.s32.totalorder %s19, 1
    %p194 = por %p192, %p193
    %p195 = scmp.ne.s32.totalorder %s184, %s185
    %p196 = scmp.eq.s32.totalorder %s19, 0
    %p197 = por %p195, %p196
    %p198 = scmp.ne.s32.totalorder %s184, %s185
    %p199 = scmp.eq.s32.totalorder %s20, 1
    %p200 = por %p198, %p199
    %p202 = scmp.ne.s32.totalorder %s185, %s201
    %p203 = scmp.eq.s32.totalorder %s20, 0
    %p204 = por %p202, %p203
    %p205 = scmp.le.s32.totalorder 1, %s14
    %p206 = scmp.lt.s32.totalorder %s14, 3
    %p207 = pnand %p205, %p206
    %p208 = pneg %p207
    // Predicated region
    $region9: #{double_conv.4} parent=5 // pred_check
      _
    $region10: #{double_conv.4} parent=5 // pred_check_branch
      %210 = sbr.rel (%p207) target = $region12
    $region11: #{double_conv.4} parent=5 // pred_region
      %s211 = ssub.s32 %s14, 1
      // Predicated region
      $region13: #{double_conv.4} parent=11 // pred_check
        %p212 = pneg %p61
      $region14: #{double_conv.4} parent=11 // pred_check_branch
        %214 = sbr.rel (%p212) target = $region16
      $region15: #{double_conv.4} parent=11 // pred_region
        _
      $region16: #{double_conv.4} parent=11 // pred_fallthru
        _
      // Predicated region
      $region17: #{double_conv.4} parent=11 // pred_check
        %p215 = pneg %p82
      $region18: #{double_conv.4} parent=11 // pred_check_branch
        %217 = sbr.rel (%p215) target = $region20
      $region19: #{double_conv.4} parent=11 // pred_region
        _
      $region20: #{double_conv.4} parent=11 // pred_fallthru
        _
      // Predicated region
      $region21: #{double_conv.4} parent=11 // pred_check
        %p218 = pneg %p103
      $region22: #{double_conv.4} parent=11 // pred_check_branch
        %220 = sbr.rel (%p218) target = $region24
      $region23: #{double_conv.4} parent=11 // pred_region
        _
      $region24: #{double_conv.4} parent=11 // pred_fallthru
        _
      // Predicated region
      $region25: #{double_conv.4} parent=11 // pred_check
        %p221 = pneg %p124
      $region26: #{double_conv.4} parent=11 // pred_check_branch
        %223 = sbr.rel (%p221) target = $region28
      $region27: #{double_conv.4} parent=11 // pred_region
        _
      $region28: #{double_conv.4} parent=11 // pred_fallthru
        _
      // Predicated region
      $region29: #{double_conv.4} parent=11 // pred_check
        %p224 = pneg %p145
      $region30: #{double_conv.4} parent=11 // pred_check_branch
        %226 = sbr.rel (%p224) target = $region32
      $region31: #{double_conv.4} parent=11 // pred_region
        _
      $region32: #{double_conv.4} parent=11 // pred_fallthru
        _
    $region12: #{double_conv.4} parent=5 // pred_fallthru
      _
    %p227 = scmp.lt.s32.totalorder %s14, 2
    // Predicated region
    $region33: #{double_conv.4} parent=5 // pred_check
      %p228 = pneg %p227
    $region34: #{double_conv.4} parent=5 // pred_check_branch
      %230 = sbr.rel (%p228) target = $region36
    $region35: #{double_conv.4} parent=5 // pred_region
      // Predicated region
      $region37: #{double_conv.4} parent=35 // pred_check
        %p231 = pneg %p34
      $region38: #{double_conv.4} parent=35 // pred_check_branch
        %233 = sbr.rel (%p231) target = $region40
      $region39: #{double_conv.4} parent=35 // pred_region
        %p234 = scmp.lt.s32.totalorder %s14, 1
        %s235 = scalar_select %p234, %s14, 1
        %s236 = smul.addr %s235, 2
        %s237 = smul.addr %s236, 8
        %s238 = scalar_lea.vmem %s0, %s237
      $region40: #{double_conv.4} parent=35 // pred_fallthru
        _
    $region36: #{double_conv.4} parent=5 // pred_fallthru
      _
    %p239 = scmp.le.s32.totalorder 1, %s14
    %p240 = scmp.lt.s32.totalorder %s14, 3
    %p241 = pnand %p239, %p240
    %p242 = pneg %p241
    // Predicated region
    $region41: #{double_conv.4} parent=5 // pred_check
      _
    $region42: #{double_conv.4} parent=5 // pred_check_branch
      %244 = sbr.rel (%p241) target = $region44
    $region43: #{double_conv.4} parent=5 // pred_region
      %s245 = ssub.s32 %s14, 1
      %p246 = scmp.lt.s32.totalorder %s19, 1
      %s247 = scalar_select %p246, %s19, 1
      %s248 = smul.addr %s247, 2
      %s249 = smul.addr %s248, 8
      %s250 = scalar_lea.vmem %s0, %s249
      %p251 = pneg %p40
      %p252 = pneg %p37
      %p253 = pneg %p61
      %p254 = pneg %p58
      %p255 = pneg %p82
      %p256 = pneg %p79
      %p257 = pneg %p103
      %p258 = pneg %p100
      %p259 = pneg %p124
      %p260 = pneg %p121
      %p261 = pneg %p145
      %p262 = pneg %p142
      %p263 = pneg %p171
      %p264 = pneg %p168
      %p265 = scmp.lt.s32.totalorder %s19, 1
      %s266 = scalar_select %p265, %s19, 1
      %s267 = smul.addr %s266, 2
      %s268 = smul.addr %s267, 8
      %s269 = scalar_lea.vmem %s6, %s268
      %p270 = pneg %p197
      %p271 = pneg %p194
      %p272 = scmp.lt.s32.totalorder %s19, 1
      %s273 = scalar_select %p272, %s19, 1
      %s274 = smul.addr %s273, 8
      %s275 = scalar_lea.vmem %s7, %s274
      %p276 = scmp.lt.s32.totalorder %s19, 1
      %s277 = scalar_select %p276, %s19, 1
      %s278 = smul.addr %s277, 2
      %s279 = smul.addr %s278, 8
      %s280 = scalar_lea.vmem %s0, %s279
      %p281 = scmp.lt.s32.totalorder %s19, 1
      %s282 = scalar_select %p281, %s19, 1
      %s283 = smul.addr %s282, 2
      %s284 = smul.addr %s283, 8
      %s285 = scalar_lea.vmem %s6, %s284
      %p286 = scmp.lt.s32.totalorder %s19, 1
      %s287 = scalar_select %p286, %s19, 1
      %s288 = smul.addr %s287, 8
      %s289 = scalar_lea.vmem %s7, %s288
      %v290 = vld [vmem:[%s280] sm:$0xff]
      %v291 = vld [vmem:[%s280 + $0x8] sm:$0xff]
      %v292 = vld [vmem:[%s1] sm:$0xff]
      %294 = vset.pattern.permute.xlu0 0
      %295 = vperm.xlu0 %294, %v292
      %v296 = vpop.permute.xlu0 %295
      %v298 = vmul.f32 %v290, %v296
      %v299 = vmul.f32 %v291, %v296
      %v300 = vld [vmem:[%s2] sm:$0xff]
      %302 = vset.pattern.permute.xlu0 0
      %303 = vperm.xlu0 %302, %v300
      %v304 = vpop.permute.xlu0 %303
      %v306 = vadd.f32 %v298, %v304
      %v307 = vadd.f32 %v299, %v304
      %v308 = vmax.f32 %v306, 0.0
      %v309 = vmax.f32 %v307, 0.0
      %310 = vst [vmem:[#allocation2] sm:$0xff] 0.0
      %311 = vst [vmem:[#allocation2 + $0x18] sm:$0xff] 0.0
      %312 = vst [vmem:[#allocation2 + $0x8] sm:$0xff] %v308
      %313 = vst [vmem:[#allocation2 + $0x10] sm:$0xff] %v309
      %v314 = vld [vmem:[#allocation2] sm:$0xff]
      %v315 = vld [vmem:[#allocation2 + $0x8] sm:$0xff]
      %v316 = vld [vmem:[#allocation2 + $0x10] sm:$0xff]
      %v317 = vld [vmem:[%s3] ss:$4 sm:$0x3]
      %v319 = vlaneseq
      %v320 = vshrl.u32 %v319, 7
      %v321 = vsub.s32 0, %v320
      %v322 = vrot.slane %v317, %v321
      %v323 = vlaneseq
      %v324 = vshrl.u32 %v323, 7
      %v325 = vsub.s32 1, %v324
      %v326 = vrot.slane %v317, %v325
      %327 = vrot.lane.b32.xlu0 %v322, 111
      %v328 = vpop.permute.xlu0 %327
      %329 = vrot.lane.b32.xlu0 %v326, 111
      %v330 = vpop.permute.xlu0 %329
      %vm331 = vcmask 908288
      %v332 = vsel %vm331, %v328, %v330
      %v336 = vmul.f32 %v314, %v328
      %v337 = vmul.f32 %v315, %v332
      %v338 = vmul.f32 %v316, %v330
      %v339 = vld [vmem:[%s4] sm:$0xff]
      %s340 = scalar_lea.vmem %s4, 8
      %v341 = vld [vmem:[%s340] sm:$0xff]
      %345 = vrot.lane.b32.xlu0 %v314, 16
      %v346 = vpop.permute.xlu0 %345
      %347 = vrot.lane.b32.xlu0 %v315, 16
      %v348 = vpop.permute.xlu0 %347
      %349 = vrot.lane.b32.xlu0 %v316, 16
      %v350 = vpop.permute.xlu0 %349
      %vm351 = vcmask 130048
      %v352 = vsel %vm351, %v346, %v348
      %v353 = vsel %vm351, %v348, %v350
      %vm356 = vcmask 64512
      %v358 = vsel %vm356, %v341, 0
      %360 = vmatprep.subr.mxu0 0.0
      %361 = vmatpush1.msra.mxu0 0.0
      %362 = vmatprep.subr.mxu0 0.0
      %363 = vmatpush1.msra.mxu0 0.0
      %364 = vmatprep.subr.mxu0 0.0
      %365 = vmatpush1.msra.mxu0 0.0
      %366 = vmatprep.subr.mxu0 0.0
      %367 = vmatpush1.msra.mxu0 0.0
      %368 = vmatprep.subr.mxu0 0.0
      %369 = vmatpush1.msra.mxu0 0.0
      %370 = vmatprep.subr.mxu0 0.0
      %371 = vmatpush1.msra.mxu0 0.0
      %372 = vmatprep.subr.mxu0 0.0
      %373 = vmatpush1.msra.mxu0 0.0
      %374 = vmatprep.subr.mxu0 0.0
      %375 = vmatpush1.msra.mxu0 0.0
      %376 = vmatprep.subr.mxu0 0.0
      %377 = vmatpush1.msra.mxu0 0.0
      %378 = vmatprep.subr.mxu0 0.0
      %379 = vmatpush1.msra.mxu0 0.0
      %380 = vmatprep.subr.mxu0 0.0
      %381 = vmatpush1.msra.mxu0 0.0
      %382 = vmatprep.subr.mxu0 0.0
      %383 = vmatpush1.msra.mxu0 0.0
      %384 = vmatprep.subr.mxu0 0.0
      %385 = vmatpush1.msra.mxu0 0.0
      %386 = vmatprep.subr.mxu0 0.0
      %387 = vmatpush1.msra.mxu0 0.0
      %388 = vmatprep.subr.mxu0 0.0
      %389 = vmatpush1.msra.mxu0 0.0
      %390 = vmatprep.subr.mxu0 %v353
      %391 = vmatpush1.msra.mxu0 %v352
      %392 = vmatprep.subr.mxu0 0.0
      %393 = vmatpush2.msra.mxu0 0.0
      %394 = vmatprep.subr.mxu0 0.0
      %395 = vmatpush2.msra.mxu0 0.0
      %396 = vmatprep.subr.mxu0 0.0
      %397 = vmatpush2.msra.mxu0 0.0
      %398 = vmatprep.subr.mxu0 0.0
      %399 = vmatpush2.msra.mxu0 0.0
      %400 = vmatprep.subr.mxu0 0.0
      %401 = vmatpush2.msra.mxu0 0.0
      %402 = vmatprep.subr.mxu0 0.0
      %403 = vmatpush2.msra.mxu0 0.0
      %404 = vmatprep.subr.mxu0 0.0
      %405 = vmatpush2.msra.mxu0 0.0
      %406 = vmatprep.subr.mxu0 0.0
      %407 = vmatpush2.msra.mxu0 0.0
      %408 = vmatprep.subr.mxu0 0.0
      %409 = vmatpush2.msra.mxu0 0.0
      %410 = vmatprep.subr.mxu0 0.0
      %411 = vmatpush2.msra.mxu0 0.0
      %412 = vmatprep.subr.mxu0 0.0
      %413 = vmatpush2.msra.mxu0 0.0
      %414 = vmatprep.subr.mxu0 0.0
      %415 = vmatpush2.msra.mxu0 0.0
      %416 = vmatprep.subr.mxu0 0.0
      %417 = vmatpush2.msra.mxu0 0.0
      %418 = vmatprep.subr.mxu0 0.0
      %419 = vmatpush2.msra.mxu0 0.0
      %420 = vmatprep.subr.mxu0 0.0
      %421 = vmatpush2.msra.mxu0 0.0
      %422 = vmatprep.subr.mxu0 0.0
      %423 = vmatpush2.msra.mxu0 0.0
      %424 = vmatprep.mubr.f32.mxu0 0.0
      %425 = vmatmul.mubr.f32.gmra.mxu0 %v358
      %v426 = vpop.f32.mrf.mxu0
      %v427 = vadd.f32 0.0, %v426
      %v428 = vpop.f32.mrf.mxu0
      %v429 = vadd.f32 0.0, %v428
      %430 = vdwg.mxu0
      %434 = vrot.lane.b32.xlu0 %v336, 17
      %v435 = vpop.permute.xlu0 %434
      %436 = vrot.lane.b32.xlu0 %v337, 17
      %v437 = vpop.permute.xlu0 %436
      %438 = vrot.lane.b32.xlu0 %v338, 17
      %v439 = vpop.permute.xlu0 %438
      %vm440 = vcmask 138240
      %v441 = vsel %vm440, %v435, %v437
      %v442 = vsel %vm440, %v437, %v439
      %v446 = vsel %vm356, %v339, 0
      %448 = vmatprep.subr.mxu0 0.0
      %449 = vmatpush1.msra.mxu0 0.0
      %450 = vmatprep.subr.mxu0 0.0
      %451 = vmatpush1.msra.mxu0 0.0
      %452 = vmatprep.subr.mxu0 0.0
      %453 = vmatpush1.msra.mxu0 0.0
      %454 = vmatprep.subr.mxu0 0.0
      %455 = vmatpush1.msra.mxu0 0.0
      %456 = vmatprep.subr.mxu0 0.0
      %457 = vmatpush1.msra.mxu0 0.0
      %458 = vmatprep.subr.mxu0 0.0
      %459 = vmatpush1.msra.mxu0 0.0
      %460 = vmatprep.subr.mxu0 0.0
      %461 = vmatpush1.msra.mxu0 0.0
      %462 = vmatprep.subr.mxu0 0.0
      %463 = vmatpush1.msra.mxu0 0.0
      %464 = vmatprep.subr.mxu0 0.0
      %465 = vmatpush1.msra.mxu0 0.0
      %466 = vmatprep.subr.mxu0 0.0
      %467 = vmatpush1.msra.mxu0 0.0
      %468 = vmatprep.subr.mxu0 0.0
      %469 = vmatpush1.msra.mxu0 0.0
      %470 = vmatprep.subr.mxu0 0.0
      %471 = vmatpush1.msra.mxu0 0.0
      %472 = vmatprep.subr.mxu0 0.0
      %473 = vmatpush1.msra.mxu0 0.0
      %474 = vmatprep.subr.mxu0 0.0
      %475 = vmatpush1.msra.mxu0 0.0
      %476 = vmatprep.subr.mxu0 0.0
      %477 = vmatpush1.msra.mxu0 0.0
      %478 = vmatprep.subr.mxu0 %v442
      %479 = vmatpush1.msra.mxu0 %v441
      %480 = vmatprep.subr.mxu0 0.0
      %481 = vmatpush2.msra.mxu0 0.0
      %482 = vmatprep.subr.mxu0 0.0
      %483 = vmatpush2.msra.mxu0 0.0
      %484 = vmatprep.subr.mxu0 0.0
      %485 = vmatpush2.msra.mxu0 0.0
      %486 = vmatprep.subr.mxu0 0.0
      %487 = vmatpush2.msra.mxu0 0.0
      %488 = vmatprep.subr.mxu0 0.0
      %489 = vmatpush2.msra.mxu0 0.0
      %490 = vmatprep.subr.mxu0 0.0
      %491 = vmatpush2.msra.mxu0 0.0
      %492 = vmatprep.subr.mxu0 0.0
      %493 = vmatpush2.msra.mxu0 0.0
      %494 = vmatprep.subr.mxu0 0.0
      %495 = vmatpush2.msra.mxu0 0.0
      %496 = vmatprep.subr.mxu0 0.0
      %497 = vmatpush2.msra.mxu0 0.0
      %498 = vmatprep.subr.mxu0 0.0
      %499 = vmatpush2.msra.mxu0 0.0
      %500 = vmatprep.subr.mxu0 0.0
      %501 = vmatpush2.msra.mxu0 0.0
      %502 = vmatprep.subr.mxu0 0.0
      %503 = vmatpush2.msra.mxu0 0.0
      %504 = vmatprep.subr.mxu0 0.0
      %505 = vmatpush2.msra.mxu0 0.0
      %506 = vmatprep.subr.mxu0 0.0
      %507 = vmatpush2.msra.mxu0 0.0
      %508 = vmatprep.subr.mxu0 0.0
      %509 = vmatpush2.msra.mxu0 0.0
      %510 = vmatprep.subr.mxu0 0.0
      %511 = vmatpush2.msra.mxu0 0.0
      %512 = vmatprep.mubr.f32.mxu0 0.0
      %513 = vmatmul.mubr.f32.gmra.mxu0 %v446
      %v514 = vpop.f32.mrf.mxu0
      %v515 = vadd.f32 %v427, %v514
      %v516 = vpop.f32.mrf.mxu0
      %v517 = vadd.f32 %v429, %v516
      %518 = vdwg.mxu0
      %s519 = scalar_lea.vmem %s3, 2
      %v520 = vld [vmem:[%s519] ss:$4 sm:$0x3]
      %v522 = vlaneseq
      %v523 = vshrl.u32 %v522, 7
      %v524 = vsub.s32 0, %v523
      %v525 = vrot.slane %v520, %v524
      %v526 = vlaneseq
      %v527 = vshrl.u32 %v526, 7
      %v528 = vsub.s32 1, %v527
      %v529 = vrot.slane %v520, %v528
      %530 = vrot.lane.b32.xlu0 %v525, 113
      %v531 = vpop.permute.xlu0 %530
      %532 = vrot.lane.b32.xlu0 %v529, 113
      %v533 = vpop.permute.xlu0 %532
      %vm534 = vcmask 924672
      %v535 = vsel %vm534, %v531, %v533
      %v539 = vmul.f32 %v314, %v531
      %v540 = vmul.f32 %v315, %v535
      %v541 = vmul.f32 %v316, %v533
      %s542 = scalar_lea.vmem %s4, 16
      %v543 = vld [vmem:[%s542] sm:$0xff]
      %547 = vrot.lane.b32.xlu0 %v539, 15
      %v548 = vpop.permute.xlu0 %547
      %549 = vrot.lane.b32.xlu0 %v540, 15
      %v550 = vpop.permute.xlu0 %549
      %551 = vrot.lane.b32.xlu0 %v541, 15
      %v552 = vpop.permute.xlu0 %551
      %vm553 = vcmask 121856
      %v554 = vsel %vm553, %v548, %v550
      %v555 = vsel %vm553, %v550, %v552
      %v559 = vsel %vm356, %v543, 0
      %561 = vmatprep.subr.mxu0 0.0
      %562 = vmatpush1.msra.mxu0 0.0
      %563 = vmatprep.subr.mxu0 0.0
      %564 = vmatpush1.msra.mxu0 0.0
      %565 = vmatprep.subr.mxu0 0.0
      %566 = vmatpush1.msra.mxu0 0.0
      %567 = vmatprep.subr.mxu0 0.0
      %568 = vmatpush1.msra.mxu0 0.0
      %569 = vmatprep.subr.mxu0 0.0
      %570 = vmatpush1.msra.mxu0 0.0
      %571 = vmatprep.subr.mxu0 0.0
      %572 = vmatpush1.msra.mxu0 0.0
      %573 = vmatprep.subr.mxu0 0.0
      %574 = vmatpush1.msra.mxu0 0.0
      %575 = vmatprep.subr.mxu0 0.0
      %576 = vmatpush1.msra.mxu0 0.0
      %577 = vmatprep.subr.mxu0 0.0
      %578 = vmatpush1.msra.mxu0 0.0
      %579 = vmatprep.subr.mxu0 0.0
      %580 = vmatpush1.msra.mxu0 0.0
      %581 = vmatprep.subr.mxu0 0.0
      %582 = vmatpush1.msra.mxu0 0.0
      %583 = vmatprep.subr.mxu0 0.0
      %584 = vmatpush1.msra.mxu0 0.0
      %585 = vmatprep.subr.mxu0 0.0
      %586 = vmatpush1.msra.mxu0 0.0
      %587 = vmatprep.subr.mxu0 0.0
      %588 = vmatpush1.msra.mxu0 0.0
      %589 = vmatprep.subr.mxu0 0.0
      %590 = vmatpush1.msra.mxu0 0.0
      %591 = vmatprep.subr.mxu0 %v555
      %592 = vmatpush1.msra.mxu0 %v554
      %593 = vmatprep.subr.mxu0 0.0
      %594 = vmatpush2.msra.mxu0 0.0
      %595 = vmatprep.subr.mxu0 0.0
      %596 = vmatpush2.msra.mxu0 0.0
      %597 = vmatprep.subr.mxu0 0.0
      %598 = vmatpush2.msra.mxu0 0.0
      %599 = vmatprep.subr.mxu0 0.0
      %600 = vmatpush2.msra.mxu0 0.0
      %601 = vmatprep.subr.mxu0 0.0
      %602 = vmatpush2.msra.mxu0 0.0
      %603 = vmatprep.subr.mxu0 0.0
      %604 = vmatpush2.msra.mxu0 0.0
      %605 = vmatprep.subr.mxu0 0.0
      %606 = vmatpush2.msra.mxu0 0.0
      %607 = vmatprep.subr.mxu0 0.0
      %608 = vmatpush2.msra.mxu0 0.0
      %609 = vmatprep.subr.mxu0 0.0
      %610 = vmatpush2.msra.mxu0 0.0
      %611 = vmatprep.subr.mxu0 0.0
      %612 = vmatpush2.msra.mxu0 0.0
      %613 = vmatprep.subr.mxu0 0.0
      %614 = vmatpush2.msra.mxu0 0.0
      %615 = vmatprep.subr.mxu0 0.0
      %616 = vmatpush2.msra.mxu0 0.0
      %617 = vmatprep.subr.mxu0 0.0
      %618 = vmatpush2.msra.mxu0 0.0
      %619 = vmatprep.subr.mxu0 0.0
      %620 = vmatpush2.msra.mxu0 0.0
      %621 = vmatprep.subr.mxu0 0.0
      %622 = vmatpush2.msra.mxu0 0.0
      %623 = vmatprep.subr.mxu0 0.0
      %624 = vmatpush2.msra.mxu0 0.0
      %625 = vmatprep.mubr.f32.mxu0 0.0
      %626 = vmatmul.mubr.f32.gmra.mxu0 %v559
      %v627 = vpop.f32.mrf.mxu0
      %v628 = vadd.f32 0.0, %v627
      %v629 = vpop.f32.mrf.mxu0
      %v630 = vadd.f32 0.0, %v629
      %631 = vdwg.mxu0
      %v632 = vadd.f32 %v515, %v628
      %v633 = vadd.f32 %v517, %v630
      %634 = vrot.lane.b32.xlu0 %v322, 127
      %v635 = vpop.permute.xlu0 %634
      %636 = vrot.lane.b32.xlu0 %v326, 127
      %v637 = vpop.permute.xlu0 %636
      %vm638 = vcmask 1039360
      %v639 = vsel %vm638, %v635, %v637
      %v643 = vmul.f32 %v314, %v635
      %v644 = vmul.f32 %v315, %v639
      %v645 = vmul.f32 %v316, %v637
      %s646 = scalar_lea.vmem %s4, 24
      %v647 = vld [vmem:[%s646] sm:$0xff]
      %651 = vrot.lane.b32.xlu0 %v643, 1
      %v652 = vpop.permute.xlu0 %651
      %653 = vrot.lane.b32.xlu0 %v644, 1
      %v654 = vpop.permute.xlu0 %653
      %655 = vrot.lane.b32.xlu0 %v645, 1
      %v656 = vpop.permute.xlu0 %655
      %vm657 = vcmask 7168
      %v658 = vsel %vm657, %v652, %v654
      %v659 = vsel %vm657, %v654, %v656
      %v663 = vsel %vm356, %v647, 0
      %665 = vmatprep.subr.mxu0 0.0
      %666 = vmatpush1.msra.mxu0 0.0
      %667 = vmatprep.subr.mxu0 0.0
      %668 = vmatpush1.msra.mxu0 0.0
      %669 = vmatprep.subr.mxu0 0.0
      %670 = vmatpush1.msra.mxu0 0.0
      %671 = vmatprep.subr.mxu0 0.0
      %672 = vmatpush1.msra.mxu0 0.0
      %673 = vmatprep.subr.mxu0 0.0
      %674 = vmatpush1.msra.mxu0 0.0
      %675 = vmatprep.subr.mxu0 0.0
      %676 = vmatpush1.msra.mxu0 0.0
      %677 = vmatprep.subr.mxu0 0.0
      %678 = vmatpush1.msra.mxu0 0.0
      %679 = vmatprep.subr.mxu0 0.0
      %680 = vmatpush1.msra.mxu0 0.0
      %681 = vmatprep.subr.mxu0 0.0
      %682 = vmatpush1.msra.mxu0 0.0
      %683 = vmatprep.subr.mxu0 0.0
      %684 = vmatpush1.msra.mxu0 0.0
      %685 = vmatprep.subr.mxu0 0.0
      %686 = vmatpush1.msra.mxu0 0.0
      %687 = vmatprep.subr.mxu0 0.0
      %688 = vmatpush1.msra.mxu0 0.0
      %689 = vmatprep.subr.mxu0 0.0
      %690 = vmatpush1.msra.mxu0 0.0
      %691 = vmatprep.subr.mxu0 0.0
      %692 = vmatpush1.msra.mxu0 0.0
      %693 = vmatprep.subr.mxu0 0.0
      %694 = vmatpush1.msra.mxu0 0.0
      %695 = vmatprep.subr.mxu0 %v659
      %696 = vmatpush1.msra.mxu0 %v658
      %697 = vmatprep.subr.mxu0 0.0
      %698 = vmatpush2.msra.mxu0 0.0
      %699 = vmatprep.subr.mxu0 0.0
      %700 = vmatpush2.msra.mxu0 0.0
      %701 = vmatprep.subr.mxu0 0.0
      %702 = vmatpush2.msra.mxu0 0.0
      %703 = vmatprep.subr.mxu0 0.0
      %704 = vmatpush2.msra.mxu0 0.0
      %705 = vmatprep.subr.mxu0 0.0
      %706 = vmatpush2.msra.mxu0 0.0
      %707 = vmatprep.subr.mxu0 0.0
      %708 = vmatpush2.msra.mxu0 0.0
      %709 = vmatprep.subr.mxu0 0.0
      %710 = vmatpush2.msra.mxu0 0.0
      %711 = vmatprep.subr.mxu0 0.0
      %712 = vmatpush2.msra.mxu0 0.0
      %713 = vmatprep.subr.mxu0 0.0
      %714 = vmatpush2.msra.mxu0 0.0
      %715 = vmatprep.subr.mxu0 0.0
      %716 = vmatpush2.msra.mxu0 0.0
      %717 = vmatprep.subr.mxu0 0.0
      %718 = vmatpush2.msra.mxu0 0.0
      %719 = vmatprep.subr.mxu0 0.0
      %720 = vmatpush2.msra.mxu0 0.0
      %721 = vmatprep.subr.mxu0 0.0
      %722 = vmatpush2.msra.mxu0 0.0
      %723 = vmatprep.subr.mxu0 0.0
      %724 = vmatpush2.msra.mxu0 0.0
      %725 = vmatprep.subr.mxu0 0.0
      %726 = vmatpush2.msra.mxu0 0.0
      %727 = vmatprep.subr.mxu0 0.0
      %728 = vmatpush2.msra.mxu0 0.0
      %729 = vmatprep.mubr.f32.mxu0 0.0
      %730 = vmatmul.mubr.f32.gmra.mxu0 %v663
      %v731 = vpop.f32.mrf.mxu0
      %v732 = vadd.f32 0.0, %v731
      %v733 = vpop.f32.mrf.mxu0
      %v734 = vadd.f32 0.0, %v733
      %735 = vdwg.mxu0
      %v736 = vadd.f32 %v632, %v732
      %v737 = vadd.f32 %v633, %v734
      %s738 = scalar_lea.vmem %s4, 32
      %v739 = vld [vmem:[%s738] sm:$0xff]
      %v741 = vsel %vm356, %v739, 0
      %743 = vmatprep.subr.mxu0 0.0
      %744 = vmatpush1.msra.mxu0 0.0
      %745 = vmatprep.subr.mxu0 0.0
      %746 = vmatpush1.msra.mxu0 0.0
      %747 = vmatprep.subr.mxu0 0.0
      %748 = vmatpush1.msra.mxu0 0.0
      %749 = vmatprep.subr.mxu0 0.0
      %750 = vmatpush1.msra.mxu0 0.0
      %751 = vmatprep.subr.mxu0 0.0
      %752 = vmatpush1.msra.mxu0 0.0
      %753 = vmatprep.subr.mxu0 0.0
      %754 = vmatpush1.msra.mxu0 0.0
      %755 = vmatprep.subr.mxu0 0.0
      %756 = vmatpush1.msra.mxu0 0.0
      %757 = vmatprep.subr.mxu0 0.0
      %758 = vmatpush1.msra.mxu0 0.0
      %759 = vmatprep.subr.mxu0 0.0
      %760 = vmatpush1.msra.mxu0 0.0
      %761 = vmatprep.subr.mxu0 0.0
      %762 = vmatpush1.msra.mxu0 0.0
      %763 = vmatprep.subr.mxu0 0.0
      %764 = vmatpush1.msra.mxu0 0.0
      %765 = vmatprep.subr.mxu0 0.0
      %766 = vmatpush1.msra.mxu0 0.0
      %767 = vmatprep.subr.mxu0 0.0
      %768 = vmatpush1.msra.mxu0 0.0
      %769 = vmatprep.subr.mxu0 0.0
      %770 = vmatpush1.msra.mxu0 0.0
      %771 = vmatprep.subr.mxu0 0.0
      %772 = vmatpush1.msra.mxu0 0.0
      %773 = vmatprep.subr.mxu0 %v316
      %774 = vmatpush1.msra.mxu0 %v315
      %775 = vmatprep.subr.mxu0 0.0
      %776 = vmatpush2.msra.mxu0 0.0
      %777 = vmatprep.subr.mxu0 0.0
      %778 = vmatpush2.msra.mxu0 0.0
      %779 = vmatprep.subr.mxu0 0.0
      %780 = vmatpush2.msra.mxu0 0.0
      %781 = vmatprep.subr.mxu0 0.0
      %782 = vmatpush2.msra.mxu0 0.0
      %783 = vmatprep.subr.mxu0 0.0
      %784 = vmatpush2.msra.mxu0 0.0
      %785 = vmatprep.subr.mxu0 0.0
      %786 = vmatpush2.msra.mxu0 0.0
      %787 = vmatprep.subr.mxu0 0.0
      %788 = vmatpush2.msra.mxu0 0.0
      %789 = vmatprep.subr.mxu0 0.0
      %790 = vmatpush2.msra.mxu0 0.0
      %791 = vmatprep.subr.mxu0 0.0
      %792 = vmatpush2.msra.mxu0 0.0
      %793 = vmatprep.subr.mxu0 0.0
      %794 = vmatpush2.msra.mxu0 0.0
      %795 = vmatprep.subr.mxu0 0.0
      %796 = vmatpush2.msra.mxu0 0.0
      %797 = vmatprep.subr.mxu0 0.0
      %798 = vmatpush2.msra.mxu0 0.0
      %799 = vmatprep.subr.mxu0 0.0
      %800 = vmatpush2.msra.mxu0 0.0
      %801 = vmatprep.subr.mxu0 0.0
      %802 = vmatpush2.msra.mxu0 0.0
      %803 = vmatprep.subr.mxu0 0.0
      %804 = vmatpush2.msra.mxu0 0.0
      %805 = vmatprep.subr.mxu0 0.0
      %806 = vmatpush2.msra.mxu0 0.0
      %807 = vmatprep.mubr.f32.mxu0 0.0
      %808 = vmatmul.mubr.f32.gmra.mxu0 %v741
      %v809 = vpop.f32.mrf.mxu0
      %v810 = vadd.f32 0.0, %v809
      %v811 = vpop.f32.mrf.mxu0
      %v812 = vadd.f32 0.0, %v811
      %813 = vdwg.mxu0
      %v814 = vadd.f32 %v736, %v810
      %v815 = vadd.f32 %v737, %v812
      %v816 = vld [vmem:[#allocation2 + $0x8] sm:$0xff]
      %v817 = vld [vmem:[#allocation2 + $0x10] sm:$0xff]
      %v818 = vld [vmem:[#allocation2 + $0x18] sm:$0xff]
      %819 = vrot.lane.b32.xlu0 %v525, 1
      %v820 = vpop.permute.xlu0 %819
      %821 = vrot.lane.b32.xlu0 %v529, 1
      %v822 = vpop.permute.xlu0 %821
      %v823 = vsel %vm657, %v820, %v822
      %v827 = vmul.f32 %v816, %v820
      %v828 = vmul.f32 %v817, %v823
      %v829 = vmul.f32 %v818, %v822
      %s830 = scalar_lea.vmem %s4, 40
      %v831 = vld [vmem:[%s830] sm:$0xff]
      %835 = vrot.lane.b32.xlu0 %v827, 127
      %v836 = vpop.permute.xlu0 %835
      %837 = vrot.lane.b32.xlu0 %v828, 127
      %v838 = vpop.permute.xlu0 %837
      %839 = vrot.lane.b32.xlu0 %v829, 127
      %v840 = vpop.permute.xlu0 %839
      %v841 = vsel %vm638, %v836, %v838
      %v842 = vsel %vm638, %v838, %v840
      %v846 = vsel %vm356, %v831, 0
      %848 = vmatprep.subr.mxu0 0.0
      %849 = vmatpush1.msra.mxu0 0.0
      %850 = vmatprep.subr.mxu0 0.0
      %851 = vmatpush1.msra.mxu0 0.0
      %852 = vmatprep.subr.mxu0 0.0
      %853 = vmatpush1.msra.mxu0 0.0
      %854 = vmatprep.subr.mxu0 0.0
      %855 = vmatpush1.msra.mxu0 0.0
      %856 = vmatprep.subr.mxu0 0.0
      %857 = vmatpush1.msra.mxu0 0.0
      %858 = vmatprep.subr.mxu0 0.0
      %859 = vmatpush1.msra.mxu0 0.0
      %860 = vmatprep.subr.mxu0 0.0
      %861 = vmatpush1.msra.mxu0 0.0
      %862 = vmatprep.subr.mxu0 0.0
      %863 = vmatpush1.msra.mxu0 0.0
      %864 = vmatprep.subr.mxu0 0.0
      %865 = vmatpush1.msra.mxu0 0.0
      %866 = vmatprep.subr.mxu0 0.0
      %867 = vmatpush1.msra.mxu0 0.0
      %868 = vmatprep.subr.mxu0 0.0
      %869 = vmatpush1.msra.mxu0 0.0
      %870 = vmatprep.subr.mxu0 0.0
      %871 = vmatpush1.msra.mxu0 0.0
      %872 = vmatprep.subr.mxu0 0.0
      %873 = vmatpush1.msra.mxu0 0.0
      %874 = vmatprep.subr.mxu0 0.0
      %875 = vmatpush1.msra.mxu0 0.0
      %876 = vmatprep.subr.mxu0 0.0
      %877 = vmatpush1.msra.mxu0 0.0
      %878 = vmatprep.subr.mxu0 %v842
      %879 = vmatpush1.msra.mxu0 %v841
      %880 = vmatprep.subr.mxu0 0.0
      %881 = vmatpush2.msra.mxu0 0.0
      %882 = vmatprep.subr.mxu0 0.0
      %883 = vmatpush2.msra.mxu0 0.0
      %884 = vmatprep.subr.mxu0 0.0
      %885 = vmatpush2.msra.mxu0 0.0
      %886 = vmatprep.subr.mxu0 0.0
      %887 = vmatpush2.msra.mxu0 0.0
      %888 = vmatprep.subr.mxu0 0.0
      %889 = vmatpush2.msra.mxu0 0.0
      %890 = vmatprep.subr.mxu0 0.0
      %891 = vmatpush2.msra.mxu0 0.0
      %892 = vmatprep.subr.mxu0 0.0
      %893 = vmatpush2.msra.mxu0 0.0
      %894 = vmatprep.subr.mxu0 0.0
      %895 = vmatpush2.msra.mxu0 0.0
      %896 = vmatprep.subr.mxu0 0.0
      %897 = vmatpush2.msra.mxu0 0.0
      %898 = vmatprep.subr.mxu0 0.0
      %899 = vmatpush2.msra.mxu0 0.0
      %900 = vmatprep.subr.mxu0 0.0
      %901 = vmatpush2.msra.mxu0 0.0
      %902 = vmatprep.subr.mxu0 0.0
      %903 = vmatpush2.msra.mxu0 0.0
      %904 = vmatprep.subr.mxu0 0.0
      %905 = vmatpush2.msra.mxu0 0.0
      %906 = vmatprep.subr.mxu0 0.0
      %907 = vmatpush2.msra.mxu0 0.0
      %908 = vmatprep.subr.mxu0 0.0
      %909 = vmatpush2.msra.mxu0 0.0
      %910 = vmatprep.subr.mxu0 0.0
      %911 = vmatpush2.msra.mxu0 0.0
      %912 = vmatprep.mubr.f32.mxu0 0.0
      %913 = vmatmul.mubr.f32.gmra.mxu0 %v846
      %v914 = vpop.f32.mrf.mxu0
      %v915 = vadd.f32 0.0, %v914
      %v916 = vpop.f32.mrf.mxu0
      %v917 = vadd.f32 0.0, %v916
      %918 = vdwg.mxu0
      %v919 = vadd.f32 %v814, %v915
      %v920 = vadd.f32 %v815, %v917
      %921 = vrot.lane.b32.xlu0 %v322, 15
      %v922 = vpop.permute.xlu0 %921
      %923 = vrot.lane.b32.xlu0 %v326, 15
      %v924 = vpop.permute.xlu0 %923
      %v925 = vsel %vm553, %v922, %v924
      %v929 = vmul.f32 %v816, %v922
      %v930 = vmul.f32 %v817, %v925
      %v931 = vmul.f32 %v818, %v924
      %s932 = scalar_lea.vmem %s4, 48
      %v933 = vld [vmem:[%s932] sm:$0xff]
      %937 = vrot.lane.b32.xlu0 %v929, 113
      %v938 = vpop.permute.xlu0 %937
      %939 = vrot.lane.b32.xlu0 %v930, 113
      %v940 = vpop.permute.xlu0 %939
      %941 = vrot.lane.b32.xlu0 %v931, 113
      %v942 = vpop.permute.xlu0 %941
      %v943 = vsel %vm534, %v938, %v940
      %v944 = vsel %vm534, %v940, %v942
      %v948 = vsel %vm356, %v933, 0
      %950 = vmatprep.subr.mxu0 0.0
      %951 = vmatpush1.msra.mxu0 0.0
      %952 = vmatprep.subr.mxu0 0.0
      %953 = vmatpush1.msra.mxu0 0.0
      %954 = vmatprep.subr.mxu0 0.0
      %955 = vmatpush1.msra.mxu0 0.0
      %956 = vmatprep.subr.mxu0 0.0
      %957 = vmatpush1.msra.mxu0 0.0
      %958 = vmatprep.subr.mxu0 0.0
      %959 = vmatpush1.msra.mxu0 0.0
      %960 = vmatprep.subr.mxu0 0.0
      %961 = vmatpush1.msra.mxu0 0.0
      %962 = vmatprep.subr.mxu0 0.0
      %963 = vmatpush1.msra.mxu0 0.0
      %964 = vmatprep.subr.mxu0 0.0
      %965 = vmatpush1.msra.mxu0 0.0
      %966 = vmatprep.subr.mxu0 0.0
      %967 = vmatpush1.msra.mxu0 0.0
      %968 = vmatprep.subr.mxu0 0.0
      %969 = vmatpush1.msra.mxu0 0.0
      %970 = vmatprep.subr.mxu0 0.0
      %971 = vmatpush1.msra.mxu0 0.0
      %972 = vmatprep.subr.mxu0 0.0
      %973 = vmatpush1.msra.mxu0 0.0
      %974 = vmatprep.subr.mxu0 0.0
      %975 = vmatpush1.msra.mxu0 0.0
      %976 = vmatprep.subr.mxu0 0.0
      %977 = vmatpush1.msra.mxu0 0.0
      %978 = vmatprep.subr.mxu0 0.0
      %979 = vmatpush1.msra.mxu0 0.0
      %980 = vmatprep.subr.mxu0 %v944
      %981 = vmatpush1.msra.mxu0 %v943
      %982 = vmatprep.subr.mxu0 0.0
      %983 = vmatpush2.msra.mxu0 0.0
      %984 = vmatprep.subr.mxu0 0.0
      %985 = vmatpush2.msra.mxu0 0.0
      %986 = vmatprep.subr.mxu0 0.0
      %987 = vmatpush2.msra.mxu0 0.0
      %988 = vmatprep.subr.mxu0 0.0
      %989 = vmatpush2.msra.mxu0 0.0
      %990 = vmatprep.subr.mxu0 0.0
      %991 = vmatpush2.msra.mxu0 0.0
      %992 = vmatprep.subr.mxu0 0.0
      %993 = vmatpush2.msra.mxu0 0.0
      %994 = vmatprep.subr.mxu0 0.0
      %995 = vmatpush2.msra.mxu0 0.0
      %996 = vmatprep.subr.mxu0 0.0
      %997 = vmatpush2.msra.mxu0 0.0
      %998 = vmatprep.subr.mxu0 0.0
      %999 = vmatpush2.msra.mxu0 0.0
      %1000 = vmatprep.subr.mxu0 0.0
      %1001 = vmatpush2.msra.mxu0 0.0
      %1002 = vmatprep.subr.mxu0 0.0
      %1003 = vmatpush2.msra.mxu0 0.0
      %1004 = vmatprep.subr.mxu0 0.0
      %1005 = vmatpush2.msra.mxu0 0.0
      %1006 = vmatprep.subr.mxu0 0.0
      %1007 = vmatpush2.msra.mxu0 0.0
      %1008 = vmatprep.subr.mxu0 0.0
      %1009 = vmatpush2.msra.mxu0 0.0
      %1010 = vmatprep.subr.mxu0 0.0
      %1011 = vmatpush2.msra.mxu0 0.0
      %1012 = vmatprep.subr.mxu0 0.0
      %1013 = vmatpush2.msra.mxu0 0.0
      %1014 = vmatprep.mubr.f32.mxu0 0.0
      %1015 = vmatmul.mubr.f32.gmra.mxu0 %v948
      %v1016 = vpop.f32.mrf.mxu0
      %v1017 = vadd.f32 0.0, %v1016
      %v1018 = vpop.f32.mrf.mxu0
      %v1019 = vadd.f32 0.0, %v1018
      %1020 = vdwg.mxu0
      %v1021 = vadd.f32 %v919, %v1017
      %v1022 = vadd.f32 %v920, %v1019
      %s1023 = scalar_lea.vmem %s4, 56
      %v1024 = vld [vmem:[%s1023] sm:$0xff]
      %1028 = vrot.lane.b32.xlu0 %v816, 112
      %v1029 = vpop.permute.xlu0 %1028
      %1030 = vrot.lane.b32.xlu0 %v817, 112
      %v1031 = vpop.permute.xlu0 %1030
      %1032 = vrot.lane.b32.xlu0 %v818, 112
      %v1033 = vpop.permute.xlu0 %1032
      %vm1034 = vcmask 916480
      %v1035 = vsel %vm1034, %v1029, %v1031
      %v1036 = vsel %vm1034, %v1031, %v1033
      %v1040 = vsel %vm356, %v1024, 0
      %1042 = vmatprep.subr.mxu0 0.0
      %1043 = vmatpush1.msra.mxu0 0.0
      %1044 = vmatprep.subr.mxu0 0.0
      %1045 = vmatpush1.msra.mxu0 0.0
      %1046 = vmatprep.subr.mxu0 0.0
      %1047 = vmatpush1.msra.mxu0 0.0
      %1048 = vmatprep.subr.mxu0 0.0
      %1049 = vmatpush1.msra.mxu0 0.0
      %1050 = vmatprep.subr.mxu0 0.0
      %1051 = vmatpush1.msra.mxu0 0.0
      %1052 = vmatprep.subr.mxu0 0.0
      %1053 = vmatpush1.msra.mxu0 0.0
      %1054 = vmatprep.subr.mxu0 0.0
      %1055 = vmatpush1.msra.mxu0 0.0
      %1056 = vmatprep.subr.mxu0 0.0
      %1057 = vmatpush1.msra.mxu0 0.0
      %1058 = vmatprep.subr.mxu0 0.0
      %1059 = vmatpush1.msra.mxu0 0.0
      %1060 = vmatprep.subr.mxu0 0.0
      %1061 = vmatpush1.msra.mxu0 0.0
      %1062 = vmatprep.subr.mxu0 0.0
      %1063 = vmatpush1.msra.mxu0 0.0
      %1064 = vmatprep.subr.mxu0 0.0
      %1065 = vmatpush1.msra.mxu0 0.0
      %1066 = vmatprep.subr.mxu0 0.0
      %1067 = vmatpush1.msra.mxu0 0.0
      %1068 = vmatprep.subr.mxu0 0.0
      %1069 = vmatpush1.msra.mxu0 0.0
      %1070 = vmatprep.subr.mxu0 0.0
      %1071 = vmatpush1.msra.mxu0 0.0
      %1072 = vmatprep.subr.mxu0 %v1036
      %1073 = vmatpush1.msra.mxu0 %v1035
      %1074 = vmatprep.subr.mxu0 0.0
      %1075 = vmatpush2.msra.mxu0 0.0
      %1076 = vmatprep.subr.mxu0 0.0
      %1077 = vmatpush2.msra.mxu0 0.0
      %1078 = vmatprep.subr.mxu0 0.0
      %1079 = vmatpush2.msra.mxu0 0.0
      %1080 = vmatprep.subr.mxu0 0.0
      %1081 = vmatpush2.msra.mxu0 0.0
      %1082 = vmatprep.subr.mxu0 0.0
      %1083 = vmatpush2.msra.mxu0 0.0
      %1084 = vmatprep.subr.mxu0 0.0
      %1085 = vmatpush2.msra.mxu0 0.0
      %1086 = vmatprep.subr.mxu0 0.0
      %1087 = vmatpush2.msra.mxu0 0.0
      %1088 = vmatprep.subr.mxu0 0.0
      %1089 = vmatpush2.msra.mxu0 0.0
      %1090 = vmatprep.subr.mxu0 0.0
      %1091 = vmatpush2.msra.mxu0 0.0
      %1092 = vmatprep.subr.mxu0 0.0
      %1093 = vmatpush2.msra.mxu0 0.0
      %1094 = vmatprep.subr.mxu0 0.0
      %1095 = vmatpush2.msra.mxu0 0.0
      %1096 = vmatprep.subr.mxu0 0.0
      %1097 = vmatpush2.msra.mxu0 0.0
      %1098 = vmatprep.subr.mxu0 0.0
      %1099 = vmatpush2.msra.mxu0 0.0
      %1100 = vmatprep.subr.mxu0 0.0
      %1101 = vmatpush2.msra.mxu0 0.0
      %1102 = vmatprep.subr.mxu0 0.0
      %1103 = vmatpush2.msra.mxu0 0.0
      %1104 = vmatprep.subr.mxu0 0.0
      %1105 = vmatpush2.msra.mxu0 0.0
      %1106 = vmatprep.mubr.f32.mxu0 0.0
      %1107 = vmatmul.mubr.f32.gmra.mxu0 %v1040
      %v1108 = vpop.f32.mrf.mxu0
      %v1109 = vadd.f32 0.0, %v1108
      %v1110 = vpop.f32.mrf.mxu0
      %v1111 = vadd.f32 0.0, %v1110
      %1112 = vdwg.mxu0
      %v1113 = vadd.f32 %v1021, %v1109
      %v1114 = vadd.f32 %v1022, %v1111
      %1115 = vrot.lane.b32.xlu0 %v525, 17
      %v1116 = vpop.permute.xlu0 %1115
      %1117 = vrot.lane.b32.xlu0 %v529, 17
      %v1118 = vpop.permute.xlu0 %1117
      %v1119 = vsel %vm440, %v1116, %v1118
      %v1123 = vmul.f32 %v816, %v1116
      %v1124 = vmul.f32 %v817, %v1119
      %v1125 = vmul.f32 %v818, %v1118
      %s1126 = scalar_lea.vmem %s4, 64
      %v1127 = vld [vmem:[%s1126] sm:$0xff]
      %1131 = vrot.lane.b32.xlu0 %v1123, 111
      %v1132 = vpop.permute.xlu0 %1131
      %1133 = vrot.lane.b32.xlu0 %v1124, 111
      %v1134 = vpop.permute.xlu0 %1133
      %1135 = vrot.lane.b32.xlu0 %v1125, 111
      %v1136 = vpop.permute.xlu0 %1135
      %v1137 = vsel %vm331, %v1132, %v1134
      %v1138 = vsel %vm331, %v1134, %v1136
      %v1142 = vsel %vm356, %v1127, 0
      %1144 = vmatprep.subr.mxu0 0.0
      %1145 = vmatpush1.msra.mxu0 0.0
      %1146 = vmatprep.subr.mxu0 0.0
      %1147 = vmatpush1.msra.mxu0 0.0
      %1148 = vmatprep.subr.mxu0 0.0
      %1149 = vmatpush1.msra.mxu0 0.0
      %1150 = vmatprep.subr.mxu0 0.0
      %1151 = vmatpush1.msra.mxu0 0.0
      %1152 = vmatprep.subr.mxu0 0.0
      %1153 = vmatpush1.msra.mxu0 0.0
      %1154 = vmatprep.subr.mxu0 0.0
      %1155 = vmatpush1.msra.mxu0 0.0
      %1156 = vmatprep.subr.mxu0 0.0
      %1157 = vmatpush1.msra.mxu0 0.0
      %1158 = vmatprep.subr.mxu0 0.0
      %1159 = vmatpush1.msra.mxu0 0.0
      %1160 = vmatprep.subr.mxu0 0.0
      %1161 = vmatpush1.msra.mxu0 0.0
      %1162 = vmatprep.subr.mxu0 0.0
      %1163 = vmatpush1.msra.mxu0 0.0
      %1164 = vmatprep.subr.mxu0 0.0
      %1165 = vmatpush1.msra.mxu0 0.0
      %1166 = vmatprep.subr.mxu0 0.0
      %1167 = vmatpush1.msra.mxu0 0.0
      %1168 = vmatprep.subr.mxu0 0.0
      %1169 = vmatpush1.msra.mxu0 0.0
      %1170 = vmatprep.subr.mxu0 0.0
      %1171 = vmatpush1.msra.mxu0 0.0
      %1172 = vmatprep.subr.mxu0 0.0
      %1173 = vmatpush1.msra.mxu0 0.0
      %1174 = vmatprep.subr.mxu0 %v1138
      %1175 = vmatpush1.msra.mxu0 %v1137
      %1176 = vmatprep.subr.mxu0 0.0
      %1177 = vmatpush2.msra.mxu0 0.0
      %1178 = vmatprep.subr.mxu0 0.0
      %1179 = vmatpush2.msra.mxu0 0.0
      %1180 = vmatprep.subr.mxu0 0.0
      %1181 = vmatpush2.msra.mxu0 0.0
      %1182 = vmatprep.subr.mxu0 0.0
      %1183 = vmatpush2.msra.mxu0 0.0
      %1184 = vmatprep.subr.mxu0 0.0
      %1185 = vmatpush2.msra.mxu0 0.0
      %1186 = vmatprep.subr.mxu0 0.0
      %1187 = vmatpush2.msra.mxu0 0.0
      %1188 = vmatprep.subr.mxu0 0.0
      %1189 = vmatpush2.msra.mxu0 0.0
      %1190 = vmatprep.subr.mxu0 0.0
      %1191 = vmatpush2.msra.mxu0 0.0
      %1192 = vmatprep.subr.mxu0 0.0
      %1193 = vmatpush2.msra.mxu0 0.0
      %1194 = vmatprep.subr.mxu0 0.0
      %1195 = vmatpush2.msra.mxu0 0.0
      %1196 = vmatprep.subr.mxu0 0.0
      %1197 = vmatpush2.msra.mxu0 0.0
      %1198 = vmatprep.subr.mxu0 0.0
      %1199 = vmatpush2.msra.mxu0 0.0
      %1200 = vmatprep.subr.mxu0 0.0
      %1201 = vmatpush2.msra.mxu0 0.0
      %1202 = vmatprep.subr.mxu0 0.0
      %1203 = vmatpush2.msra.mxu0 0.0
      %1204 = vmatprep.subr.mxu0 0.0
      %1205 = vmatpush2.msra.mxu0 0.0
      %1206 = vmatprep.subr.mxu0 0.0
      %1207 = vmatpush2.msra.mxu0 0.0
      %1208 = vmatprep.mubr.f32.mxu0 0.0
      %1209 = vmatmul.mubr.f32.gmra.mxu0 %v1142
      %v1210 = vpop.f32.mrf.mxu0
      %v1211 = vadd.f32 0.0, %v1210
      %v1212 = vpop.f32.mrf.mxu0
      %v1213 = vadd.f32 0.0, %v1212
      %1214 = vdwg.mxu0
      %v1215 = vadd.f32 %v1113, %v1211
      %v1216 = vadd.f32 %v1114, %v1213
      %v1217 = vld [vmem:[%s5] sm:$0xff]
      %1219 = vset.pattern.permute.xlu0 0
      %1220 = vperm.xlu0 %1219, %v1217
      %v1221 = vpop.permute.xlu0 %1220
      %v1223 = vadd.f32 %v1215, %v1221
      %v1224 = vadd.f32 %v1216, %v1221
      %1225 = vst [vmem:[%s285] sm:$0xff] %v1223
      %1226 = vst [vmem:[%s285 + $0x8] sm:$0xff] %v1224
      %v1227 = vadd.f32 %v1223, %v1224
      %1228 = vadd.xlane.f32.xlu0 %v1227
      %v1229 = vpop.xlane.xlu0 %1228
      %v1230 = vmul.f32 %v1223, %v1223
      %v1231 = vmul.f32 %v1224, %v1224
      %v1232 = vadd.f32 %v1230, %v1231
      %1233 = vadd.xlane.f32.xlu0 %v1232
      %v1234 = vpop.xlane.xlu0 %1233
      %v1235 = vsel %vm657, %v1229, %v1234
      %vm1236 = vcmask 15360
      %1237 = vst.msk [vmem:[%s289] sm:$0xff] %vm1236, %v1235
      %p1238 = scmp.lt.s32.totalorder %s19, 1
      %s1239 = scalar_select %p1238, %s19, 1
      %s1240 = smul.addr %s1239, 2
      %s1241 = smul.addr %s1240, 8
      %s1242 = scalar_lea.vmem %s6, %s1241
      %p1243 = scmp.lt.s32.totalorder %s19, 1
      %s1244 = scalar_select %p1243, %s19, 1
      %s1245 = smul.addr %s1244, 8
      %s1246 = scalar_lea.vmem %s7, %s1245
      // Predicated region
      $region45: #{double_conv.4} parent=43 // pred_check
        %p1247 = pneg %p168
      $region46: #{double_conv.4} parent=43 // pred_check_branch
        %1249 = sbr.rel (%p1247) target = $region48
      $region47: #{double_conv.4} parent=43 // pred_region
        _
      $region48: #{double_conv.4} parent=43 // pred_fallthru
        _
      // Predicated region
      $region49: #{double_conv.4} parent=43 // pred_check
        %p1250 = pneg %p194
      $region50: #{double_conv.4} parent=43 // pred_check_branch
        %1252 = sbr.rel (%p1250) target = $region52
      $region51: #{double_conv.4} parent=43 // pred_region
        _
      $region52: #{double_conv.4} parent=43 // pred_fallthru
        _
    $region44: #{double_conv.4} parent=5 // pred_fallthru
      _
    %p1253 = scmp.le.s32.totalorder 2, %s14
    // Predicated region
    $region53: #{double_conv.4} parent=5 // pred_check
      %p1254 = pneg %p1253
    $region54: #{double_conv.4} parent=5 // pred_check_branch
      %1256 = sbr.rel (%p1254) target = $region56
    $region55: #{double_conv.4} parent=5 // pred_region
      %s1257 = ssub.s32 %s14, 2
      // Predicated region
      $region57: #{double_conv.4} parent=55 // pred_check
        %p1258 = pneg %p174
      $region58: #{double_conv.4} parent=55 // pred_check_branch
        %1260 = sbr.rel (%p1258) target = $region60
      $region59: #{double_conv.4} parent=55 // pred_region
        %p1261 = scmp.lt.s32.totalorder %s20, 1
        %s1262 = scalar_select %p1261, %s20, 1
        %s1263 = smul.addr %s1262, 2
        %s1264 = smul.addr %s1263, 8
        %s1265 = scalar_lea.vmem %s6, %s1264
      $region60: #{double_conv.4} parent=55 // pred_fallthru
        _
      // Predicated region
      $region61: #{double_conv.4} parent=55 // pred_check
        %p1266 = pneg %p200
      $region62: #{double_conv.4} parent=55 // pred_check_branch
        %1268 = sbr.rel (%p1266) target = $region64
      $region63: #{double_conv.4} parent=55 // pred_region
        %p1269 = scmp.lt.s32.totalorder %s20, 1
        %s1270 = scalar_select %p1269, %s20, 1
        %s1271 = smul.addr %s1270, 8
        %s1272 = scalar_lea.vmem %s7, %s1271
      $region64: #{double_conv.4} parent=55 // pred_fallthru
        _
    $region56: #{double_conv.4} parent=5 // pred_fallthru
      _
  $region6: #{double_conv.4} parent=0 // loop_footer
    %s18 = sadd.s32 1, %s14
  $region7: #{double_conv.4} parent=0 // loop_footer_branch
    %13 = sbr.rel target = $region3
  $region8: #{double_conv.4} parent=0 // loop_exit
    _

</llo_original>
